<compile_context>
chip_gen: v7x
topology: tpu7x:2x2x1
jax: 0.10.0
libtpu: 0.0.40
codegen_flags: <defaults>
</compile_context>

<pallas_src>
import jax
import jax.numpy as jnp
from jax.experimental import pallas as pl
from jax.experimental.pallas import tpu as pltpu

C_IN = 24     # encoder input channels
C_MID = 256   # hidden channels
C_OUT = 20    # encoder output channels
C_PAD = 128   # lane-dense output slab width (>= C_OUT, multiple of 128)
N_MID = 13    # 9 (B1.end) + 3 (B2.end) + 1 (B3.end) 256->256 1x1 convs
_B1_IDX = (0, 1, 2, 4, 5, 6, 8, 9, 10)   # layers whose input is doubled in place


def _round_up(x, m):
    return ((x + m - 1) // m) * m


def _default_tm():
    # 256-row M tiles for the 2x256x256 MXU (v6e/v7x); 128 for v5e's 4x128x128.
    try:
        kind = jax.devices()[0].device_kind.lower()
        if "v5" in kind:
            return 128
    except Exception:
        pass
    return 256


def prep_params(ws, bs, W, B, wc, bc):
    """Fold the in-place x2 into the B1 weights, cast weights to bf16, and
    zero-pad the final projection to a lane-dense 128-wide slab."""
    scale = jnp.ones((N_MID, 1, 1), jnp.float32).at[jnp.array(_B1_IDX)].set(2.0)
    W2 = (W * scale).astype(jnp.bfloat16)
    ws_bf = ws.astype(jnp.bfloat16)
    wc_pad = jnp.zeros((C_MID, C_PAD), jnp.bfloat16).at[:, :C_OUT].set(
        wc.astype(jnp.bfloat16))
    bc_pad = jnp.zeros((1, C_PAD), jnp.float32).at[:, :C_OUT].set(bc)
    return ws_bf, bs, W2, B, wc_pad, bc_pad


def _encoder_kernel(x_ref, ws_ref, bs_ref, W_ref, B_ref, wc_ref, bc_ref,
                    o_ref, h0_ref):
    # x_ref: (TM, 24) f32 rows of the flattened (N*L, C_IN) input.
    x = x_ref[...].astype(jnp.bfloat16)

    # start: Conv1d(24, 256, 1); keep the residual source in VMEM scratch.
    h0_ref[...] = (jnp.dot(x, ws_ref[...], preferred_element_type=jnp.float32)
                   + bs_ref[...])

    def layer(u, idx):
        # relu(u @ W[idx] + B[idx]); the x2 of BasicBlock_1 layers is already
        # folded into W[idx] by prep_params.
        z = (jnp.dot(u.astype(jnp.bfloat16), W_ref[idx],
                     preferred_element_type=jnp.float32)
             + B_ref[idx:idx + 1, :])
        return jnp.maximum(z, 0.0)

    def b2(v, base):
        # BasicBlock_2: three BasicBlock_1's, then relu(end2(c + 2*v)).
        a = layer(v, base + 0)
        b = layer(a, base + 1)
        c = layer(b, base + 2)
        return layer(c + 2.0 * v, base + 3)

    # BasicBlock_3: three BasicBlock_2's, then relu(end3(r + 2*h0)).
    p = b2(h0_ref[...], 0)
    q = b2(p, 4)
    r = b2(q, 8)
    y = layer(r + 2.0 * h0_ref[...], 12)

    # conv2: Conv1d(256, 20, 1) + sigmoid, on a lane-dense 128-wide slab.
    z = (jnp.dot(y.astype(jnp.bfloat16), wc_ref[...],
                 preferred_element_type=jnp.float32) + bc_ref[...])
    o_ref[...] = jax.nn.sigmoid(z).astype(o_ref.dtype)


def encoder_pallas(x_nlc, ws, bs, W, B, wc, bc, *, tm=None):
    """x_nlc: (N, L, 24) float32 -> (N, L, 20) float32."""
    N, L, _ = x_nlc.shape
    M = N * L
    x2 = x_nlc.reshape(M, C_IN)

    if tm is None:
        tm = _default_tm()
    tm = max(8, min(tm, _round_up(M, 8)))       # multiple of 8, never oversized
    M_pad = _round_up(M, tm)
    if M_pad != M:
        x2 = jnp.pad(x2, ((0, M_pad - M), (0, 0)))

    ws_bf, bs_f, W2, B_f, wc_pad, bc_pad = prep_params(ws, bs, W, B, wc, bc)

    out = pl.pallas_call(
        _encoder_kernel,
        out_shape=jax.ShapeDtypeStruct((M_pad, C_PAD), jnp.float32),
        grid=(M_pad // tm,),
        in_specs=[
            pl.BlockSpec((tm, C_IN), lambda i: (i, 0)),
            pl.BlockSpec((C_IN, C_MID), lambda i: (0, 0)),
            pl.BlockSpec((1, C_MID), lambda i: (0, 0)),
            pl.BlockSpec((N_MID, C_MID, C_MID), lambda i: (0, 0, 0)),
            pl.BlockSpec((N_MID, C_MID), lambda i: (0, 0)),
            pl.BlockSpec((C_MID, C_PAD), lambda i: (0, 0)),
            pl.BlockSpec((1, C_PAD), lambda i: (0, 0)),
        ],
        out_specs=pl.BlockSpec((tm, C_PAD), lambda i: (i, 0)),
        scratch_shapes=[pltpu.VMEM((tm, C_MID), jnp.float32)],
        compiler_params=pltpu.CompilerParams(
            dimension_semantics=("parallel",),
            vmem_limit_bytes=48 << 20,   # headroom under v7x's 64 MiB/TC VMEM
        ),
    )(x2, ws_bf, bs_f, W2, B_f, wc_pad, bc_pad)

    return out[:M, :C_OUT].reshape(N, L, C_OUT)


def encoder_reference(x_nlc, ws, bs, W, B, wc, bc):
    """Plain-JAX reference with the same quirky semantics and the same
    bf16-weight / f32-accumulation numerics as the kernel."""
    N, L, _ = x_nlc.shape
    ws_bf, bs_f, W2, B_f, wc_pad, bc_pad = prep_params(ws, bs, W, B, wc, bc)

    def mm(a, w):
        return jnp.dot(a.astype(jnp.bfloat16), w,
                       preferred_element_type=jnp.float32)

    x2 = x_nlc.reshape(N * L, C_IN)
    h0 = mm(x2, ws_bf) + bs_f

    def layer(u, i):
        return jax.nn.relu(mm(u, W2[i]) + B_f[i])

    def b2(v, base):
        a = layer(v, base)
        b = layer(a, base + 1)
        c = layer(b, base + 2)
        return layer(c + 2.0 * v, base + 3)

    p = b2(h0, 0)
    q = b2(p, 4)
    r = b2(q, 8)
    y = layer(r + 2.0 * h0, 12)
    out = jax.nn.sigmoid(mm(y, wc_pad) + bc_pad)
    return out[:, :C_OUT].reshape(N, L, C_OUT)


def init_params(key):
    ks = jax.random.split(key, 6)
    ws = jax.random.normal(ks[0], (C_IN, C_MID), jnp.float32) / jnp.sqrt(C_IN)
    bs = jax.random.normal(ks[1], (1, C_MID), jnp.float32) * 0.01
    W = jax.random.normal(ks[2], (N_MID, C_MID, C_MID), jnp.float32) / jnp.sqrt(C_MID)
    B = jax.random.normal(ks[3], (N_MID, C_MID), jnp.float32) * 0.01
    wc = jax.random.normal(ks[4], (C_MID, C_OUT), jnp.float32) / jnp.sqrt(C_MID)
    bc = jax.random.normal(ks[5], (1, C_OUT), jnp.float32) * 0.01
    return ws, bs, W, B, wc, bc


if __name__ == "__main__":
    key = jax.random.PRNGKey(0)
    k_x, k_p = jax.random.split(key)

    N, L = 2, 16
    # PyTorch-convention input (N, C, L)
    x_ncl = jax.random.normal(k_x, (N, C_IN, L), jnp.float32)
    # layout: convert NCL -> NLC for the kernel (channels on lanes)
    x_nlc = jnp.transpose(x_ncl, (0, 2, 1))

    params = init_params(k_p)

    out = encoder_pallas(x_nlc, *params)
    out = jax.block_until_ready(out)

    ref = encoder_reference(x_nlc, *params)
    assert out.shape == (N, L, C_OUT)
    assert jnp.allclose(out, ref, atol=1e-3, rtol=1e-3), "mismatch vs JAX reference"

    print("KERNEL_OK")
</pallas_src>

<mosaic_0001>
module attributes {stable_mosaic.version = 11 : i64} {
  func.func @_encoder_kernel(%arg0: i32, %arg1: memref<32x24xf32, #tpu.memory_space<vmem>>, %arg2: memref<24x256xbf16, #tpu.memory_space<vmem>>, %arg3: memref<1x256xf32, #tpu.memory_space<vmem>>, %arg4: memref<13x256x256xbf16, #tpu.memory_space<vmem>>, %arg5: memref<13x256xf32, #tpu.memory_space<vmem>>, %arg6: memref<256x128xbf16, #tpu.memory_space<vmem>>, %arg7: memref<1x128xf32, #tpu.memory_space<vmem>>, %arg8: memref<32x128xf32, #tpu.memory_space<vmem>>, %arg9: memref<32x256xf32, #tpu.memory_space<vmem>>) attributes {dimension_semantics = [#tpu.dimension_semantics<parallel>], iteration_bounds = array<i64: 1>, scalar_prefetch = 0 : i64, scratch_operands = 1 : i64, tpu.core_type = #tpu.core_type<tc>, window_params = [{transform_indices = @transform_0, window_bounds = array<i64: 32, 24>}, {pipeline_mode = #tpu.pipeline_mode<synchronous>, transform_indices = @transform_1, window_bounds = array<i64: 24, 256>}, {pipeline_mode = #tpu.pipeline_mode<synchronous>, transform_indices = @transform_2, window_bounds = array<i64: 1, 256>}, {pipeline_mode = #tpu.pipeline_mode<synchronous>, transform_indices = @transform_3, window_bounds = array<i64: 13, 256, 256>}, {pipeline_mode = #tpu.pipeline_mode<synchronous>, transform_indices = @transform_4, window_bounds = array<i64: 13, 256>}, {pipeline_mode = #tpu.pipeline_mode<synchronous>, transform_indices = @transform_5, window_bounds = array<i64: 256, 128>}, {pipeline_mode = #tpu.pipeline_mode<synchronous>, transform_indices = @transform_6, window_bounds = array<i64: 1, 128>}, {transform_indices = @transform_7, window_bounds = array<i64: 32, 128>}]} {
    %c0 = arith.constant 0 : index
    %c0_0 = arith.constant 0 : index
    %0 = vector.load %arg1[%c0, %c0_0] : memref<32x24xf32, #tpu.memory_space<vmem>>, vector<32x24xf32>
    %1 = arith.truncf %0 : vector<32x24xf32> to vector<32x24xbf16>
    %c0_1 = arith.constant 0 : index
    %c0_2 = arith.constant 0 : index
    %2 = vector.load %arg2[%c0_1, %c0_2] : memref<24x256xbf16, #tpu.memory_space<vmem>>, vector<24x256xbf16>
    %cst = arith.constant dense<0.000000e+00> : vector<32x256xf32>
    %3 = tpu.matmul %1, %2, %cst {dimension_numbers = #tpu.dot_dimension_numbers<[1], [0], [0], [1], [0, 0, 1, 1], [], []>} : vector<32x24xbf16>, vector<24x256xbf16>, vector<32x256xf32> -> vector<32x256xf32>
    %c0_3 = arith.constant 0 : index
    %c0_4 = arith.constant 0 : index
    %4 = vector.load %arg3[%c0_3, %c0_4] : memref<1x256xf32, #tpu.memory_space<vmem>>, vector<1x256xf32>
    %5 = vector.broadcast %4 : vector<1x256xf32> to vector<32x256xf32>
    %6 = arith.addf %3, %5 : vector<32x256xf32>
    %c0_5 = arith.constant 0 : index
    %c0_6 = arith.constant 0 : index
    %7 = vector.load %arg9[%c0_5, %c0_6] : memref<32x256xf32, #tpu.memory_space<vmem>>, vector<32x256xf32>
    tpu.vector_store %arg9[%c0_5, %c0_6], %6 {strides = array<i32>} : memref<32x256xf32, #tpu.memory_space<vmem>>, vector<32x256xf32>,
    %c0_7 = arith.constant 0 : index
    %c0_8 = arith.constant 0 : index
    %8 = vector.load %arg9[%c0_7, %c0_8] : memref<32x256xf32, #tpu.memory_space<vmem>>, vector<32x256xf32>
    %9 = arith.truncf %8 : vector<32x256xf32> to vector<32x256xbf16>
    %c0_9 = arith.constant 0 : index
    %c0_10 = arith.constant 0 : index
    %c0_11 = arith.constant 0 : index
    %10 = vector.load %arg4[%c0_9, %c0_10, %c0_11] : memref<13x256x256xbf16, #tpu.memory_space<vmem>>, vector<1x256x256xbf16>
    %11 = vector.shape_cast %10 : vector<1x256x256xbf16> to vector<256x256xbf16>
    %cst_12 = arith.constant dense<0.000000e+00> : vector<32x256xf32>
    %12 = tpu.matmul %9, %11, %cst_12 {dimension_numbers = #tpu.dot_dimension_numbers<[1], [0], [0], [1], [0, 0, 1, 1], [], []>} : vector<32x256xbf16>, vector<256x256xbf16>, vector<32x256xf32> -> vector<32x256xf32>
    %c0_13 = arith.constant 0 : index
    %c0_14 = arith.constant 0 : index
    %13 = vector.load %arg5[%c0_13, %c0_14] : memref<13x256xf32, #tpu.memory_space<vmem>>, vector<1x256xf32>
    %14 = vector.broadcast %13 : vector<1x256xf32> to vector<32x256xf32>
    %15 = arith.addf %12, %14 : vector<32x256xf32>
    %cst_15 = arith.constant 0.000000e+00 : f32
    %16 = vector.broadcast %cst_15 : f32 to vector<32x256xf32>
    %17 = arith.maximumf %15, %16 : vector<32x256xf32>
    %18 = arith.truncf %17 : vector<32x256xf32> to vector<32x256xbf16>
    %c1 = arith.constant 1 : index
    %c0_16 = arith.constant 0 : index
    %c0_17 = arith.constant 0 : index
    %19 = vector.load %arg4[%c1, %c0_16, %c0_17] : memref<13x256x256xbf16, #tpu.memory_space<vmem>>, vector<1x256x256xbf16>
    %20 = vector.shape_cast %19 : vector<1x256x256xbf16> to vector<256x256xbf16>
    %cst_18 = arith.constant dense<0.000000e+00> : vector<32x256xf32>
    %21 = tpu.matmul %18, %20, %cst_18 {dimension_numbers = #tpu.dot_dimension_numbers<[1], [0], [0], [1], [0, 0, 1, 1], [], []>} : vector<32x256xbf16>, vector<256x256xbf16>, vector<32x256xf32> -> vector<32x256xf32>
    %c1_19 = arith.constant 1 : index
    %c0_20 = arith.constant 0 : index
    %22 = vector.load %arg5[%c1_19, %c0_20] : memref<13x256xf32, #tpu.memory_space<vmem>>, vector<1x256xf32>
    %23 = vector.broadcast %22 : vector<1x256xf32> to vector<32x256xf32>
    %24 = arith.addf %21, %23 : vector<32x256xf32>
    %cst_21 = arith.constant 0.000000e+00 : f32
    %25 = vector.broadcast %cst_21 : f32 to vector<32x256xf32>
    %26 = arith.maximumf %24, %25 : vector<32x256xf32>
    %27 = arith.truncf %26 : vector<32x256xf32> to vector<32x256xbf16>
    %c2 = arith.constant 2 : index
    %c0_22 = arith.constant 0 : index
    %c0_23 = arith.constant 0 : index
    %28 = vector.load %arg4[%c2, %c0_22, %c0_23] : memref<13x256x256xbf16, #tpu.memory_space<vmem>>, vector<1x256x256xbf16>
    %29 = vector.shape_cast %28 : vector<1x256x256xbf16> to vector<256x256xbf16>
    %cst_24 = arith.constant dense<0.000000e+00> : vector<32x256xf32>
    %30 = tpu.matmul %27, %29, %cst_24 {dimension_numbers = #tpu.dot_dimension_numbers<[1], [0], [0], [1], [0, 0, 1, 1], [], []>} : vector<32x256xbf16>, vector<256x256xbf16>, vector<32x256xf32> -> vector<32x256xf32>
    %c2_25 = arith.constant 2 : index
    %c0_26 = arith.constant 0 : index
    %31 = vector.load %arg5[%c2_25, %c0_26] : memref<13x256xf32, #tpu.memory_space<vmem>>, vector<1x256xf32>
    %32 = vector.broadcast %31 : vector<1x256xf32> to vector<32x256xf32>
    %33 = arith.addf %30, %32 : vector<32x256xf32>
    %cst_27 = arith.constant 0.000000e+00 : f32
    %34 = vector.broadcast %cst_27 : f32 to vector<32x256xf32>
    %35 = arith.maximumf %33, %34 : vector<32x256xf32>
    %cst_28 = arith.constant 2.000000e+00 : f32
    %36 = vector.broadcast %cst_28 : f32 to vector<32x256xf32>
    %37 = arith.mulf %36, %8 : vector<32x256xf32>
    %38 = arith.addf %35, %37 : vector<32x256xf32>
    %39 = arith.truncf %38 : vector<32x256xf32> to vector<32x256xbf16>
    %c3 = arith.constant 3 : index
    %c0_29 = arith.constant 0 : index
    %c0_30 = arith.constant 0 : index
    %40 = vector.load %arg4[%c3, %c0_29, %c0_30] : memref<13x256x256xbf16, #tpu.memory_space<vmem>>, vector<1x256x256xbf16>
    %41 = vector.shape_cast %40 : vector<1x256x256xbf16> to vector<256x256xbf16>
    %cst_31 = arith.constant dense<0.000000e+00> : vector<32x256xf32>
    %42 = tpu.matmul %39, %41, %cst_31 {dimension_numbers = #tpu.dot_dimension_numbers<[1], [0], [0], [1], [0, 0, 1, 1], [], []>} : vector<32x256xbf16>, vector<256x256xbf16>, vector<32x256xf32> -> vector<32x256xf32>
    %c3_32 = arith.constant 3 : index
    %c0_33 = arith.constant 0 : index
    %43 = vector.load %arg5[%c3_32, %c0_33] : memref<13x256xf32, #tpu.memory_space<vmem>>, vector<1x256xf32>
    %44 = vector.broadcast %43 : vector<1x256xf32> to vector<32x256xf32>
    %45 = arith.addf %42, %44 : vector<32x256xf32>
    %cst_34 = arith.constant 0.000000e+00 : f32
    %46 = vector.broadcast %cst_34 : f32 to vector<32x256xf32>
    %47 = arith.maximumf %45, %46 : vector<32x256xf32>
    %48 = arith.truncf %47 : vector<32x256xf32> to vector<32x256xbf16>
    %c4 = arith.constant 4 : index
    %c0_35 = arith.constant 0 : index
    %c0_36 = arith.constant 0 : index
    %49 = vector.load %arg4[%c4, %c0_35, %c0_36] : memref<13x256x256xbf16, #tpu.memory_space<vmem>>, vector<1x256x256xbf16>
    %50 = vector.shape_cast %49 : vector<1x256x256xbf16> to vector<256x256xbf16>
    %cst_37 = arith.constant dense<0.000000e+00> : vector<32x256xf32>
    %51 = tpu.matmul %48, %50, %cst_37 {dimension_numbers = #tpu.dot_dimension_numbers<[1], [0], [0], [1], [0, 0, 1, 1], [], []>} : vector<32x256xbf16>, vector<256x256xbf16>, vector<32x256xf32> -> vector<32x256xf32>
    %c4_38 = arith.constant 4 : index
    %c0_39 = arith.constant 0 : index
    %52 = vector.load %arg5[%c4_38, %c0_39] : memref<13x256xf32, #tpu.memory_space<vmem>>, vector<1x256xf32>
    %53 = vector.broadcast %52 : vector<1x256xf32> to vector<32x256xf32>
    %54 = arith.addf %51, %53 : vector<32x256xf32>
    %cst_40 = arith.constant 0.000000e+00 : f32
    %55 = vector.broadcast %cst_40 : f32 to vector<32x256xf32>
    %56 = arith.maximumf %54, %55 : vector<32x256xf32>
    %57 = arith.truncf %56 : vector<32x256xf32> to vector<32x256xbf16>
    %c5 = arith.constant 5 : index
    %c0_41 = arith.constant 0 : index
    %c0_42 = arith.constant 0 : index
    %58 = vector.load %arg4[%c5, %c0_41, %c0_42] : memref<13x256x256xbf16, #tpu.memory_space<vmem>>, vector<1x256x256xbf16>
    %59 = vector.shape_cast %58 : vector<1x256x256xbf16> to vector<256x256xbf16>
    %cst_43 = arith.constant dense<0.000000e+00> : vector<32x256xf32>
    %60 = tpu.matmul %57, %59, %cst_43 {dimension_numbers = #tpu.dot_dimension_numbers<[1], [0], [0], [1], [0, 0, 1, 1], [], []>} : vector<32x256xbf16>, vector<256x256xbf16>, vector<32x256xf32> -> vector<32x256xf32>
    %c5_44 = arith.constant 5 : index
    %c0_45 = arith.constant 0 : index
    %61 = vector.load %arg5[%c5_44, %c0_45] : memref<13x256xf32, #tpu.memory_space<vmem>>, vector<1x256xf32>
    %62 = vector.broadcast %61 : vector<1x256xf32> to vector<32x256xf32>
    %63 = arith.addf %60, %62 : vector<32x256xf32>
    %cst_46 = arith.constant 0.000000e+00 : f32
    %64 = vector.broadcast %cst_46 : f32 to vector<32x256xf32>
    %65 = arith.maximumf %63, %64 : vector<32x256xf32>
    %66 = arith.truncf %65 : vector<32x256xf32> to vector<32x256xbf16>
    %c6 = arith.constant 6 : index
    %c0_47 = arith.constant 0 : index
    %c0_48 = arith.constant 0 : index
    %67 = vector.load %arg4[%c6, %c0_47, %c0_48] : memref<13x256x256xbf16, #tpu.memory_space<vmem>>, vector<1x256x256xbf16>
    %68 = vector.shape_cast %67 : vector<1x256x256xbf16> to vector<256x256xbf16>
    %cst_49 = arith.constant dense<0.000000e+00> : vector<32x256xf32>
    %69 = tpu.matmul %66, %68, %cst_49 {dimension_numbers = #tpu.dot_dimension_numbers<[1], [0], [0], [1], [0, 0, 1, 1], [], []>} : vector<32x256xbf16>, vector<256x256xbf16>, vector<32x256xf32> -> vector<32x256xf32>
    %c6_50 = arith.constant 6 : index
    %c0_51 = arith.constant 0 : index
    %70 = vector.load %arg5[%c6_50, %c0_51] : memref<13x256xf32, #tpu.memory_space<vmem>>, vector<1x256xf32>
    %71 = vector.broadcast %70 : vector<1x256xf32> to vector<32x256xf32>
    %72 = arith.addf %69, %71 : vector<32x256xf32>
    %cst_52 = arith.constant 0.000000e+00 : f32
    %73 = vector.broadcast %cst_52 : f32 to vector<32x256xf32>
    %74 = arith.maximumf %72, %73 : vector<32x256xf32>
    %cst_53 = arith.constant 2.000000e+00 : f32
    %75 = vector.broadcast %cst_53 : f32 to vector<32x256xf32>
    %76 = arith.mulf %75, %47 : vector<32x256xf32>
    %77 = arith.addf %74, %76 : vector<32x256xf32>
    %78 = arith.truncf %77 : vector<32x256xf32> to vector<32x256xbf16>
    %c7 = arith.constant 7 : index
    %c0_54 = arith.constant 0 : index
    %c0_55 = arith.constant 0 : index
    %79 = vector.load %arg4[%c7, %c0_54, %c0_55] : memref<13x256x256xbf16, #tpu.memory_space<vmem>>, vector<1x256x256xbf16>
    %80 = vector.shape_cast %79 : vector<1x256x256xbf16> to vector<256x256xbf16>
    %cst_56 = arith.constant dense<0.000000e+00> : vector<32x256xf32>
    %81 = tpu.matmul %78, %80, %cst_56 {dimension_numbers = #tpu.dot_dimension_numbers<[1], [0], [0], [1], [0, 0, 1, 1], [], []>} : vector<32x256xbf16>, vector<256x256xbf16>, vector<32x256xf32> -> vector<32x256xf32>
    %c7_57 = arith.constant 7 : index
    %c0_58 = arith.constant 0 : index
    %82 = vector.load %arg5[%c7_57, %c0_58] : memref<13x256xf32, #tpu.memory_space<vmem>>, vector<1x256xf32>
    %83 = vector.broadcast %82 : vector<1x256xf32> to vector<32x256xf32>
    %84 = arith.addf %81, %83 : vector<32x256xf32>
    %cst_59 = arith.constant 0.000000e+00 : f32
    %85 = vector.broadcast %cst_59 : f32 to vector<32x256xf32>
    %86 = arith.maximumf %84, %85 : vector<32x256xf32>
    %87 = arith.truncf %86 : vector<32x256xf32> to vector<32x256xbf16>
    %c8 = arith.constant 8 : index
    %c0_60 = arith.constant 0 : index
    %c0_61 = arith.constant 0 : index
    %88 = vector.load %arg4[%c8, %c0_60, %c0_61] : memref<13x256x256xbf16, #tpu.memory_space<vmem>>, vector<1x256x256xbf16>
    %89 = vector.shape_cast %88 : vector<1x256x256xbf16> to vector<256x256xbf16>
    %cst_62 = arith.constant dense<0.000000e+00> : vector<32x256xf32>
    %90 = tpu.matmul %87, %89, %cst_62 {dimension_numbers = #tpu.dot_dimension_numbers<[1], [0], [0], [1], [0, 0, 1, 1], [], []>} : vector<32x256xbf16>, vector<256x256xbf16>, vector<32x256xf32> -> vector<32x256xf32>
    %c8_63 = arith.constant 8 : index
    %c0_64 = arith.constant 0 : index
    %91 = vector.load %arg5[%c8_63, %c0_64] : memref<13x256xf32, #tpu.memory_space<vmem>>, vector<1x256xf32>
    %92 = vector.broadcast %91 : vector<1x256xf32> to vector<32x256xf32>
    %93 = arith.addf %90, %92 : vector<32x256xf32>
    %cst_65 = arith.constant 0.000000e+00 : f32
    %94 = vector.broadcast %cst_65 : f32 to vector<32x256xf32>
    %95 = arith.maximumf %93, %94 : vector<32x256xf32>
    %96 = arith.truncf %95 : vector<32x256xf32> to vector<32x256xbf16>
    %c9 = arith.constant 9 : index
    %c0_66 = arith.constant 0 : index
    %c0_67 = arith.constant 0 : index
    %97 = vector.load %arg4[%c9, %c0_66, %c0_67] : memref<13x256x256xbf16, #tpu.memory_space<vmem>>, vector<1x256x256xbf16>
    %98 = vector.shape_cast %97 : vector<1x256x256xbf16> to vector<256x256xbf16>
    %cst_68 = arith.constant dense<0.000000e+00> : vector<32x256xf32>
    %99 = tpu.matmul %96, %98, %cst_68 {dimension_numbers = #tpu.dot_dimension_numbers<[1], [0], [0], [1], [0, 0, 1, 1], [], []>} : vector<32x256xbf16>, vector<256x256xbf16>, vector<32x256xf32> -> vector<32x256xf32>
    %c9_69 = arith.constant 9 : index
    %c0_70 = arith.constant 0 : index
    %100 = vector.load %arg5[%c9_69, %c0_70] : memref<13x256xf32, #tpu.memory_space<vmem>>, vector<1x256xf32>
    %101 = vector.broadcast %100 : vector<1x256xf32> to vector<32x256xf32>
    %102 = arith.addf %99, %101 : vector<32x256xf32>
    %cst_71 = arith.constant 0.000000e+00 : f32
    %103 = vector.broadcast %cst_71 : f32 to vector<32x256xf32>
    %104 = arith.maximumf %102, %103 : vector<32x256xf32>
    %105 = arith.truncf %104 : vector<32x256xf32> to vector<32x256xbf16>
    %c10 = arith.constant 10 : index
    %c0_72 = arith.constant 0 : index
    %c0_73 = arith.constant 0 : index
    %106 = vector.load %arg4[%c10, %c0_72, %c0_73] : memref<13x256x256xbf16, #tpu.memory_space<vmem>>, vector<1x256x256xbf16>
    %107 = vector.shape_cast %106 : vector<1x256x256xbf16> to vector<256x256xbf16>
    %cst_74 = arith.constant dense<0.000000e+00> : vector<32x256xf32>
    %108 = tpu.matmul %105, %107, %cst_74 {dimension_numbers = #tpu.dot_dimension_numbers<[1], [0], [0], [1], [0, 0, 1, 1], [], []>} : vector<32x256xbf16>, vector<256x256xbf16>, vector<32x256xf32> -> vector<32x256xf32>
    %c10_75 = arith.constant 10 : index
    %c0_76 = arith.constant 0 : index
    %109 = vector.load %arg5[%c10_75, %c0_76] : memref<13x256xf32, #tpu.memory_space<vmem>>, vector<1x256xf32>
    %110 = vector.broadcast %109 : vector<1x256xf32> to vector<32x256xf32>
    %111 = arith.addf %108, %110 : vector<32x256xf32>
    %cst_77 = arith.constant 0.000000e+00 : f32
    %112 = vector.broadcast %cst_77 : f32 to vector<32x256xf32>
    %113 = arith.maximumf %111, %112 : vector<32x256xf32>
    %cst_78 = arith.constant 2.000000e+00 : f32
    %114 = vector.broadcast %cst_78 : f32 to vector<32x256xf32>
    %115 = arith.mulf %114, %86 : vector<32x256xf32>
    %116 = arith.addf %113, %115 : vector<32x256xf32>
    %117 = arith.truncf %116 : vector<32x256xf32> to vector<32x256xbf16>
    %c11 = arith.constant 11 : index
    %c0_79 = arith.constant 0 : index
    %c0_80 = arith.constant 0 : index
    %118 = vector.load %arg4[%c11, %c0_79, %c0_80] : memref<13x256x256xbf16, #tpu.memory_space<vmem>>, vector<1x256x256xbf16>
    %119 = vector.shape_cast %118 : vector<1x256x256xbf16> to vector<256x256xbf16>
    %cst_81 = arith.constant dense<0.000000e+00> : vector<32x256xf32>
    %120 = tpu.matmul %117, %119, %cst_81 {dimension_numbers = #tpu.dot_dimension_numbers<[1], [0], [0], [1], [0, 0, 1, 1], [], []>} : vector<32x256xbf16>, vector<256x256xbf16>, vector<32x256xf32> -> vector<32x256xf32>
    %c11_82 = arith.constant 11 : index
    %c0_83 = arith.constant 0 : index
    %121 = vector.load %arg5[%c11_82, %c0_83] : memref<13x256xf32, #tpu.memory_space<vmem>>, vector<1x256xf32>
    %122 = vector.broadcast %121 : vector<1x256xf32> to vector<32x256xf32>
    %123 = arith.addf %120, %122 : vector<32x256xf32>
    %cst_84 = arith.constant 0.000000e+00 : f32
    %124 = vector.broadcast %cst_84 : f32 to vector<32x256xf32>
    %125 = arith.maximumf %123, %124 : vector<32x256xf32>
    %c0_85 = arith.constant 0 : index
    %c0_86 = arith.constant 0 : index
    %126 = vector.load %arg9[%c0_85, %c0_86] : memref<32x256xf32, #tpu.memory_space<vmem>>, vector<32x256xf32>
    %cst_87 = arith.constant 2.000000e+00 : f32
    %127 = vector.broadcast %cst_87 : f32 to vector<32x256xf32>
    %128 = arith.mulf %127, %126 : vector<32x256xf32>
    %129 = arith.addf %125, %128 : vector<32x256xf32>
    %130 = arith.truncf %129 : vector<32x256xf32> to vector<32x256xbf16>
    %c12 = arith.constant 12 : index
    %c0_88 = arith.constant 0 : index
    %c0_89 = arith.constant 0 : index
    %131 = vector.load %arg4[%c12, %c0_88, %c0_89] : memref<13x256x256xbf16, #tpu.memory_space<vmem>>, vector<1x256x256xbf16>
    %132 = vector.shape_cast %131 : vector<1x256x256xbf16> to vector<256x256xbf16>
    %cst_90 = arith.constant dense<0.000000e+00> : vector<32x256xf32>
    %133 = tpu.matmul %130, %132, %cst_90 {dimension_numbers = #tpu.dot_dimension_numbers<[1], [0], [0], [1], [0, 0, 1, 1], [], []>} : vector<32x256xbf16>, vector<256x256xbf16>, vector<32x256xf32> -> vector<32x256xf32>
    %c12_91 = arith.constant 12 : index
    %c0_92 = arith.constant 0 : index
    %134 = vector.load %arg5[%c12_91, %c0_92] : memref<13x256xf32, #tpu.memory_space<vmem>>, vector<1x256xf32>
    %135 = vector.broadcast %134 : vector<1x256xf32> to vector<32x256xf32>
    %136 = arith.addf %133, %135 : vector<32x256xf32>
    %cst_93 = arith.constant 0.000000e+00 : f32
    %137 = vector.broadcast %cst_93 : f32 to vector<32x256xf32>
    %138 = arith.maximumf %136, %137 : vector<32x256xf32>
    %139 = arith.truncf %138 : vector<32x256xf32> to vector<32x256xbf16>
    %c0_94 = arith.constant 0 : index
    %c0_95 = arith.constant 0 : index
    %140 = vector.load %arg6[%c0_94, %c0_95] : memref<256x128xbf16, #tpu.memory_space<vmem>>, vector<256x128xbf16>
    %cst_96 = arith.constant dense<0.000000e+00> : vector<32x128xf32>
    %141 = tpu.matmul %139, %140, %cst_96 {dimension_numbers = #tpu.dot_dimension_numbers<[1], [0], [0], [1], [0, 0, 1, 1], [], []>} : vector<32x256xbf16>, vector<256x128xbf16>, vector<32x128xf32> -> vector<32x128xf32>
    %c0_97 = arith.constant 0 : index
    %c0_98 = arith.constant 0 : index
    %142 = vector.load %arg7[%c0_97, %c0_98] : memref<1x128xf32, #tpu.memory_space<vmem>>, vector<1x128xf32>
    %143 = vector.broadcast %142 : vector<1x128xf32> to vector<32x128xf32>
    %144 = arith.addf %141, %143 : vector<32x128xf32>
    %145 = arith.negf %144 : vector<32x128xf32>
    %146 = math.exp %145 : vector<32x128xf32>
    %cst_99 = arith.constant 1.000000e+00 : f32
    %147 = vector.broadcast %cst_99 : f32 to vector<32x128xf32>
    %148 = arith.addf %147, %146 : vector<32x128xf32>
    %149 = arith.divf %147, %148 : vector<32x128xf32>
    %c0_100 = arith.constant 0 : index
    %c0_101 = arith.constant 0 : index
    %150 = vector.load %arg8[%c0_100, %c0_101] : memref<32x128xf32, #tpu.memory_space<vmem>>, vector<32x128xf32>
    tpu.vector_store %arg8[%c0_100, %c0_101], %149 {strides = array<i32>} : memref<32x128xf32, #tpu.memory_space<vmem>>, vector<32x128xf32>,
    return
  }
  func.func @transform_0(%arg0: i32) -> (i32, i32) {
    %c0_i32 = arith.constant 0 : i32
    %c0_i32_0 = arith.constant 0 : i32
    return %arg0, %c0_i32 : i32, i32
  }
  func.func @transform_1(%arg0: i32) -> (i32, i32) {
    %c0_i32 = arith.constant 0 : i32
    %c0_i32_0 = arith.constant 0 : i32
    %c0_i32_1 = arith.constant 0 : i32
    return %c0_i32, %c0_i32_0 : i32, i32
  }
  func.func @transform_2(%arg0: i32) -> (i32, i32) {
    %c0_i32 = arith.constant 0 : i32
    %c0_i32_0 = arith.constant 0 : i32
    %c0_i32_1 = arith.constant 0 : i32
    return %c0_i32, %c0_i32_0 : i32, i32
  }
  func.func @transform_3(%arg0: i32) -> (i32, i32, i32) {
    %c0_i32 = arith.constant 0 : i32
    %c0_i32_0 = arith.constant 0 : i32
    %c0_i32_1 = arith.constant 0 : i32
    %c0_i32_2 = arith.constant 0 : i32
    return %c0_i32, %c0_i32_0, %c0_i32_1 : i32, i32, i32
  }
  func.func @transform_4(%arg0: i32) -> (i32, i32) {
    %c0_i32 = arith.constant 0 : i32
    %c0_i32_0 = arith.constant 0 : i32
    %c0_i32_1 = arith.constant 0 : i32
    return %c0_i32, %c0_i32_0 : i32, i32
  }
  func.func @transform_5(%arg0: i32) -> (i32, i32) {
    %c0_i32 = arith.constant 0 : i32
    %c0_i32_0 = arith.constant 0 : i32
    %c0_i32_1 = arith.constant 0 : i32
    return %c0_i32, %c0_i32_0 : i32, i32
  }
  func.func @transform_6(%arg0: i32) -> (i32, i32) {
    %c0_i32 = arith.constant 0 : i32
    %c0_i32_0 = arith.constant 0 : i32
    %c0_i32_1 = arith.constant 0 : i32
    return %c0_i32, %c0_i32_0 : i32, i32
  }
  func.func @transform_7(%arg0: i32) -> (i32, i32) {
    %c0_i32 = arith.constant 0 : i32
    %c0_i32_0 = arith.constant 0 : i32
    return %arg0, %c0_i32 : i32, i32
  }
}

</mosaic_0001>

<llo_original>
// kernel: tpu_custom_call.1
$region0: #{tpu_custom_call.1}
  #allocation0 [shape = 'u32[]', space=smem, size = 0x4, offset = 0x4, fixed_abs, tag = 'smem constant byte address 0x4 - core index']
  #allocation1 [shape = 'u32[144,128]{1,0:T(1,128)}', space=vmem, size = 0x12000, scoped, tag = 'internal scratch']
  #allocation2 [shape = 'f32[32,256]{1,0:T(8,128)}', space=vmem, size = 0x8000, scoped, tag = 'scratch operand']
  %s0 = inlined_call_operand.vmem [shape: f32[32,24], index: 0, kind: input, shape index: {}]
  %s1 = inlined_call_operand.hbm [shape: bf16[24,256], index: 1, kind: input, shape index: {}]
  %s2 = inlined_call_operand.hbm [shape: f32[1,256], index: 2, kind: input, shape index: {}]
  %s3 = inlined_call_operand.hbm [shape: bf16[13,256,256], index: 3, kind: input, shape index: {}]
  %s4 = inlined_call_operand.hbm [shape: f32[13,256], index: 4, kind: input, shape index: {}]
  %s5 = inlined_call_operand.hbm [shape: bf16[256,128], index: 5, kind: input, shape index: {}]
  %s6 = inlined_call_operand.hbm [shape: f32[1,128], index: 6, kind: input, shape index: {}]
  %s7 = inlined_call_operand.hbm [shape: f32[32,128], index: 7, kind: output, shape index: {}]
  %s8 = sld [smem:[#allocation0]]
  $region62: #{tpu_custom_call.1} parent=0
    _
  %s10 = ssub.s32 1, %s8
  %s11 = scalar_select 0, %s10, %s8
  $region1: #{tpu_custom_call.1} parent=0
    #allocation3 [shape = 'u8[12288]{0}', space=vmem, size = 0x3000, scoped, tag = 'input window, operand 1, single buffered']
    #allocation4 [shape = 's32[1]{0}', space=sflag, size = 0x4, scoped, tag = 'scoped memory for tpu_custom_call.1']
    #allocation5 [shape = 's32[1]{0}', space=sflag, size = 0x4, scoped, tag = 'scoped memory for tpu_custom_call.1']
    #allocation6 [shape = 'u8[1024]{0}', space=vmem, size = 0x400, scoped, tag = 'input window, operand 2, single buffered']
    #allocation7 [shape = 's32[1]{0}', space=sflag, size = 0x4, scoped, tag = 'scoped memory for tpu_custom_call.1']
    #allocation8 [shape = 'u8[1703936]{0}', space=vmem, size = 0x1a0000, scoped, tag = 'input window, operand 3, single buffered']
    #allocation9 [shape = 'u8[16384]{0}', space=vmem, size = 0x4000, scoped, tag = 'input window, operand 4, single buffered']
    #allocation10 [shape = 's32[1]{0}', space=sflag, size = 0x4, scoped, tag = 'scoped memory for tpu_custom_call.1']
    #allocation11 [shape = 'u8[65536]{0}', space=vmem, size = 0x10000, scoped, tag = 'input window, operand 5, single buffered']
    #allocation12 [shape = 'u8[512]{0}', space=vmem, size = 0x400, scoped, tag = 'input window, operand 6, single buffered']
    #allocation13 [shape = 's32[1]{0}', space=sflag, size = 0x4, scoped, tag = 'scoped memory for tpu_custom_call.1']
    #allocation14 [shape = 'u8[16384]{0}', space=vmem, size = 0x4000, scoped, tag = 'output window, operand 0, single buffered']
    %12 = vsyncpa [#allocation4], 0
    %13 = vsyncpa [#allocation7], 0
    %14 = vsyncpa [#allocation10], 0
    %15 = vsyncpa [#allocation13], 0
    %16 = vsyncpa [#allocation5], 0
    // Predicated region
    $region2: #{tpu_custom_call.1} parent=1 // pred_check
      _
    $region3: #{tpu_custom_call.1} parent=1 // pred_check_branch
      %18 = sbr.rel (0) target = $region5
    $region4: #{tpu_custom_call.1} parent=1 // pred_region
      _
    $region5: #{tpu_custom_call.1} parent=1 // pred_fallthru
      _
    // Predicated region
    $region6: #{tpu_custom_call.1} parent=1 // pred_check
      _
    $region7: #{tpu_custom_call.1} parent=1 // pred_check_branch
      %20 = sbr.rel (0) target = $region9
    $region8: #{tpu_custom_call.1} parent=1 // pred_region
      %s22 = ssub.s32 384, 384
      %23 = vsyncadd [#allocation4], %s22
      %s24 = sshll.u32 [#allocation3], 4
      %s25 = int_to_ptr.vmem [resolvable:$true] %s24
      %30 = dma.hbm_to_vmem [thread:$0]  %s1, 384, %s25, [#allocation4], 128, 128, 8
    $region9: #{tpu_custom_call.1} parent=1 // pred_fallthru
      _
    // Predicated region
    $region10: #{tpu_custom_call.1} parent=1 // pred_check
      _
    $region11: #{tpu_custom_call.1} parent=1 // pred_check_branch
      %32 = sbr.rel (0) target = $region13
    $region12: #{tpu_custom_call.1} parent=1 // pred_region
      %s34 = ssub.s32 32, 32
      %35 = vsyncadd [#allocation7], %s34
      %s37 = sshll.u32 [#allocation6], 4
      %s38 = int_to_ptr.vmem [resolvable:$true] %s37
      %40 = dma.hbm_to_vmem [thread:$0]  %s2, 32, %s38, [#allocation7]
    $region13: #{tpu_custom_call.1} parent=1 // pred_fallthru
      _
    // Predicated region
    $region14: #{tpu_custom_call.1} parent=1 // pred_check
      _
    $region15: #{tpu_custom_call.1} parent=1 // pred_check_branch
      %42 = sbr.rel (0) target = $region17
    $region16: #{tpu_custom_call.1} parent=1 // pred_region
      %s44 = ssub.s32 53248, 53248
      %45 = vsyncadd [#allocation7], %s44
      %s46 = sshll.u32 [#allocation8], 4
      %s47 = int_to_ptr.vmem [resolvable:$true] %s46
      %52 = dma.hbm_to_vmem [thread:$0]  %s3, 53248, %s47, [#allocation7], 128, 128, 8
    $region17: #{tpu_custom_call.1} parent=1 // pred_fallthru
      _
    // Predicated region
    $region18: #{tpu_custom_call.1} parent=1 // pred_check
      _
    $region19: #{tpu_custom_call.1} parent=1 // pred_check_branch
      %54 = sbr.rel (0) target = $region21
    $region20: #{tpu_custom_call.1} parent=1 // pred_region
      %s56 = ssub.s32 512, 512
      %57 = vsyncadd [#allocation10], %s56
      %s58 = sshll.u32 [#allocation9], 4
      %s59 = int_to_ptr.vmem [resolvable:$true] %s58
      %64 = dma.hbm_to_vmem [thread:$0]  %s4, 512, %s59, [#allocation10], 256, 256, 16
    $region21: #{tpu_custom_call.1} parent=1 // pred_fallthru
      _
    // Predicated region
    $region22: #{tpu_custom_call.1} parent=1 // pred_check
      _
    $region23: #{tpu_custom_call.1} parent=1 // pred_check_branch
      %66 = sbr.rel (0) target = $region25
    $region24: #{tpu_custom_call.1} parent=1 // pred_region
      %s68 = ssub.s32 2048, 2048
      %69 = vsyncadd [#allocation10], %s68
      %s70 = sshll.u32 [#allocation11], 4
      %s71 = int_to_ptr.vmem [resolvable:$true] %s70
      %76 = dma.hbm_to_vmem [thread:$0]  %s5, 2048, %s71, [#allocation10], 64, 64, 4
    $region25: #{tpu_custom_call.1} parent=1 // pred_fallthru
      _
    // Predicated region
    $region26: #{tpu_custom_call.1} parent=1 // pred_check
      _
    $region27: #{tpu_custom_call.1} parent=1 // pred_check_branch
      %78 = sbr.rel (0) target = $region29
    $region28: #{tpu_custom_call.1} parent=1 // pred_region
      %s80 = ssub.s32 16, 16
      %81 = vsyncadd [#allocation13], %s80
      %s83 = sshll.u32 [#allocation12], 4
      %s84 = int_to_ptr.vmem [resolvable:$true] %s83
      %86 = dma.hbm_to_vmem [thread:$0]  %s6, 16, %s84, [#allocation13]
    $region29: #{tpu_custom_call.1} parent=1 // pred_fallthru
      _
    // Predicated region
    $region30: #{tpu_custom_call.1} parent=1 // pred_check
      _
    $region31: #{tpu_custom_call.1} parent=1 // pred_check_branch
      %88 = sbr.rel (0) target = $region33
    $region32: #{tpu_custom_call.1} parent=1 // pred_region
      %89 = dma.done [#allocation4], 384
    $region33: #{tpu_custom_call.1} parent=1 // pred_fallthru
      _
    // Predicated region
    $region34: #{tpu_custom_call.1} parent=1 // pred_check
      _
    $region35: #{tpu_custom_call.1} parent=1 // pred_check_branch
      %91 = sbr.rel (0) target = $region37
    $region36: #{tpu_custom_call.1} parent=1 // pred_region
      %92 = dma.done [#allocation7], 32
    $region37: #{tpu_custom_call.1} parent=1 // pred_fallthru
      _
    // Predicated region
    $region38: #{tpu_custom_call.1} parent=1 // pred_check
      _
    $region39: #{tpu_custom_call.1} parent=1 // pred_check_branch
      %94 = sbr.rel (0) target = $region41
    $region40: #{tpu_custom_call.1} parent=1 // pred_region
      %95 = dma.done [#allocation7], 53248
    $region41: #{tpu_custom_call.1} parent=1 // pred_fallthru
      _
    // Predicated region
    $region42: #{tpu_custom_call.1} parent=1 // pred_check
      _
    $region43: #{tpu_custom_call.1} parent=1 // pred_check_branch
      %97 = sbr.rel (0) target = $region45
    $region44: #{tpu_custom_call.1} parent=1 // pred_region
      %98 = dma.done [#allocation10], 512
    $region45: #{tpu_custom_call.1} parent=1 // pred_fallthru
      _
    // Predicated region
    $region46: #{tpu_custom_call.1} parent=1 // pred_check
      _
    $region47: #{tpu_custom_call.1} parent=1 // pred_check_branch
      %100 = sbr.rel (0) target = $region49
    $region48: #{tpu_custom_call.1} parent=1 // pred_region
      %101 = dma.done [#allocation10], 2048
    $region49: #{tpu_custom_call.1} parent=1 // pred_fallthru
      _
    // Predicated region
    $region50: #{tpu_custom_call.1} parent=1 // pred_check
      _
    $region51: #{tpu_custom_call.1} parent=1 // pred_check_branch
      %103 = sbr.rel (0) target = $region53
    $region52: #{tpu_custom_call.1} parent=1 // pred_region
      %104 = dma.done [#allocation13], 16
    $region53: #{tpu_custom_call.1} parent=1 // pred_fallthru
      _
    %v106 = vld [vmem:[%s0] sm:$0xff]
    %v107 = vld [vmem:[%s0 + $0x8] sm:$0xff]
    %v108 = vld [vmem:[%s0 + $0x10] sm:$0xff]
    %v109 = vld [vmem:[%s0 + $0x18] sm:$0xff]
    %v110 = vpack.c.bf16 %v107, %v106
    %v111 = vpack.c.bf16 %v109, %v108
    %v112 = vld [vmem:[#allocation3] sm:$0xff]
    %v113 = vld [vmem:[#allocation3 + $0x8] sm:$0xff]
    %v114 = vld [vmem:[#allocation3 + $0x10] sm:$0xff]
    %v115 = vld [vmem:[#allocation6] sm:$0x3]
    %v117 = vlaneseq
    %v118 = vshrl.u32 %v117, 7
    %v119 = vsub.s32 0, %v118
    %v120 = vrot.slane %v115, %v119
    %v121 = vlaneseq
    %v122 = vshrl.u32 %v121, 7
    %v123 = vsub.s32 1, %v122
    %v124 = vrot.slane %v115, %v123
    %v130 = vunpack.c.l.b16 %v112
    %v131 = vunpack.c.h.b16 %v112
    %v132 = vunpack.c.l.b16 %v113
    %v133 = vunpack.c.h.b16 %v113
    %v134 = vunpack.c.l.b16 %v114
    %v135 = vunpack.c.h.b16 %v114
    %v136 = vpack.c.b16 %v132, %v130
    %v137 = vpack.c.b16 %v133, %v131
    %v138 = vpack.c.b16 %v134, %v134
    %v139 = vpack.c.b16 %v135, %v135
    %vm142 = vcmask 195584
    %v144 = vsel %vm142, %v110, 0
    %v147 = vsel %vm142, %v111, 0
    %vm149 = vcmask 1043456
    %v151 = vsel %vm149, %v138, 0
    %v154 = vsel %vm149, %v139, 0
    %156 = vmatprep.subr.bf16.mxu0 %v137
    %157 = vmatpush1.bf16.msra.mxu0 %v136
    %158 = vmatprep.subr.bf16.mxu0 %v154
    %159 = vmatpush1.bf16.msra.mxu0 %v151
    %160 = vmatprep.subr.bf16.mxu0 0
    %161 = vmatpush1.bf16.msra.mxu0 0
    %162 = vmatprep.subr.bf16.mxu0 0
    %163 = vmatpush1.bf16.msra.mxu0 0
    %164 = vmatprep.subr.bf16.mxu0 0
    %165 = vmatpush1.bf16.msra.mxu0 0
    %166 = vmatprep.subr.bf16.mxu0 0
    %167 = vmatpush1.bf16.msra.mxu0 0
    %168 = vmatprep.subr.bf16.mxu0 0
    %169 = vmatpush1.bf16.msra.mxu0 0
    %170 = vmatprep.subr.bf16.mxu0 0
    %171 = vmatpush1.bf16.msra.mxu0 0
    %172 = vmatprep.subr.bf16.mxu0 0
    %173 = vmatpush1.bf16.msra.mxu0 0
    %174 = vmatprep.subr.bf16.mxu0 0
    %175 = vmatpush1.bf16.msra.mxu0 0
    %176 = vmatprep.subr.bf16.mxu0 0
    %177 = vmatpush1.bf16.msra.mxu0 0
    %178 = vmatprep.subr.bf16.mxu0 0
    %179 = vmatpush1.bf16.msra.mxu0 0
    %180 = vmatprep.subr.bf16.mxu0 0
    %181 = vmatpush1.bf16.msra.mxu0 0
    %182 = vmatprep.subr.bf16.mxu0 0
    %183 = vmatpush1.bf16.msra.mxu0 0
    %184 = vmatprep.subr.bf16.mxu0 0
    %185 = vmatpush1.bf16.msra.mxu0 0
    %186 = vmatprep.subr.bf16.mxu0 0
    %187 = vmatpush1.bf16.msra.mxu0 0
    %188 = vmatprep.mubr.bf16.mxu0 0
    %189 = vmatmul.mubr.bf16.gmra.mrb[0].mxu0 %v144
    %v190 = vpop.f32.mrb[0].mxu0
    %v191 = vadd.f32 %v120, %v190
    %v192 = vpop.f32.mrb[0].mxu0
    %v193 = vadd.f32 %v124, %v192
    %v194 = vpop.f32.mrb[0].mxu0
    %v195 = vadd.f32 %v120, %v194
    %v196 = vpop.f32.mrb[0].mxu0
    %v197 = vadd.f32 %v124, %v196
    %198 = vmatprep.mubr.bf16.mxu0 0
    %199 = vmatmul.mubr.bf16.gmra.mrb[0].mxu0 %v147
    %v200 = vpop.f32.mrb[0].mxu0
    %v201 = vadd.f32 %v120, %v200
    %v202 = vpop.f32.mrb[0].mxu0
    %v203 = vadd.f32 %v124, %v202
    %v204 = vpop.f32.mrb[0].mxu0
    %v205 = vadd.f32 %v120, %v204
    %v206 = vpop.f32.mrb[0].mxu0
    %v207 = vadd.f32 %v124, %v206
    %208 = vdwg.mxu0
    %209 = vst [vmem:[#allocation2] sm:$0xff] %v191
    %210 = vst [vmem:[#allocation2 + $0x8] sm:$0xff] %v193
    %211 = vst [vmem:[#allocation2 + $0x10] sm:$0xff] %v195
    %212 = vst [vmem:[#allocation2 + $0x18] sm:$0xff] %v197
    %213 = vst [vmem:[#allocation2 + $0x20] sm:$0xff] %v201
    %214 = vst [vmem:[#allocation2 + $0x28] sm:$0xff] %v203
    %215 = vst [vmem:[#allocation2 + $0x30] sm:$0xff] %v205
    %216 = vst [vmem:[#allocation2 + $0x38] sm:$0xff] %v207
    %v217 = vld [vmem:[#allocation2] sm:$0xff]
    %v218 = vld [vmem:[#allocation2 + $0x8] sm:$0xff]
    %v219 = vld [vmem:[#allocation2 + $0x10] sm:$0xff]
    %v220 = vld [vmem:[#allocation2 + $0x18] sm:$0xff]
    %v221 = vld [vmem:[#allocation2 + $0x20] sm:$0xff]
    %v222 = vld [vmem:[#allocation2 + $0x28] sm:$0xff]
    %v223 = vld [vmem:[#allocation2 + $0x30] sm:$0xff]
    %v224 = vld [vmem:[#allocation2 + $0x38] sm:$0xff]
    %v225 = vpack.c.bf16 %v219, %v217
    %v226 = vpack.c.bf16 %v220, %v218
    %v227 = vpack.c.bf16 %v223, %v221
    %v228 = vpack.c.bf16 %v224, %v222
    %v229 = vld [vmem:[#allocation8] sm:$0xff]
    %v230 = vld [vmem:[#allocation8 + $0x8] sm:$0xff]
    %v231 = vld [vmem:[#allocation8 + $0x10] sm:$0xff]
    %v232 = vld [vmem:[#allocation8 + $0x18] sm:$0xff]
    %v233 = vld [vmem:[#allocation8 + $0x20] sm:$0xff]
    %v234 = vld [vmem:[#allocation8 + $0x28] sm:$0xff]
    %v235 = vld [vmem:[#allocation8 + $0x30] sm:$0xff]
    %v236 = vld [vmem:[#allocation8 + $0x38] sm:$0xff]
    %v237 = vld [vmem:[#allocation8 + $0x40] sm:$0xff]
    %v238 = vld [vmem:[#allocation8 + $0x48] sm:$0xff]
    %v239 = vld [vmem:[#allocation8 + $0x50] sm:$0xff]
    %v240 = vld [vmem:[#allocation8 + $0x58] sm:$0xff]
    %v241 = vld [vmem:[#allocation8 + $0x60] sm:$0xff]
    %v242 = vld [vmem:[#allocation8 + $0x68] sm:$0xff]
    %v243 = vld [vmem:[#allocation8 + $0x70] sm:$0xff]
    %v244 = vld [vmem:[#allocation8 + $0x78] sm:$0xff]
    %v245 = vld [vmem:[#allocation8 + $0x80] sm:$0xff]
    %v246 = vld [vmem:[#allocation8 + $0x88] sm:$0xff]
    %v247 = vld [vmem:[#allocation8 + $0x90] sm:$0xff]
    %v248 = vld [vmem:[#allocation8 + $0x98] sm:$0xff]
    %v249 = vld [vmem:[#allocation8 + $0xa0] sm:$0xff]
    %v250 = vld [vmem:[#allocation8 + $0xa8] sm:$0xff]
    %v251 = vld [vmem:[#allocation8 + $0xb0] sm:$0xff]
    %v252 = vld [vmem:[#allocation8 + $0xb8] sm:$0xff]
    %v253 = vld [vmem:[#allocation8 + $0xc0] sm:$0xff]
    %v254 = vld [vmem:[#allocation8 + $0xc8] sm:$0xff]
    %v255 = vld [vmem:[#allocation8 + $0xd0] sm:$0xff]
    %v256 = vld [vmem:[#allocation8 + $0xd8] sm:$0xff]
    %v257 = vld [vmem:[#allocation8 + $0xe0] sm:$0xff]
    %v258 = vld [vmem:[#allocation8 + $0xe8] sm:$0xff]
    %v259 = vld [vmem:[#allocation8 + $0xf0] sm:$0xff]
    %v260 = vld [vmem:[#allocation8 + $0xf8] sm:$0xff]
    %v261 = vld [vmem:[#allocation9] ss:$8 sm:$0x3]
    %v263 = vlaneseq
    %v264 = vshrl.u32 %v263, 7
    %v265 = vsub.s32 0, %v264
    %v266 = vrot.slane %v261, %v265
    %v267 = vlaneseq
    %v268 = vshrl.u32 %v267, 7
    %v269 = vsub.s32 1, %v268
    %v270 = vrot.slane %v261, %v269
    %v305 = vunpack.c.l.b16 %v229
    %v306 = vunpack.c.h.b16 %v229
    %v307 = vunpack.c.l.b16 %v230
    %v308 = vunpack.c.h.b16 %v230
    %v309 = vunpack.c.l.b16 %v231
    %v310 = vunpack.c.h.b16 %v231
    %v311 = vunpack.c.l.b16 %v232
    %v312 = vunpack.c.h.b16 %v232
    %v313 = vunpack.c.l.b16 %v233
    %v314 = vunpack.c.h.b16 %v233
    %v315 = vunpack.c.l.b16 %v234
    %v316 = vunpack.c.h.b16 %v234
    %v317 = vunpack.c.l.b16 %v235
    %v318 = vunpack.c.h.b16 %v235
    %v319 = vunpack.c.l.b16 %v236
    %v320 = vunpack.c.h.b16 %v236
    %v321 = vunpack.c.l.b16 %v237
    %v322 = vunpack.c.h.b16 %v237
    %v323 = vunpack.c.l.b16 %v238
    %v324 = vunpack.c.h.b16 %v238
    %v325 = vunpack.c.l.b16 %v239
    %v326 = vunpack.c.h.b16 %v239
    %v327 = vunpack.c.l.b16 %v240
    %v328 = vunpack.c.h.b16 %v240
    %v329 = vunpack.c.l.b16 %v241
    %v330 = vunpack.c.h.b16 %v241
    %v331 = vunpack.c.l.b16 %v242
    %v332 = vunpack.c.h.b16 %v242
    %v333 = vunpack.c.l.b16 %v243
    %v334 = vunpack.c.h.b16 %v243
    %v335 = vunpack.c.l.b16 %v244
    %v336 = vunpack.c.h.b16 %v244
    %v337 = vunpack.c.l.b16 %v245
    %v338 = vunpack.c.h.b16 %v245
    %v339 = vunpack.c.l.b16 %v246
    %v340 = vunpack.c.h.b16 %v246
    %v341 = vunpack.c.l.b16 %v247
    %v342 = vunpack.c.h.b16 %v247
    %v343 = vunpack.c.l.b16 %v248
    %v344 = vunpack.c.h.b16 %v248
    %v345 = vunpack.c.l.b16 %v249
    %v346 = vunpack.c.h.b16 %v249
    %v347 = vunpack.c.l.b16 %v250
    %v348 = vunpack.c.h.b16 %v250
    %v349 = vunpack.c.l.b16 %v251
    %v350 = vunpack.c.h.b16 %v251
    %v351 = vunpack.c.l.b16 %v252
    %v352 = vunpack.c.h.b16 %v252
    %v353 = vunpack.c.l.b16 %v253
    %v354 = vunpack.c.h.b16 %v253
    %v355 = vunpack.c.l.b16 %v254
    %v356 = vunpack.c.h.b16 %v254
    %v357 = vunpack.c.l.b16 %v255
    %v358 = vunpack.c.h.b16 %v255
    %v359 = vunpack.c.l.b16 %v256
    %v360 = vunpack.c.h.b16 %v256
    %v361 = vunpack.c.l.b16 %v257
    %v362 = vunpack.c.h.b16 %v257
    %v363 = vunpack.c.l.b16 %v258
    %v364 = vunpack.c.h.b16 %v258
    %v365 = vunpack.c.l.b16 %v259
    %v366 = vunpack.c.h.b16 %v259
    %v367 = vunpack.c.l.b16 %v260
    %v368 = vunpack.c.h.b16 %v260
    %v369 = vpack.c.b16 %v307, %v305
    %v370 = vpack.c.b16 %v308, %v306
    %v371 = vpack.c.b16 %v311, %v309
    %v372 = vpack.c.b16 %v312, %v310
    %v373 = vpack.c.b16 %v315, %v313
    %v374 = vpack.c.b16 %v316, %v314
    %v375 = vpack.c.b16 %v319, %v317
    %v376 = vpack.c.b16 %v320, %v318
    %v377 = vpack.c.b16 %v323, %v321
    %v378 = vpack.c.b16 %v324, %v322
    %v379 = vpack.c.b16 %v327, %v325
    %v380 = vpack.c.b16 %v328, %v326
    %v381 = vpack.c.b16 %v331, %v329
    %v382 = vpack.c.b16 %v332, %v330
    %v383 = vpack.c.b16 %v335, %v333
    %v384 = vpack.c.b16 %v336, %v334
    %v385 = vpack.c.b16 %v339, %v337
    %v386 = vpack.c.b16 %v340, %v338
    %v387 = vpack.c.b16 %v343, %v341
    %v388 = vpack.c.b16 %v344, %v342
    %v389 = vpack.c.b16 %v347, %v345
    %v390 = vpack.c.b16 %v348, %v346
    %v391 = vpack.c.b16 %v351, %v349
    %v392 = vpack.c.b16 %v352, %v350
    %v393 = vpack.c.b16 %v355, %v353
    %v394 = vpack.c.b16 %v356, %v354
    %v395 = vpack.c.b16 %v359, %v357
    %v396 = vpack.c.b16 %v360, %v358
    %v397 = vpack.c.b16 %v363, %v361
    %v398 = vpack.c.b16 %v364, %v362
    %v399 = vpack.c.b16 %v367, %v365
    %v400 = vpack.c.b16 %v368, %v366
    %433 = vmatprep.subr.bf16.mxu0 %v370
    %434 = vmatpush1.bf16.msra.mxu0 %v369
    %435 = vmatprep.subr.bf16.mxu0 %v372
    %436 = vmatpush1.bf16.msra.mxu0 %v371
    %437 = vmatprep.subr.bf16.mxu0 %v374
    %438 = vmatpush1.bf16.msra.mxu0 %v373
    %439 = vmatprep.subr.bf16.mxu0 %v376
    %440 = vmatpush1.bf16.msra.mxu0 %v375
    %441 = vmatprep.subr.bf16.mxu0 %v378
    %442 = vmatpush1.bf16.msra.mxu0 %v377
    %443 = vmatprep.subr.bf16.mxu0 %v380
    %444 = vmatpush1.bf16.msra.mxu0 %v379
    %445 = vmatprep.subr.bf16.mxu0 %v382
    %446 = vmatpush1.bf16.msra.mxu0 %v381
    %447 = vmatprep.subr.bf16.mxu0 %v384
    %448 = vmatpush1.bf16.msra.mxu0 %v383
    %449 = vmatprep.subr.bf16.mxu0 %v386
    %450 = vmatpush1.bf16.msra.mxu0 %v385
    %451 = vmatprep.subr.bf16.mxu0 %v388
    %452 = vmatpush1.bf16.msra.mxu0 %v387
    %453 = vmatprep.subr.bf16.mxu0 %v390
    %454 = vmatpush1.bf16.msra.mxu0 %v389
    %455 = vmatprep.subr.bf16.mxu0 %v392
    %456 = vmatpush1.bf16.msra.mxu0 %v391
    %457 = vmatprep.subr.bf16.mxu0 %v394
    %458 = vmatpush1.bf16.msra.mxu0 %v393
    %459 = vmatprep.subr.bf16.mxu0 %v396
    %460 = vmatpush1.bf16.msra.mxu0 %v395
    %461 = vmatprep.subr.bf16.mxu0 %v398
    %462 = vmatpush1.bf16.msra.mxu0 %v397
    %463 = vmatprep.subr.bf16.mxu0 %v400
    %464 = vmatpush1.bf16.msra.mxu0 %v399
    %465 = vmatprep.mubr.bf16.mxu0 %v226
    %466 = vmatmul.mubr.bf16.gmra.mrb[0].mxu0 %v225
    %v467 = vpop.f32.mrb[0].mxu0
    %v468 = vadd.f32 %v266, %v467
    %v469 = vpop.f32.mrb[0].mxu0
    %v470 = vadd.f32 %v270, %v469
    %v471 = vpop.f32.mrb[0].mxu0
    %v472 = vadd.f32 %v266, %v471
    %v473 = vpop.f32.mrb[0].mxu0
    %v474 = vadd.f32 %v270, %v473
    %475 = vmatprep.mubr.bf16.mxu0 %v228
    %476 = vmatmul.mubr.bf16.gmra.mrb[0].mxu0 %v227
    %v477 = vpop.f32.mrb[0].mxu0
    %v478 = vadd.f32 %v266, %v477
    %v479 = vpop.f32.mrb[0].mxu0
    %v480 = vadd.f32 %v270, %v479
    %v481 = vpop.f32.mrb[0].mxu0
    %v482 = vadd.f32 %v266, %v481
    %v483 = vpop.f32.mrb[0].mxu0
    %v484 = vadd.f32 %v270, %v483
    %485 = vdwg.mxu0
    %v486 = vmax.f32 %v468, 0.0
    %v487 = vmax.f32 %v470, 0.0
    %v488 = vmax.f32 %v472, 0.0
    %v489 = vmax.f32 %v474, 0.0
    %v490 = vmax.f32 %v478, 0.0
    %v491 = vmax.f32 %v480, 0.0
    %v492 = vmax.f32 %v482, 0.0
    %v493 = vmax.f32 %v484, 0.0
    %v494 = vpack.c.bf16 %v488, %v486
    %v495 = vpack.c.bf16 %v489, %v487
    %v496 = vpack.c.bf16 %v492, %v490
    %v497 = vpack.c.bf16 %v493, %v491
    %s498 = scalar_lea.vmem [#allocation8], 256
    %v499 = vld [vmem:[%s498] sm:$0xff]
    %v500 = vld [vmem:[%s498 + $0x8] sm:$0xff]
    %v501 = vld [vmem:[%s498 + $0x10] sm:$0xff]
    %v502 = vld [vmem:[%s498 + $0x18] sm:$0xff]
    %v503 = vld [vmem:[%s498 + $0x20] sm:$0xff]
    %v504 = vld [vmem:[%s498 + $0x28] sm:$0xff]
    %v505 = vld [vmem:[%s498 + $0x30] sm:$0xff]
    %v506 = vld [vmem:[%s498 + $0x38] sm:$0xff]
    %v507 = vld [vmem:[%s498 + $0x40] sm:$0xff]
    %v508 = vld [vmem:[%s498 + $0x48] sm:$0xff]
    %v509 = vld [vmem:[%s498 + $0x50] sm:$0xff]
    %v510 = vld [vmem:[%s498 + $0x58] sm:$0xff]
    %v511 = vld [vmem:[%s498 + $0x60] sm:$0xff]
    %v512 = vld [vmem:[%s498 + $0x68] sm:$0xff]
    %v513 = vld [vmem:[%s498 + $0x70] sm:$0xff]
    %v514 = vld [vmem:[%s498 + $0x78] sm:$0xff]
    %v515 = vld [vmem:[%s498 + $0x80] sm:$0xff]
    %v516 = vld [vmem:[%s498 + $0x88] sm:$0xff]
    %v517 = vld [vmem:[%s498 + $0x90] sm:$0xff]
    %v518 = vld [vmem:[%s498 + $0x98] sm:$0xff]
    %v519 = vld [vmem:[%s498 + $0xa0] sm:$0xff]
    %v520 = vld [vmem:[%s498 + $0xa8] sm:$0xff]
    %v521 = vld [vmem:[%s498 + $0xb0] sm:$0xff]
    %v522 = vld [vmem:[%s498 + $0xb8] sm:$0xff]
    %v523 = vld [vmem:[%s498 + $0xc0] sm:$0xff]
    %v524 = vld [vmem:[%s498 + $0xc8] sm:$0xff]
    %v525 = vld [vmem:[%s498 + $0xd0] sm:$0xff]
    %v526 = vld [vmem:[%s498 + $0xd8] sm:$0xff]
    %v527 = vld [vmem:[%s498 + $0xe0] sm:$0xff]
    %v528 = vld [vmem:[%s498 + $0xe8] sm:$0xff]
    %v529 = vld [vmem:[%s498 + $0xf0] sm:$0xff]
    %v530 = vld [vmem:[%s498 + $0xf8] sm:$0xff]
    %s531 = scalar_lea.vmem [#allocation9], 1
    %v532 = vld [vmem:[%s531] ss:$8 sm:$0x3]
    %v534 = vlaneseq
    %v535 = vshrl.u32 %v534, 7
    %v536 = vsub.s32 0, %v535
    %v537 = vrot.slane %v532, %v536
    %v538 = vlaneseq
    %v539 = vshrl.u32 %v538, 7
    %v540 = vsub.s32 1, %v539
    %v541 = vrot.slane %v532, %v540
    %v576 = vunpack.c.l.b16 %v499
    %v577 = vunpack.c.h.b16 %v499
    %v578 = vunpack.c.l.b16 %v500
    %v579 = vunpack.c.h.b16 %v500
    %v580 = vunpack.c.l.b16 %v501
    %v581 = vunpack.c.h.b16 %v501
    %v582 = vunpack.c.l.b16 %v502
    %v583 = vunpack.c.h.b16 %v502
    %v584 = vunpack.c.l.b16 %v503
    %v585 = vunpack.c.h.b16 %v503
    %v586 = vunpack.c.l.b16 %v504
    %v587 = vunpack.c.h.b16 %v504
    %v588 = vunpack.c.l.b16 %v505
    %v589 = vunpack.c.h.b16 %v505
    %v590 = vunpack.c.l.b16 %v506
    %v591 = vunpack.c.h.b16 %v506
    %v592 = vunpack.c.l.b16 %v507
    %v593 = vunpack.c.h.b16 %v507
    %v594 = vunpack.c.l.b16 %v508
    %v595 = vunpack.c.h.b16 %v508
    %v596 = vunpack.c.l.b16 %v509
    %v597 = vunpack.c.h.b16 %v509
    %v598 = vunpack.c.l.b16 %v510
    %v599 = vunpack.c.h.b16 %v510
    %v600 = vunpack.c.l.b16 %v511
    %v601 = vunpack.c.h.b16 %v511
    %v602 = vunpack.c.l.b16 %v512
    %v603 = vunpack.c.h.b16 %v512
    %v604 = vunpack.c.l.b16 %v513
    %v605 = vunpack.c.h.b16 %v513
    %v606 = vunpack.c.l.b16 %v514
    %v607 = vunpack.c.h.b16 %v514
    %v608 = vunpack.c.l.b16 %v515
    %v609 = vunpack.c.h.b16 %v515
    %v610 = vunpack.c.l.b16 %v516
    %v611 = vunpack.c.h.b16 %v516
    %v612 = vunpack.c.l.b16 %v517
    %v613 = vunpack.c.h.b16 %v517
    %v614 = vunpack.c.l.b16 %v518
    %v615 = vunpack.c.h.b16 %v518
    %v616 = vunpack.c.l.b16 %v519
    %v617 = vunpack.c.h.b16 %v519
    %v618 = vunpack.c.l.b16 %v520
    %v619 = vunpack.c.h.b16 %v520
    %v620 = vunpack.c.l.b16 %v521
    %v621 = vunpack.c.h.b16 %v521
    %v622 = vunpack.c.l.b16 %v522
    %v623 = vunpack.c.h.b16 %v522
    %v624 = vunpack.c.l.b16 %v523
    %v625 = vunpack.c.h.b16 %v523
    %v626 = vunpack.c.l.b16 %v524
    %v627 = vunpack.c.h.b16 %v524
    %v628 = vunpack.c.l.b16 %v525
    %v629 = vunpack.c.h.b16 %v525
    %v630 = vunpack.c.l.b16 %v526
    %v631 = vunpack.c.h.b16 %v526
    %v632 = vunpack.c.l.b16 %v527
    %v633 = vunpack.c.h.b16 %v527
    %v634 = vunpack.c.l.b16 %v528
    %v635 = vunpack.c.h.b16 %v528
    %v636 = vunpack.c.l.b16 %v529
    %v637 = vunpack.c.h.b16 %v529
    %v638 = vunpack.c.l.b16 %v530
    %v639 = vunpack.c.h.b16 %v530
    %v640 = vpack.c.b16 %v578, %v576
    %v641 = vpack.c.b16 %v579, %v577
    %v642 = vpack.c.b16 %v582, %v580
    %v643 = vpack.c.b16 %v583, %v581
    %v644 = vpack.c.b16 %v586, %v584
    %v645 = vpack.c.b16 %v587, %v585
    %v646 = vpack.c.b16 %v590, %v588
    %v647 = vpack.c.b16 %v591, %v589
    %v648 = vpack.c.b16 %v594, %v592
    %v649 = vpack.c.b16 %v595, %v593
    %v650 = vpack.c.b16 %v598, %v596
    %v651 = vpack.c.b16 %v599, %v597
    %v652 = vpack.c.b16 %v602, %v600
    %v653 = vpack.c.b16 %v603, %v601
    %v654 = vpack.c.b16 %v606, %v604
    %v655 = vpack.c.b16 %v607, %v605
    %v656 = vpack.c.b16 %v610, %v608
    %v657 = vpack.c.b16 %v611, %v609
    %v658 = vpack.c.b16 %v614, %v612
    %v659 = vpack.c.b16 %v615, %v613
    %v660 = vpack.c.b16 %v618, %v616
    %v661 = vpack.c.b16 %v619, %v617
    %v662 = vpack.c.b16 %v622, %v620
    %v663 = vpack.c.b16 %v623, %v621
    %v664 = vpack.c.b16 %v626, %v624
    %v665 = vpack.c.b16 %v627, %v625
    %v666 = vpack.c.b16 %v630, %v628
    %v667 = vpack.c.b16 %v631, %v629
    %v668 = vpack.c.b16 %v634, %v632
    %v669 = vpack.c.b16 %v635, %v633
    %v670 = vpack.c.b16 %v638, %v636
    %v671 = vpack.c.b16 %v639, %v637
    %704 = vmatprep.subr.bf16.mxu0 %v641
    %705 = vmatpush1.bf16.msra.mxu0 %v640
    %706 = vmatprep.subr.bf16.mxu0 %v643
    %707 = vmatpush1.bf16.msra.mxu0 %v642
    %708 = vmatprep.subr.bf16.mxu0 %v645
    %709 = vmatpush1.bf16.msra.mxu0 %v644
    %710 = vmatprep.subr.bf16.mxu0 %v647
    %711 = vmatpush1.bf16.msra.mxu0 %v646
    %712 = vmatprep.subr.bf16.mxu0 %v649
    %713 = vmatpush1.bf16.msra.mxu0 %v648
    %714 = vmatprep.subr.bf16.mxu0 %v651
    %715 = vmatpush1.bf16.msra.mxu0 %v650
    %716 = vmatprep.subr.bf16.mxu0 %v653
    %717 = vmatpush1.bf16.msra.mxu0 %v652
    %718 = vmatprep.subr.bf16.mxu0 %v655
    %719 = vmatpush1.bf16.msra.mxu0 %v654
    %720 = vmatprep.subr.bf16.mxu0 %v657
    %721 = vmatpush1.bf16.msra.mxu0 %v656
    %722 = vmatprep.subr.bf16.mxu0 %v659
    %723 = vmatpush1.bf16.msra.mxu0 %v658
    %724 = vmatprep.subr.bf16.mxu0 %v661
    %725 = vmatpush1.bf16.msra.mxu0 %v660
    %726 = vmatprep.subr.bf16.mxu0 %v663
    %727 = vmatpush1.bf16.msra.mxu0 %v662
    %728 = vmatprep.subr.bf16.mxu0 %v665
    %729 = vmatpush1.bf16.msra.mxu0 %v664
    %730 = vmatprep.subr.bf16.mxu0 %v667
    %731 = vmatpush1.bf16.msra.mxu0 %v666
    %732 = vmatprep.subr.bf16.mxu0 %v669
    %733 = vmatpush1.bf16.msra.mxu0 %v668
    %734 = vmatprep.subr.bf16.mxu0 %v671
    %735 = vmatpush1.bf16.msra.mxu0 %v670
    %736 = vmatprep.mubr.bf16.mxu0 %v495
    %737 = vmatmul.mubr.bf16.gmra.mrb[0].mxu0 %v494
    %v738 = vpop.f32.mrb[0].mxu0
    %v739 = vadd.f32 %v537, %v738
    %v740 = vpop.f32.mrb[0].mxu0
    %v741 = vadd.f32 %v541, %v740
    %v742 = vpop.f32.mrb[0].mxu0
    %v743 = vadd.f32 %v537, %v742
    %v744 = vpop.f32.mrb[0].mxu0
    %v745 = vadd.f32 %v541, %v744
    %746 = vmatprep.mubr.bf16.mxu0 %v497
    %747 = vmatmul.mubr.bf16.gmra.mrb[0].mxu0 %v496
    %v748 = vpop.f32.mrb[0].mxu0
    %v749 = vadd.f32 %v537, %v748
    %v750 = vpop.f32.mrb[0].mxu0
    %v751 = vadd.f32 %v541, %v750
    %v752 = vpop.f32.mrb[0].mxu0
    %v753 = vadd.f32 %v537, %v752
    %v754 = vpop.f32.mrb[0].mxu0
    %v755 = vadd.f32 %v541, %v754
    %756 = vdwg.mxu0
    %v757 = vmax.f32 %v739, 0.0
    %v758 = vmax.f32 %v741, 0.0
    %v759 = vmax.f32 %v743, 0.0
    %v760 = vmax.f32 %v745, 0.0
    %v761 = vmax.f32 %v749, 0.0
    %v762 = vmax.f32 %v751, 0.0
    %v763 = vmax.f32 %v753, 0.0
    %v764 = vmax.f32 %v755, 0.0
    %v765 = vpack.c.bf16 %v759, %v757
    %v766 = vpack.c.bf16 %v760, %v758
    %v767 = vpack.c.bf16 %v763, %v761
    %v768 = vpack.c.bf16 %v764, %v762
    %s769 = scalar_lea.vmem [#allocation8], 512
    %v770 = vld [vmem:[%s769] sm:$0xff]
    %v771 = vld [vmem:[%s769 + $0x8] sm:$0xff]
    %v772 = vld [vmem:[%s769 + $0x10] sm:$0xff]
    %v773 = vld [vmem:[%s769 + $0x18] sm:$0xff]
    %v774 = vld [vmem:[%s769 + $0x20] sm:$0xff]
    %v775 = vld [vmem:[%s769 + $0x28] sm:$0xff]
    %v776 = vld [vmem:[%s769 + $0x30] sm:$0xff]
    %v777 = vld [vmem:[%s769 + $0x38] sm:$0xff]
    %v778 = vld [vmem:[%s769 + $0x40] sm:$0xff]
    %v779 = vld [vmem:[%s769 + $0x48] sm:$0xff]
    %v780 = vld [vmem:[%s769 + $0x50] sm:$0xff]
    %v781 = vld [vmem:[%s769 + $0x58] sm:$0xff]
    %v782 = vld [vmem:[%s769 + $0x60] sm:$0xff]
    %v783 = vld [vmem:[%s769 + $0x68] sm:$0xff]
    %v784 = vld [vmem:[%s769 + $0x70] sm:$0xff]
    %v785 = vld [vmem:[%s769 + $0x78] sm:$0xff]
    %v786 = vld [vmem:[%s769 + $0x80] sm:$0xff]
    %v787 = vld [vmem:[%s769 + $0x88] sm:$0xff]
    %v788 = vld [vmem:[%s769 + $0x90] sm:$0xff]
    %v789 = vld [vmem:[%s769 + $0x98] sm:$0xff]
    %v790 = vld [vmem:[%s769 + $0xa0] sm:$0xff]
    %v791 = vld [vmem:[%s769 + $0xa8] sm:$0xff]
    %v792 = vld [vmem:[%s769 + $0xb0] sm:$0xff]
    %v793 = vld [vmem:[%s769 + $0xb8] sm:$0xff]
    %v794 = vld [vmem:[%s769 + $0xc0] sm:$0xff]
    %v795 = vld [vmem:[%s769 + $0xc8] sm:$0xff]
    %v796 = vld [vmem:[%s769 + $0xd0] sm:$0xff]
    %v797 = vld [vmem:[%s769 + $0xd8] sm:$0xff]
    %v798 = vld [vmem:[%s769 + $0xe0] sm:$0xff]
    %v799 = vld [vmem:[%s769 + $0xe8] sm:$0xff]
    %v800 = vld [vmem:[%s769 + $0xf0] sm:$0xff]
    %v801 = vld [vmem:[%s769 + $0xf8] sm:$0xff]
    %s802 = scalar_lea.vmem [#allocation9], 2
    %v803 = vld [vmem:[%s802] ss:$8 sm:$0x3]
    %v805 = vlaneseq
    %v806 = vshrl.u32 %v805, 7
    %v807 = vsub.s32 0, %v806
    %v808 = vrot.slane %v803, %v807
    %v809 = vlaneseq
    %v810 = vshrl.u32 %v809, 7
    %v811 = vsub.s32 1, %v810
    %v812 = vrot.slane %v803, %v811
    %v847 = vunpack.c.l.b16 %v770
    %v848 = vunpack.c.h.b16 %v770
    %v849 = vunpack.c.l.b16 %v771
    %v850 = vunpack.c.h.b16 %v771
    %v851 = vunpack.c.l.b16 %v772
    %v852 = vunpack.c.h.b16 %v772
    %v853 = vunpack.c.l.b16 %v773
    %v854 = vunpack.c.h.b16 %v773
    %v855 = vunpack.c.l.b16 %v774
    %v856 = vunpack.c.h.b16 %v774
    %v857 = vunpack.c.l.b16 %v775
    %v858 = vunpack.c.h.b16 %v775
    %v859 = vunpack.c.l.b16 %v776
    %v860 = vunpack.c.h.b16 %v776
    %v861 = vunpack.c.l.b16 %v777
    %v862 = vunpack.c.h.b16 %v777
    %v863 = vunpack.c.l.b16 %v778
    %v864 = vunpack.c.h.b16 %v778
    %v865 = vunpack.c.l.b16 %v779
    %v866 = vunpack.c.h.b16 %v779
    %v867 = vunpack.c.l.b16 %v780
    %v868 = vunpack.c.h.b16 %v780
    %v869 = vunpack.c.l.b16 %v781
    %v870 = vunpack.c.h.b16 %v781
    %v871 = vunpack.c.l.b16 %v782
    %v872 = vunpack.c.h.b16 %v782
    %v873 = vunpack.c.l.b16 %v783
    %v874 = vunpack.c.h.b16 %v783
    %v875 = vunpack.c.l.b16 %v784
    %v876 = vunpack.c.h.b16 %v784
    %v877 = vunpack.c.l.b16 %v785
    %v878 = vunpack.c.h.b16 %v785
    %v879 = vunpack.c.l.b16 %v786
    %v880 = vunpack.c.h.b16 %v786
    %v881 = vunpack.c.l.b16 %v787
    %v882 = vunpack.c.h.b16 %v787
    %v883 = vunpack.c.l.b16 %v788
    %v884 = vunpack.c.h.b16 %v788
    %v885 = vunpack.c.l.b16 %v789
    %v886 = vunpack.c.h.b16 %v789
    %v887 = vunpack.c.l.b16 %v790
    %v888 = vunpack.c.h.b16 %v790
    %v889 = vunpack.c.l.b16 %v791
    %v890 = vunpack.c.h.b16 %v791
    %v891 = vunpack.c.l.b16 %v792
    %v892 = vunpack.c.h.b16 %v792
    %v893 = vunpack.c.l.b16 %v793
    %v894 = vunpack.c.h.b16 %v793
    %v895 = vunpack.c.l.b16 %v794
    %v896 = vunpack.c.h.b16 %v794
    %v897 = vunpack.c.l.b16 %v795
    %v898 = vunpack.c.h.b16 %v795
    %v899 = vunpack.c.l.b16 %v796
    %v900 = vunpack.c.h.b16 %v796
    %v901 = vunpack.c.l.b16 %v797
    %v902 = vunpack.c.h.b16 %v797
    %v903 = vunpack.c.l.b16 %v798
    %v904 = vunpack.c.h.b16 %v798
    %v905 = vunpack.c.l.b16 %v799
    %v906 = vunpack.c.h.b16 %v799
    %v907 = vunpack.c.l.b16 %v800
    %v908 = vunpack.c.h.b16 %v800
    %v909 = vunpack.c.l.b16 %v801
    %v910 = vunpack.c.h.b16 %v801
    %v911 = vpack.c.b16 %v849, %v847
    %v912 = vpack.c.b16 %v850, %v848
    %v913 = vpack.c.b16 %v853, %v851
    %v914 = vpack.c.b16 %v854, %v852
    %v915 = vpack.c.b16 %v857, %v855
    %v916 = vpack.c.b16 %v858, %v856
    %v917 = vpack.c.b16 %v861, %v859
    %v918 = vpack.c.b16 %v862, %v860
    %v919 = vpack.c.b16 %v865, %v863
    %v920 = vpack.c.b16 %v866, %v864
    %v921 = vpack.c.b16 %v869, %v867
    %v922 = vpack.c.b16 %v870, %v868
    %v923 = vpack.c.b16 %v873, %v871
    %v924 = vpack.c.b16 %v874, %v872
    %v925 = vpack.c.b16 %v877, %v875
    %v926 = vpack.c.b16 %v878, %v876
    %v927 = vpack.c.b16 %v881, %v879
    %v928 = vpack.c.b16 %v882, %v880
    %v929 = vpack.c.b16 %v885, %v883
    %v930 = vpack.c.b16 %v886, %v884
    %v931 = vpack.c.b16 %v889, %v887
    %v932 = vpack.c.b16 %v890, %v888
    %v933 = vpack.c.b16 %v893, %v891
    %v934 = vpack.c.b16 %v894, %v892
    %v935 = vpack.c.b16 %v897, %v895
    %v936 = vpack.c.b16 %v898, %v896
    %v937 = vpack.c.b16 %v901, %v899
    %v938 = vpack.c.b16 %v902, %v900
    %v939 = vpack.c.b16 %v905, %v903
    %v940 = vpack.c.b16 %v906, %v904
    %v941 = vpack.c.b16 %v909, %v907
    %v942 = vpack.c.b16 %v910, %v908
    %975 = vmatprep.subr.bf16.mxu0 %v912
    %976 = vmatpush1.bf16.msra.mxu0 %v911
    %977 = vmatprep.subr.bf16.mxu0 %v914
    %978 = vmatpush1.bf16.msra.mxu0 %v913
    %979 = vmatprep.subr.bf16.mxu0 %v916
    %980 = vmatpush1.bf16.msra.mxu0 %v915
    %981 = vmatprep.subr.bf16.mxu0 %v918
    %982 = vmatpush1.bf16.msra.mxu0 %v917
    %983 = vmatprep.subr.bf16.mxu0 %v920
    %984 = vmatpush1.bf16.msra.mxu0 %v919
    %985 = vmatprep.subr.bf16.mxu0 %v922
    %986 = vmatpush1.bf16.msra.mxu0 %v921
    %987 = vmatprep.subr.bf16.mxu0 %v924
    %988 = vmatpush1.bf16.msra.mxu0 %v923
    %989 = vmatprep.subr.bf16.mxu0 %v926
    %990 = vmatpush1.bf16.msra.mxu0 %v925
    %991 = vmatprep.subr.bf16.mxu0 %v928
    %992 = vmatpush1.bf16.msra.mxu0 %v927
    %993 = vmatprep.subr.bf16.mxu0 %v930
    %994 = vmatpush1.bf16.msra.mxu0 %v929
    %995 = vmatprep.subr.bf16.mxu0 %v932
    %996 = vmatpush1.bf16.msra.mxu0 %v931
    %997 = vmatprep.subr.bf16.mxu0 %v934
    %998 = vmatpush1.bf16.msra.mxu0 %v933
    %999 = vmatprep.subr.bf16.mxu0 %v936
    %1000 = vmatpush1.bf16.msra.mxu0 %v935
    %1001 = vmatprep.subr.bf16.mxu0 %v938
    %1002 = vmatpush1.bf16.msra.mxu0 %v937
    %1003 = vmatprep.subr.bf16.mxu0 %v940
    %1004 = vmatpush1.bf16.msra.mxu0 %v939
    %1005 = vmatprep.subr.bf16.mxu0 %v942
    %1006 = vmatpush1.bf16.msra.mxu0 %v941
    %1007 = vmatprep.mubr.bf16.mxu0 %v766
    %1008 = vmatmul.mubr.bf16.gmra.mrb[0].mxu0 %v765
    %v1009 = vpop.f32.mrb[0].mxu0
    %v1010 = vadd.f32 %v808, %v1009
    %v1011 = vpop.f32.mrb[0].mxu0
    %v1012 = vadd.f32 %v812, %v1011
    %v1013 = vpop.f32.mrb[0].mxu0
    %v1014 = vadd.f32 %v808, %v1013
    %v1015 = vpop.f32.mrb[0].mxu0
    %v1016 = vadd.f32 %v812, %v1015
    %1017 = vmatprep.mubr.bf16.mxu0 %v768
    %1018 = vmatmul.mubr.bf16.gmra.mrb[0].mxu0 %v767
    %v1019 = vpop.f32.mrb[0].mxu0
    %v1020 = vadd.f32 %v808, %v1019
    %v1021 = vpop.f32.mrb[0].mxu0
    %v1022 = vadd.f32 %v812, %v1021
    %v1023 = vpop.f32.mrb[0].mxu0
    %v1024 = vadd.f32 %v808, %v1023
    %v1025 = vpop.f32.mrb[0].mxu0
    %v1026 = vadd.f32 %v812, %v1025
    %1027 = vdwg.mxu0
    %v1028 = vmax.f32 %v1010, 0.0
    %v1029 = vmax.f32 %v1012, 0.0
    %v1030 = vmax.f32 %v1014, 0.0
    %v1031 = vmax.f32 %v1016, 0.0
    %v1032 = vmax.f32 %v1020, 0.0
    %v1033 = vmax.f32 %v1022, 0.0
    %v1034 = vmax.f32 %v1024, 0.0
    %v1035 = vmax.f32 %v1026, 0.0
    %v1036 = vmul.f32 %v217, 2.0
    %v1037 = vmul.f32 %v218, 2.0
    %v1038 = vmul.f32 %v219, 2.0
    %v1039 = vmul.f32 %v220, 2.0
    %v1040 = vmul.f32 %v221, 2.0
    %v1041 = vmul.f32 %v222, 2.0
    %v1042 = vmul.f32 %v223, 2.0
    %v1043 = vmul.f32 %v224, 2.0
    %v1044 = vadd.f32 %v1028, %v1036
    %v1045 = vadd.f32 %v1029, %v1037
    %v1046 = vadd.f32 %v1030, %v1038
    %v1047 = vadd.f32 %v1031, %v1039
    %v1048 = vadd.f32 %v1032, %v1040
    %v1049 = vadd.f32 %v1033, %v1041
    %v1050 = vadd.f32 %v1034, %v1042
    %v1051 = vadd.f32 %v1035, %v1043
    %v1052 = vpack.c.bf16 %v1046, %v1044
    %v1053 = vpack.c.bf16 %v1047, %v1045
    %v1054 = vpack.c.bf16 %v1050, %v1048
    %v1055 = vpack.c.bf16 %v1051, %v1049
    %s1056 = scalar_lea.vmem [#allocation8], 768
    %v1057 = vld [vmem:[%s1056] sm:$0xff]
    %v1058 = vld [vmem:[%s1056 + $0x8] sm:$0xff]
    %v1059 = vld [vmem:[%s1056 + $0x10] sm:$0xff]
    %v1060 = vld [vmem:[%s1056 + $0x18] sm:$0xff]
    %v1061 = vld [vmem:[%s1056 + $0x20] sm:$0xff]
    %v1062 = vld [vmem:[%s1056 + $0x28] sm:$0xff]
    %v1063 = vld [vmem:[%s1056 + $0x30] sm:$0xff]
    %v1064 = vld [vmem:[%s1056 + $0x38] sm:$0xff]
    %v1065 = vld [vmem:[%s1056 + $0x40] sm:$0xff]
    %v1066 = vld [vmem:[%s1056 + $0x48] sm:$0xff]
    %v1067 = vld [vmem:[%s1056 + $0x50] sm:$0xff]
    %v1068 = vld [vmem:[%s1056 + $0x58] sm:$0xff]
    %v1069 = vld [vmem:[%s1056 + $0x60] sm:$0xff]
    %v1070 = vld [vmem:[%s1056 + $0x68] sm:$0xff]
    %v1071 = vld [vmem:[%s1056 + $0x70] sm:$0xff]
    %v1072 = vld [vmem:[%s1056 + $0x78] sm:$0xff]
    %v1073 = vld [vmem:[%s1056 + $0x80] sm:$0xff]
    %v1074 = vld [vmem:[%s1056 + $0x88] sm:$0xff]
    %v1075 = vld [vmem:[%s1056 + $0x90] sm:$0xff]
    %v1076 = vld [vmem:[%s1056 + $0x98] sm:$0xff]
    %v1077 = vld [vmem:[%s1056 + $0xa0] sm:$0xff]
    %v1078 = vld [vmem:[%s1056 + $0xa8] sm:$0xff]
    %v1079 = vld [vmem:[%s1056 + $0xb0] sm:$0xff]
    %v1080 = vld [vmem:[%s1056 + $0xb8] sm:$0xff]
    %v1081 = vld [vmem:[%s1056 + $0xc0] sm:$0xff]
    %v1082 = vld [vmem:[%s1056 + $0xc8] sm:$0xff]
    %v1083 = vld [vmem:[%s1056 + $0xd0] sm:$0xff]
    %v1084 = vld [vmem:[%s1056 + $0xd8] sm:$0xff]
    %v1085 = vld [vmem:[%s1056 + $0xe0] sm:$0xff]
    %v1086 = vld [vmem:[%s1056 + $0xe8] sm:$0xff]
    %v1087 = vld [vmem:[%s1056 + $0xf0] sm:$0xff]
    %v1088 = vld [vmem:[%s1056 + $0xf8] sm:$0xff]
    %s1089 = scalar_lea.vmem [#allocation9], 3
    %v1090 = vld [vmem:[%s1089] ss:$8 sm:$0x3]
    %v1092 = vlaneseq
    %v1093 = vshrl.u32 %v1092, 7
    %v1094 = vsub.s32 0, %v1093
    %v1095 = vrot.slane %v1090, %v1094
    %v1096 = vlaneseq
    %v1097 = vshrl.u32 %v1096, 7
    %v1098 = vsub.s32 1, %v1097
    %v1099 = vrot.slane %v1090, %v1098
    %v1134 = vunpack.c.l.b16 %v1057
    %v1135 = vunpack.c.h.b16 %v1057
    %v1136 = vunpack.c.l.b16 %v1058
    %v1137 = vunpack.c.h.b16 %v1058
    %v1138 = vunpack.c.l.b16 %v1059
    %v1139 = vunpack.c.h.b16 %v1059
    %v1140 = vunpack.c.l.b16 %v1060
    %v1141 = vunpack.c.h.b16 %v1060
    %v1142 = vunpack.c.l.b16 %v1061
    %v1143 = vunpack.c.h.b16 %v1061
    %v1144 = vunpack.c.l.b16 %v1062
    %v1145 = vunpack.c.h.b16 %v1062
    %v1146 = vunpack.c.l.b16 %v1063
    %v1147 = vunpack.c.h.b16 %v1063
    %v1148 = vunpack.c.l.b16 %v1064
    %v1149 = vunpack.c.h.b16 %v1064
    %v1150 = vunpack.c.l.b16 %v1065
    %v1151 = vunpack.c.h.b16 %v1065
    %v1152 = vunpack.c.l.b16 %v1066
    %v1153 = vunpack.c.h.b16 %v1066
    %v1154 = vunpack.c.l.b16 %v1067
    %v1155 = vunpack.c.h.b16 %v1067
    %v1156 = vunpack.c.l.b16 %v1068
    %v1157 = vunpack.c.h.b16 %v1068
    %v1158 = vunpack.c.l.b16 %v1069
    %v1159 = vunpack.c.h.b16 %v1069
    %v1160 = vunpack.c.l.b16 %v1070
    %v1161 = vunpack.c.h.b16 %v1070
    %v1162 = vunpack.c.l.b16 %v1071
    %v1163 = vunpack.c.h.b16 %v1071
    %v1164 = vunpack.c.l.b16 %v1072
    %v1165 = vunpack.c.h.b16 %v1072
    %v1166 = vunpack.c.l.b16 %v1073
    %v1167 = vunpack.c.h.b16 %v1073
    %v1168 = vunpack.c.l.b16 %v1074
    %v1169 = vunpack.c.h.b16 %v1074
    %v1170 = vunpack.c.l.b16 %v1075
    %v1171 = vunpack.c.h.b16 %v1075
    %v1172 = vunpack.c.l.b16 %v1076
    %v1173 = vunpack.c.h.b16 %v1076
    %v1174 = vunpack.c.l.b16 %v1077
    %v1175 = vunpack.c.h.b16 %v1077
    %v1176 = vunpack.c.l.b16 %v1078
    %v1177 = vunpack.c.h.b16 %v1078
    %v1178 = vunpack.c.l.b16 %v1079
    %v1179 = vunpack.c.h.b16 %v1079
    %v1180 = vunpack.c.l.b16 %v1080
    %v1181 = vunpack.c.h.b16 %v1080
    %v1182 = vunpack.c.l.b16 %v1081
    %v1183 = vunpack.c.h.b16 %v1081
    %v1184 = vunpack.c.l.b16 %v1082
    %v1185 = vunpack.c.h.b16 %v1082
    %v1186 = vunpack.c.l.b16 %v1083
    %v1187 = vunpack.c.h.b16 %v1083
    %v1188 = vunpack.c.l.b16 %v1084
    %v1189 = vunpack.c.h.b16 %v1084
    %v1190 = vunpack.c.l.b16 %v1085
    %v1191 = vunpack.c.h.b16 %v1085
    %v1192 = vunpack.c.l.b16 %v1086
    %v1193 = vunpack.c.h.b16 %v1086
    %v1194 = vunpack.c.l.b16 %v1087
    %v1195 = vunpack.c.h.b16 %v1087
    %v1196 = vunpack.c.l.b16 %v1088
    %v1197 = vunpack.c.h.b16 %v1088
    %v1198 = vpack.c.b16 %v1136, %v1134
    %v1199 = vpack.c.b16 %v1137, %v1135
    %v1200 = vpack.c.b16 %v1140, %v1138
    %v1201 = vpack.c.b16 %v1141, %v1139
    %v1202 = vpack.c.b16 %v1144, %v1142
    %v1203 = vpack.c.b16 %v1145, %v1143
    %v1204 = vpack.c.b16 %v1148, %v1146
    %v1205 = vpack.c.b16 %v1149, %v1147
    %v1206 = vpack.c.b16 %v1152, %v1150
    %v1207 = vpack.c.b16 %v1153, %v1151
    %v1208 = vpack.c.b16 %v1156, %v1154
    %v1209 = vpack.c.b16 %v1157, %v1155
    %v1210 = vpack.c.b16 %v1160, %v1158
    %v1211 = vpack.c.b16 %v1161, %v1159
    %v1212 = vpack.c.b16 %v1164, %v1162
    %v1213 = vpack.c.b16 %v1165, %v1163
    %v1214 = vpack.c.b16 %v1168, %v1166
    %v1215 = vpack.c.b16 %v1169, %v1167
    %v1216 = vpack.c.b16 %v1172, %v1170
    %v1217 = vpack.c.b16 %v1173, %v1171
    %v1218 = vpack.c.b16 %v1176, %v1174
    %v1219 = vpack.c.b16 %v1177, %v1175
    %v1220 = vpack.c.b16 %v1180, %v1178
    %v1221 = vpack.c.b16 %v1181, %v1179
    %v1222 = vpack.c.b16 %v1184, %v1182
    %v1223 = vpack.c.b16 %v1185, %v1183
    %v1224 = vpack.c.b16 %v1188, %v1186
    %v1225 = vpack.c.b16 %v1189, %v1187
    %v1226 = vpack.c.b16 %v1192, %v1190
    %v1227 = vpack.c.b16 %v1193, %v1191
    %v1228 = vpack.c.b16 %v1196, %v1194
    %v1229 = vpack.c.b16 %v1197, %v1195
    %1262 = vmatprep.subr.bf16.mxu0 %v1199
    %1263 = vmatpush1.bf16.msra.mxu0 %v1198
    %1264 = vmatprep.subr.bf16.mxu0 %v1201
    %1265 = vmatpush1.bf16.msra.mxu0 %v1200
    %1266 = vmatprep.subr.bf16.mxu0 %v1203
    %1267 = vmatpush1.bf16.msra.mxu0 %v1202
    %1268 = vmatprep.subr.bf16.mxu0 %v1205
    %1269 = vmatpush1.bf16.msra.mxu0 %v1204
    %1270 = vmatprep.subr.bf16.mxu0 %v1207
    %1271 = vmatpush1.bf16.msra.mxu0 %v1206
    %1272 = vmatprep.subr.bf16.mxu0 %v1209
    %1273 = vmatpush1.bf16.msra.mxu0 %v1208
    %1274 = vmatprep.subr.bf16.mxu0 %v1211
    %1275 = vmatpush1.bf16.msra.mxu0 %v1210
    %1276 = vmatprep.subr.bf16.mxu0 %v1213
    %1277 = vmatpush1.bf16.msra.mxu0 %v1212
    %1278 = vmatprep.subr.bf16.mxu0 %v1215
    %1279 = vmatpush1.bf16.msra.mxu0 %v1214
    %1280 = vmatprep.subr.bf16.mxu0 %v1217
    %1281 = vmatpush1.bf16.msra.mxu0 %v1216
    %1282 = vmatprep.subr.bf16.mxu0 %v1219
    %1283 = vmatpush1.bf16.msra.mxu0 %v1218
    %1284 = vmatprep.subr.bf16.mxu0 %v1221
    %1285 = vmatpush1.bf16.msra.mxu0 %v1220
    %1286 = vmatprep.subr.bf16.mxu0 %v1223
    %1287 = vmatpush1.bf16.msra.mxu0 %v1222
    %1288 = vmatprep.subr.bf16.mxu0 %v1225
    %1289 = vmatpush1.bf16.msra.mxu0 %v1224
    %1290 = vmatprep.subr.bf16.mxu0 %v1227
    %1291 = vmatpush1.bf16.msra.mxu0 %v1226
    %1292 = vmatprep.subr.bf16.mxu0 %v1229
    %1293 = vmatpush1.bf16.msra.mxu0 %v1228
    %1294 = vmatprep.mubr.bf16.mxu0 %v1053
    %1295 = vmatmul.mubr.bf16.gmra.mrb[0].mxu0 %v1052
    %v1296 = vpop.f32.mrb[0].mxu0
    %v1297 = vadd.f32 %v1095, %v1296
    %v1298 = vpop.f32.mrb[0].mxu0
    %v1299 = vadd.f32 %v1099, %v1298
    %v1300 = vpop.f32.mrb[0].mxu0
    %v1301 = vadd.f32 %v1095, %v1300
    %v1302 = vpop.f32.mrb[0].mxu0
    %v1303 = vadd.f32 %v1099, %v1302
    %1304 = vmatprep.mubr.bf16.mxu0 %v1055
    %1305 = vmatmul.mubr.bf16.gmra.mrb[0].mxu0 %v1054
    %v1306 = vpop.f32.mrb[0].mxu0
    %v1307 = vadd.f32 %v1095, %v1306
    %v1308 = vpop.f32.mrb[0].mxu0
    %v1309 = vadd.f32 %v1099, %v1308
    %v1310 = vpop.f32.mrb[0].mxu0
    %v1311 = vadd.f32 %v1095, %v1310
    %v1312 = vpop.f32.mrb[0].mxu0
    %v1313 = vadd.f32 %v1099, %v1312
    %1314 = vdwg.mxu0
    %v1315 = vmax.f32 %v1297, 0.0
    %v1316 = vmax.f32 %v1299, 0.0
    %v1317 = vmax.f32 %v1301, 0.0
    %v1318 = vmax.f32 %v1303, 0.0
    %v1319 = vmax.f32 %v1307, 0.0
    %v1320 = vmax.f32 %v1309, 0.0
    %v1321 = vmax.f32 %v1311, 0.0
    %v1322 = vmax.f32 %v1313, 0.0
    %v1323 = vpack.c.bf16 %v1317, %v1315
    %v1324 = vpack.c.bf16 %v1318, %v1316
    %v1325 = vpack.c.bf16 %v1321, %v1319
    %v1326 = vpack.c.bf16 %v1322, %v1320
    %s1327 = scalar_lea.vmem [#allocation8], 1024
    %v1328 = vld [vmem:[%s1327] sm:$0xff]
    %v1329 = vld [vmem:[%s1327 + $0x8] sm:$0xff]
    %v1330 = vld [vmem:[%s1327 + $0x10] sm:$0xff]
    %v1331 = vld [vmem:[%s1327 + $0x18] sm:$0xff]
    %v1332 = vld [vmem:[%s1327 + $0x20] sm:$0xff]
    %v1333 = vld [vmem:[%s1327 + $0x28] sm:$0xff]
    %v1334 = vld [vmem:[%s1327 + $0x30] sm:$0xff]
    %v1335 = vld [vmem:[%s1327 + $0x38] sm:$0xff]
    %v1336 = vld [vmem:[%s1327 + $0x40] sm:$0xff]
    %v1337 = vld [vmem:[%s1327 + $0x48] sm:$0xff]
    %v1338 = vld [vmem:[%s1327 + $0x50] sm:$0xff]
    %v1339 = vld [vmem:[%s1327 + $0x58] sm:$0xff]
    %v1340 = vld [vmem:[%s1327 + $0x60] sm:$0xff]
    %v1341 = vld [vmem:[%s1327 + $0x68] sm:$0xff]
    %v1342 = vld [vmem:[%s1327 + $0x70] sm:$0xff]
    %v1343 = vld [vmem:[%s1327 + $0x78] sm:$0xff]
    %v1344 = vld [vmem:[%s1327 + $0x80] sm:$0xff]
    %v1345 = vld [vmem:[%s1327 + $0x88] sm:$0xff]
    %v1346 = vld [vmem:[%s1327 + $0x90] sm:$0xff]
    %v1347 = vld [vmem:[%s1327 + $0x98] sm:$0xff]
    %v1348 = vld [vmem:[%s1327 + $0xa0] sm:$0xff]
    %v1349 = vld [vmem:[%s1327 + $0xa8] sm:$0xff]
    %v1350 = vld [vmem:[%s1327 + $0xb0] sm:$0xff]
    %v1351 = vld [vmem:[%s1327 + $0xb8] sm:$0xff]
    %v1352 = vld [vmem:[%s1327 + $0xc0] sm:$0xff]
    %v1353 = vld [vmem:[%s1327 + $0xc8] sm:$0xff]
    %v1354 = vld [vmem:[%s1327 + $0xd0] sm:$0xff]
    %v1355 = vld [vmem:[%s1327 + $0xd8] sm:$0xff]
    %v1356 = vld [vmem:[%s1327 + $0xe0] sm:$0xff]
    %v1357 = vld [vmem:[%s1327 + $0xe8] sm:$0xff]
    %v1358 = vld [vmem:[%s1327 + $0xf0] sm:$0xff]
    %v1359 = vld [vmem:[%s1327 + $0xf8] sm:$0xff]
    %s1360 = scalar_lea.vmem [#allocation9], 4
    %v1361 = vld [vmem:[%s1360] ss:$8 sm:$0x3]
    %v1363 = vlaneseq
    %v1364 = vshrl.u32 %v1363, 7
    %v1365 = vsub.s32 0, %v1364
    %v1366 = vrot.slane %v1361, %v1365
    %v1367 = vlaneseq
    %v1368 = vshrl.u32 %v1367, 7
    %v1369 = vsub.s32 1, %v1368
    %v1370 = vrot.slane %v1361, %v1369
    %v1405 = vunpack.c.l.b16 %v1328
    %v1406 = vunpack.c.h.b16 %v1328
    %v1407 = vunpack.c.l.b16 %v1329
    %v1408 = vunpack.c.h.b16 %v1329
    %v1409 = vunpack.c.l.b16 %v1330
    %v1410 = vunpack.c.h.b16 %v1330
    %v1411 = vunpack.c.l.b16 %v1331
    %v1412 = vunpack.c.h.b16 %v1331
    %v1413 = vunpack.c.l.b16 %v1332
    %v1414 = vunpack.c.h.b16 %v1332
    %v1415 = vunpack.c.l.b16 %v1333
    %v1416 = vunpack.c.h.b16 %v1333
    %v1417 = vunpack.c.l.b16 %v1334
    %v1418 = vunpack.c.h.b16 %v1334
    %v1419 = vunpack.c.l.b16 %v1335
    %v1420 = vunpack.c.h.b16 %v1335
    %v1421 = vunpack.c.l.b16 %v1336
    %v1422 = vunpack.c.h.b16 %v1336
    %v1423 = vunpack.c.l.b16 %v1337
    %v1424 = vunpack.c.h.b16 %v1337
    %v1425 = vunpack.c.l.b16 %v1338
    %v1426 = vunpack.c.h.b16 %v1338
    %v1427 = vunpack.c.l.b16 %v1339
    %v1428 = vunpack.c.h.b16 %v1339
    %v1429 = vunpack.c.l.b16 %v1340
    %v1430 = vunpack.c.h.b16 %v1340
    %v1431 = vunpack.c.l.b16 %v1341
    %v1432 = vunpack.c.h.b16 %v1341
    %v1433 = vunpack.c.l.b16 %v1342
    %v1434 = vunpack.c.h.b16 %v1342
    %v1435 = vunpack.c.l.b16 %v1343
    %v1436 = vunpack.c.h.b16 %v1343
    %v1437 = vunpack.c.l.b16 %v1344
    %v1438 = vunpack.c.h.b16 %v1344
    %v1439 = vunpack.c.l.b16 %v1345
    %v1440 = vunpack.c.h.b16 %v1345
    %v1441 = vunpack.c.l.b16 %v1346
    %v1442 = vunpack.c.h.b16 %v1346
    %v1443 = vunpack.c.l.b16 %v1347
    %v1444 = vunpack.c.h.b16 %v1347
    %v1445 = vunpack.c.l.b16 %v1348
    %v1446 = vunpack.c.h.b16 %v1348
    %v1447 = vunpack.c.l.b16 %v1349
    %v1448 = vunpack.c.h.b16 %v1349
    %v1449 = vunpack.c.l.b16 %v1350
    %v1450 = vunpack.c.h.b16 %v1350
    %v1451 = vunpack.c.l.b16 %v1351
    %v1452 = vunpack.c.h.b16 %v1351
    %v1453 = vunpack.c.l.b16 %v1352
    %v1454 = vunpack.c.h.b16 %v1352
    %v1455 = vunpack.c.l.b16 %v1353
    %v1456 = vunpack.c.h.b16 %v1353
    %v1457 = vunpack.c.l.b16 %v1354
    %v1458 = vunpack.c.h.b16 %v1354
    %v1459 = vunpack.c.l.b16 %v1355
    %v1460 = vunpack.c.h.b16 %v1355
    %v1461 = vunpack.c.l.b16 %v1356
    %v1462 = vunpack.c.h.b16 %v1356
    %v1463 = vunpack.c.l.b16 %v1357
    %v1464 = vunpack.c.h.b16 %v1357
    %v1465 = vunpack.c.l.b16 %v1358
    %v1466 = vunpack.c.h.b16 %v1358
    %v1467 = vunpack.c.l.b16 %v1359
    %v1468 = vunpack.c.h.b16 %v1359
    %v1469 = vpack.c.b16 %v1407, %v1405
    %v1470 = vpack.c.b16 %v1408, %v1406
    %v1471 = vpack.c.b16 %v1411, %v1409
    %v1472 = vpack.c.b16 %v1412, %v1410
    %v1473 = vpack.c.b16 %v1415, %v1413
    %v1474 = vpack.c.b16 %v1416, %v1414
    %v1475 = vpack.c.b16 %v1419, %v1417
    %v1476 = vpack.c.b16 %v1420, %v1418
    %v1477 = vpack.c.b16 %v1423, %v1421
    %v1478 = vpack.c.b16 %v1424, %v1422
    %v1479 = vpack.c.b16 %v1427, %v1425
    %v1480 = vpack.c.b16 %v1428, %v1426
    %v1481 = vpack.c.b16 %v1431, %v1429
    %v1482 = vpack.c.b16 %v1432, %v1430
    %v1483 = vpack.c.b16 %v1435, %v1433
    %v1484 = vpack.c.b16 %v1436, %v1434
    %v1485 = vpack.c.b16 %v1439, %v1437
    %v1486 = vpack.c.b16 %v1440, %v1438
    %v1487 = vpack.c.b16 %v1443, %v1441
    %v1488 = vpack.c.b16 %v1444, %v1442
    %v1489 = vpack.c.b16 %v1447, %v1445
    %v1490 = vpack.c.b16 %v1448, %v1446
    %v1491 = vpack.c.b16 %v1451, %v1449
    %v1492 = vpack.c.b16 %v1452, %v1450
    %v1493 = vpack.c.b16 %v1455, %v1453
    %v1494 = vpack.c.b16 %v1456, %v1454
    %v1495 = vpack.c.b16 %v1459, %v1457
    %v1496 = vpack.c.b16 %v1460, %v1458
    %v1497 = vpack.c.b16 %v1463, %v1461
    %v1498 = vpack.c.b16 %v1464, %v1462
    %v1499 = vpack.c.b16 %v1467, %v1465
    %v1500 = vpack.c.b16 %v1468, %v1466
    %1533 = vmatprep.subr.bf16.mxu0 %v1470
    %1534 = vmatpush1.bf16.msra.mxu0 %v1469
    %1535 = vmatprep.subr.bf16.mxu0 %v1472
    %1536 = vmatpush1.bf16.msra.mxu0 %v1471
    %1537 = vmatprep.subr.bf16.mxu0 %v1474
    %1538 = vmatpush1.bf16.msra.mxu0 %v1473
    %1539 = vmatprep.subr.bf16.mxu0 %v1476
    %1540 = vmatpush1.bf16.msra.mxu0 %v1475
    %1541 = vmatprep.subr.bf16.mxu0 %v1478
    %1542 = vmatpush1.bf16.msra.mxu0 %v1477
    %1543 = vmatprep.subr.bf16.mxu0 %v1480
    %1544 = vmatpush1.bf16.msra.mxu0 %v1479
    %1545 = vmatprep.subr.bf16.mxu0 %v1482
    %1546 = vmatpush1.bf16.msra.mxu0 %v1481
    %1547 = vmatprep.subr.bf16.mxu0 %v1484
    %1548 = vmatpush1.bf16.msra.mxu0 %v1483
    %1549 = vmatprep.subr.bf16.mxu0 %v1486
    %1550 = vmatpush1.bf16.msra.mxu0 %v1485
    %1551 = vmatprep.subr.bf16.mxu0 %v1488
    %1552 = vmatpush1.bf16.msra.mxu0 %v1487
    %1553 = vmatprep.subr.bf16.mxu0 %v1490
    %1554 = vmatpush1.bf16.msra.mxu0 %v1489
    %1555 = vmatprep.subr.bf16.mxu0 %v1492
    %1556 = vmatpush1.bf16.msra.mxu0 %v1491
    %1557 = vmatprep.subr.bf16.mxu0 %v1494
    %1558 = vmatpush1.bf16.msra.mxu0 %v1493
    %1559 = vmatprep.subr.bf16.mxu0 %v1496
    %1560 = vmatpush1.bf16.msra.mxu0 %v1495
    %1561 = vmatprep.subr.bf16.mxu0 %v1498
    %1562 = vmatpush1.bf16.msra.mxu0 %v1497
    %1563 = vmatprep.subr.bf16.mxu0 %v1500
    %1564 = vmatpush1.bf16.msra.mxu0 %v1499
    %1565 = vmatprep.mubr.bf16.mxu0 %v1324
    %1566 = vmatmul.mubr.bf16.gmra.mrb[0].mxu0 %v1323
    %v1567 = vpop.f32.mrb[0].mxu0
    %v1568 = vadd.f32 %v1366, %v1567
    %v1569 = vpop.f32.mrb[0].mxu0
    %v1570 = vadd.f32 %v1370, %v1569
    %v1571 = vpop.f32.mrb[0].mxu0
    %v1572 = vadd.f32 %v1366, %v1571
    %v1573 = vpop.f32.mrb[0].mxu0
    %v1574 = vadd.f32 %v1370, %v1573
    %1575 = vmatprep.mubr.bf16.mxu0 %v1326
    %1576 = vmatmul.mubr.bf16.gmra.mrb[0].mxu0 %v1325
    %v1577 = vpop.f32.mrb[0].mxu0
    %v1578 = vadd.f32 %v1366, %v1577
    %v1579 = vpop.f32.mrb[0].mxu0
    %v1580 = vadd.f32 %v1370, %v1579
    %v1581 = vpop.f32.mrb[0].mxu0
    %v1582 = vadd.f32 %v1366, %v1581
    %v1583 = vpop.f32.mrb[0].mxu0
    %v1584 = vadd.f32 %v1370, %v1583
    %1585 = vdwg.mxu0
    %v1586 = vmax.f32 %v1568, 0.0
    %v1587 = vmax.f32 %v1570, 0.0
    %v1588 = vmax.f32 %v1572, 0.0
    %v1589 = vmax.f32 %v1574, 0.0
    %v1590 = vmax.f32 %v1578, 0.0
    %v1591 = vmax.f32 %v1580, 0.0
    %v1592 = vmax.f32 %v1582, 0.0
    %v1593 = vmax.f32 %v1584, 0.0
    %v1594 = vpack.c.bf16 %v1588, %v1586
    %v1595 = vpack.c.bf16 %v1589, %v1587
    %v1596 = vpack.c.bf16 %v1592, %v1590
    %v1597 = vpack.c.bf16 %v1593, %v1591
    %s1598 = scalar_lea.vmem [#allocation8], 1280
    %v1599 = vld [vmem:[%s1598] sm:$0xff]
    %v1600 = vld [vmem:[%s1598 + $0x8] sm:$0xff]
    %v1601 = vld [vmem:[%s1598 + $0x10] sm:$0xff]
    %v1602 = vld [vmem:[%s1598 + $0x18] sm:$0xff]
    %v1603 = vld [vmem:[%s1598 + $0x20] sm:$0xff]
    %v1604 = vld [vmem:[%s1598 + $0x28] sm:$0xff]
    %v1605 = vld [vmem:[%s1598 + $0x30] sm:$0xff]
    %v1606 = vld [vmem:[%s1598 + $0x38] sm:$0xff]
    %v1607 = vld [vmem:[%s1598 + $0x40] sm:$0xff]
    %v1608 = vld [vmem:[%s1598 + $0x48] sm:$0xff]
    %v1609 = vld [vmem:[%s1598 + $0x50] sm:$0xff]
    %v1610 = vld [vmem:[%s1598 + $0x58] sm:$0xff]
    %v1611 = vld [vmem:[%s1598 + $0x60] sm:$0xff]
    %v1612 = vld [vmem:[%s1598 + $0x68] sm:$0xff]
    %v1613 = vld [vmem:[%s1598 + $0x70] sm:$0xff]
    %v1614 = vld [vmem:[%s1598 + $0x78] sm:$0xff]
    %v1615 = vld [vmem:[%s1598 + $0x80] sm:$0xff]
    %v1616 = vld [vmem:[%s1598 + $0x88] sm:$0xff]
    %v1617 = vld [vmem:[%s1598 + $0x90] sm:$0xff]
    %v1618 = vld [vmem:[%s1598 + $0x98] sm:$0xff]
    %v1619 = vld [vmem:[%s1598 + $0xa0] sm:$0xff]
    %v1620 = vld [vmem:[%s1598 + $0xa8] sm:$0xff]
    %v1621 = vld [vmem:[%s1598 + $0xb0] sm:$0xff]
    %v1622 = vld [vmem:[%s1598 + $0xb8] sm:$0xff]
    %v1623 = vld [vmem:[%s1598 + $0xc0] sm:$0xff]
    %v1624 = vld [vmem:[%s1598 + $0xc8] sm:$0xff]
    %v1625 = vld [vmem:[%s1598 + $0xd0] sm:$0xff]
    %v1626 = vld [vmem:[%s1598 + $0xd8] sm:$0xff]
    %v1627 = vld [vmem:[%s1598 + $0xe0] sm:$0xff]
    %v1628 = vld [vmem:[%s1598 + $0xe8] sm:$0xff]
    %v1629 = vld [vmem:[%s1598 + $0xf0] sm:$0xff]
    %v1630 = vld [vmem:[%s1598 + $0xf8] sm:$0xff]
    %s1631 = scalar_lea.vmem [#allocation9], 5
    %v1632 = vld [vmem:[%s1631] ss:$8 sm:$0x3]
    %v1634 = vlaneseq
    %v1635 = vshrl.u32 %v1634, 7
    %v1636 = vsub.s32 0, %v1635
    %v1637 = vrot.slane %v1632, %v1636
    %v1638 = vlaneseq
    %v1639 = vshrl.u32 %v1638, 7
    %v1640 = vsub.s32 1, %v1639
    %v1641 = vrot.slane %v1632, %v1640
    %v1676 = vunpack.c.l.b16 %v1599
    %v1677 = vunpack.c.h.b16 %v1599
    %v1678 = vunpack.c.l.b16 %v1600
    %v1679 = vunpack.c.h.b16 %v1600
    %v1680 = vunpack.c.l.b16 %v1601
    %v1681 = vunpack.c.h.b16 %v1601
    %v1682 = vunpack.c.l.b16 %v1602
    %v1683 = vunpack.c.h.b16 %v1602
    %v1684 = vunpack.c.l.b16 %v1603
    %v1685 = vunpack.c.h.b16 %v1603
    %v1686 = vunpack.c.l.b16 %v1604
    %v1687 = vunpack.c.h.b16 %v1604
    %v1688 = vunpack.c.l.b16 %v1605
    %v1689 = vunpack.c.h.b16 %v1605
    %v1690 = vunpack.c.l.b16 %v1606
    %v1691 = vunpack.c.h.b16 %v1606
    %v1692 = vunpack.c.l.b16 %v1607
    %v1693 = vunpack.c.h.b16 %v1607
    %v1694 = vunpack.c.l.b16 %v1608
    %v1695 = vunpack.c.h.b16 %v1608
    %v1696 = vunpack.c.l.b16 %v1609
    %v1697 = vunpack.c.h.b16 %v1609
    %v1698 = vunpack.c.l.b16 %v1610
    %v1699 = vunpack.c.h.b16 %v1610
    %v1700 = vunpack.c.l.b16 %v1611
    %v1701 = vunpack.c.h.b16 %v1611
    %v1702 = vunpack.c.l.b16 %v1612
    %v1703 = vunpack.c.h.b16 %v1612
    %v1704 = vunpack.c.l.b16 %v1613
    %v1705 = vunpack.c.h.b16 %v1613
    %v1706 = vunpack.c.l.b16 %v1614
    %v1707 = vunpack.c.h.b16 %v1614
    %v1708 = vunpack.c.l.b16 %v1615
    %v1709 = vunpack.c.h.b16 %v1615
    %v1710 = vunpack.c.l.b16 %v1616
    %v1711 = vunpack.c.h.b16 %v1616
    %v1712 = vunpack.c.l.b16 %v1617
    %v1713 = vunpack.c.h.b16 %v1617
    %v1714 = vunpack.c.l.b16 %v1618
    %v1715 = vunpack.c.h.b16 %v1618
    %v1716 = vunpack.c.l.b16 %v1619
    %v1717 = vunpack.c.h.b16 %v1619
    %v1718 = vunpack.c.l.b16 %v1620
    %v1719 = vunpack.c.h.b16 %v1620
    %v1720 = vunpack.c.l.b16 %v1621
    %v1721 = vunpack.c.h.b16 %v1621
    %v1722 = vunpack.c.l.b16 %v1622
    %v1723 = vunpack.c.h.b16 %v1622
    %v1724 = vunpack.c.l.b16 %v1623
    %v1725 = vunpack.c.h.b16 %v1623
    %v1726 = vunpack.c.l.b16 %v1624
    %v1727 = vunpack.c.h.b16 %v1624
    %v1728 = vunpack.c.l.b16 %v1625
    %v1729 = vunpack.c.h.b16 %v1625
    %v1730 = vunpack.c.l.b16 %v1626
    %v1731 = vunpack.c.h.b16 %v1626
    %v1732 = vunpack.c.l.b16 %v1627
    %v1733 = vunpack.c.h.b16 %v1627
    %v1734 = vunpack.c.l.b16 %v1628
    %v1735 = vunpack.c.h.b16 %v1628
    %v1736 = vunpack.c.l.b16 %v1629
    %v1737 = vunpack.c.h.b16 %v1629
    %v1738 = vunpack.c.l.b16 %v1630
    %v1739 = vunpack.c.h.b16 %v1630
    %v1740 = vpack.c.b16 %v1678, %v1676
    %v1741 = vpack.c.b16 %v1679, %v1677
    %v1742 = vpack.c.b16 %v1682, %v1680
    %v1743 = vpack.c.b16 %v1683, %v1681
    %v1744 = vpack.c.b16 %v1686, %v1684
    %v1745 = vpack.c.b16 %v1687, %v1685
    %v1746 = vpack.c.b16 %v1690, %v1688
    %v1747 = vpack.c.b16 %v1691, %v1689
    %v1748 = vpack.c.b16 %v1694, %v1692
    %v1749 = vpack.c.b16 %v1695, %v1693
    %v1750 = vpack.c.b16 %v1698, %v1696
    %v1751 = vpack.c.b16 %v1699, %v1697
    %v1752 = vpack.c.b16 %v1702, %v1700
    %v1753 = vpack.c.b16 %v1703, %v1701
    %v1754 = vpack.c.b16 %v1706, %v1704
    %v1755 = vpack.c.b16 %v1707, %v1705
    %v1756 = vpack.c.b16 %v1710, %v1708
    %v1757 = vpack.c.b16 %v1711, %v1709
    %v1758 = vpack.c.b16 %v1714, %v1712
    %v1759 = vpack.c.b16 %v1715, %v1713
    %v1760 = vpack.c.b16 %v1718, %v1716
    %v1761 = vpack.c.b16 %v1719, %v1717
    %v1762 = vpack.c.b16 %v1722, %v1720
    %v1763 = vpack.c.b16 %v1723, %v1721
    %v1764 = vpack.c.b16 %v1726, %v1724
    %v1765 = vpack.c.b16 %v1727, %v1725
    %v1766 = vpack.c.b16 %v1730, %v1728
    %v1767 = vpack.c.b16 %v1731, %v1729
    %v1768 = vpack.c.b16 %v1734, %v1732
    %v1769 = vpack.c.b16 %v1735, %v1733
    %v1770 = vpack.c.b16 %v1738, %v1736
    %v1771 = vpack.c.b16 %v1739, %v1737
    %1804 = vmatprep.subr.bf16.mxu0 %v1741
    %1805 = vmatpush1.bf16.msra.mxu0 %v1740
    %1806 = vmatprep.subr.bf16.mxu0 %v1743
    %1807 = vmatpush1.bf16.msra.mxu0 %v1742
    %1808 = vmatprep.subr.bf16.mxu0 %v1745
    %1809 = vmatpush1.bf16.msra.mxu0 %v1744
    %1810 = vmatprep.subr.bf16.mxu0 %v1747
    %1811 = vmatpush1.bf16.msra.mxu0 %v1746
    %1812 = vmatprep.subr.bf16.mxu0 %v1749
    %1813 = vmatpush1.bf16.msra.mxu0 %v1748
    %1814 = vmatprep.subr.bf16.mxu0 %v1751
    %1815 = vmatpush1.bf16.msra.mxu0 %v1750
    %1816 = vmatprep.subr.bf16.mxu0 %v1753
    %1817 = vmatpush1.bf16.msra.mxu0 %v1752
    %1818 = vmatprep.subr.bf16.mxu0 %v1755
    %1819 = vmatpush1.bf16.msra.mxu0 %v1754
    %1820 = vmatprep.subr.bf16.mxu0 %v1757
    %1821 = vmatpush1.bf16.msra.mxu0 %v1756
    %1822 = vmatprep.subr.bf16.mxu0 %v1759
    %1823 = vmatpush1.bf16.msra.mxu0 %v1758
    %1824 = vmatprep.subr.bf16.mxu0 %v1761
    %1825 = vmatpush1.bf16.msra.mxu0 %v1760
    %1826 = vmatprep.subr.bf16.mxu0 %v1763
    %1827 = vmatpush1.bf16.msra.mxu0 %v1762
    %1828 = vmatprep.subr.bf16.mxu0 %v1765
    %1829 = vmatpush1.bf16.msra.mxu0 %v1764
    %1830 = vmatprep.subr.bf16.mxu0 %v1767
    %1831 = vmatpush1.bf16.msra.mxu0 %v1766
    %1832 = vmatprep.subr.bf16.mxu0 %v1769
    %1833 = vmatpush1.bf16.msra.mxu0 %v1768
    %1834 = vmatprep.subr.bf16.mxu0 %v1771
    %1835 = vmatpush1.bf16.msra.mxu0 %v1770
    %1836 = vmatprep.mubr.bf16.mxu0 %v1595
    %1837 = vmatmul.mubr.bf16.gmra.mrb[0].mxu0 %v1594
    %v1838 = vpop.f32.mrb[0].mxu0
    %v1839 = vadd.f32 %v1637, %v1838
    %v1840 = vpop.f32.mrb[0].mxu0
    %v1841 = vadd.f32 %v1641, %v1840
    %v1842 = vpop.f32.mrb[0].mxu0
    %v1843 = vadd.f32 %v1637, %v1842
    %v1844 = vpop.f32.mrb[0].mxu0
    %v1845 = vadd.f32 %v1641, %v1844
    %1846 = vmatprep.mubr.bf16.mxu0 %v1597
    %1847 = vmatmul.mubr.bf16.gmra.mrb[0].mxu0 %v1596
    %v1848 = vpop.f32.mrb[0].mxu0
    %v1849 = vadd.f32 %v1637, %v1848
    %v1850 = vpop.f32.mrb[0].mxu0
    %v1851 = vadd.f32 %v1641, %v1850
    %v1852 = vpop.f32.mrb[0].mxu0
    %v1853 = vadd.f32 %v1637, %v1852
    %v1854 = vpop.f32.mrb[0].mxu0
    %v1855 = vadd.f32 %v1641, %v1854
    %1856 = vdwg.mxu0
    %v1857 = vmax.f32 %v1839, 0.0
    %v1858 = vmax.f32 %v1841, 0.0
    %v1859 = vmax.f32 %v1843, 0.0
    %v1860 = vmax.f32 %v1845, 0.0
    %v1861 = vmax.f32 %v1849, 0.0
    %v1862 = vmax.f32 %v1851, 0.0
    %v1863 = vmax.f32 %v1853, 0.0
    %v1864 = vmax.f32 %v1855, 0.0
    %v1865 = vpack.c.bf16 %v1859, %v1857
    %v1866 = vpack.c.bf16 %v1860, %v1858
    %v1867 = vpack.c.bf16 %v1863, %v1861
    %v1868 = vpack.c.bf16 %v1864, %v1862
    %s1869 = scalar_lea.vmem [#allocation8], 1536
    %v1870 = vld [vmem:[%s1869] sm:$0xff]
    %v1871 = vld [vmem:[%s1869 + $0x8] sm:$0xff]
    %v1872 = vld [vmem:[%s1869 + $0x10] sm:$0xff]
    %v1873 = vld [vmem:[%s1869 + $0x18] sm:$0xff]
    %v1874 = vld [vmem:[%s1869 + $0x20] sm:$0xff]
    %v1875 = vld [vmem:[%s1869 + $0x28] sm:$0xff]
    %v1876 = vld [vmem:[%s1869 + $0x30] sm:$0xff]
    %v1877 = vld [vmem:[%s1869 + $0x38] sm:$0xff]
    %v1878 = vld [vmem:[%s1869 + $0x40] sm:$0xff]
    %v1879 = vld [vmem:[%s1869 + $0x48] sm:$0xff]
    %v1880 = vld [vmem:[%s1869 + $0x50] sm:$0xff]
    %v1881 = vld [vmem:[%s1869 + $0x58] sm:$0xff]
    %v1882 = vld [vmem:[%s1869 + $0x60] sm:$0xff]
    %v1883 = vld [vmem:[%s1869 + $0x68] sm:$0xff]
    %v1884 = vld [vmem:[%s1869 + $0x70] sm:$0xff]
    %v1885 = vld [vmem:[%s1869 + $0x78] sm:$0xff]
    %v1886 = vld [vmem:[%s1869 + $0x80] sm:$0xff]
    %v1887 = vld [vmem:[%s1869 + $0x88] sm:$0xff]
    %v1888 = vld [vmem:[%s1869 + $0x90] sm:$0xff]
    %v1889 = vld [vmem:[%s1869 + $0x98] sm:$0xff]
    %v1890 = vld [vmem:[%s1869 + $0xa0] sm:$0xff]
    %v1891 = vld [vmem:[%s1869 + $0xa8] sm:$0xff]
    %v1892 = vld [vmem:[%s1869 + $0xb0] sm:$0xff]
    %v1893 = vld [vmem:[%s1869 + $0xb8] sm:$0xff]
    %v1894 = vld [vmem:[%s1869 + $0xc0] sm:$0xff]
    %v1895 = vld [vmem:[%s1869 + $0xc8] sm:$0xff]
    %v1896 = vld [vmem:[%s1869 + $0xd0] sm:$0xff]
    %v1897 = vld [vmem:[%s1869 + $0xd8] sm:$0xff]
    %v1898 = vld [vmem:[%s1869 + $0xe0] sm:$0xff]
    %v1899 = vld [vmem:[%s1869 + $0xe8] sm:$0xff]
    %v1900 = vld [vmem:[%s1869 + $0xf0] sm:$0xff]
    %v1901 = vld [vmem:[%s1869 + $0xf8] sm:$0xff]
    %s1902 = scalar_lea.vmem [#allocation9], 6
    %v1903 = vld [vmem:[%s1902] ss:$8 sm:$0x3]
    %v1905 = vlaneseq
    %v1906 = vshrl.u32 %v1905, 7
    %v1907 = vsub.s32 0, %v1906
    %v1908 = vrot.slane %v1903, %v1907
    %v1909 = vlaneseq
    %v1910 = vshrl.u32 %v1909, 7
    %v1911 = vsub.s32 1, %v1910
    %v1912 = vrot.slane %v1903, %v1911
    %v1947 = vunpack.c.l.b16 %v1870
    %v1948 = vunpack.c.h.b16 %v1870
    %v1949 = vunpack.c.l.b16 %v1871
    %v1950 = vunpack.c.h.b16 %v1871
    %v1951 = vunpack.c.l.b16 %v1872
    %v1952 = vunpack.c.h.b16 %v1872
    %v1953 = vunpack.c.l.b16 %v1873
    %v1954 = vunpack.c.h.b16 %v1873
    %v1955 = vunpack.c.l.b16 %v1874
    %v1956 = vunpack.c.h.b16 %v1874
    %v1957 = vunpack.c.l.b16 %v1875
    %v1958 = vunpack.c.h.b16 %v1875
    %v1959 = vunpack.c.l.b16 %v1876
    %v1960 = vunpack.c.h.b16 %v1876
    %v1961 = vunpack.c.l.b16 %v1877
    %v1962 = vunpack.c.h.b16 %v1877
    %v1963 = vunpack.c.l.b16 %v1878
    %v1964 = vunpack.c.h.b16 %v1878
    %v1965 = vunpack.c.l.b16 %v1879
    %v1966 = vunpack.c.h.b16 %v1879
    %v1967 = vunpack.c.l.b16 %v1880
    %v1968 = vunpack.c.h.b16 %v1880
    %v1969 = vunpack.c.l.b16 %v1881
    %v1970 = vunpack.c.h.b16 %v1881
    %v1971 = vunpack.c.l.b16 %v1882
    %v1972 = vunpack.c.h.b16 %v1882
    %v1973 = vunpack.c.l.b16 %v1883
    %v1974 = vunpack.c.h.b16 %v1883
    %v1975 = vunpack.c.l.b16 %v1884
    %v1976 = vunpack.c.h.b16 %v1884
    %v1977 = vunpack.c.l.b16 %v1885
    %v1978 = vunpack.c.h.b16 %v1885
    %v1979 = vunpack.c.l.b16 %v1886
    %v1980 = vunpack.c.h.b16 %v1886
    %v1981 = vunpack.c.l.b16 %v1887
    %v1982 = vunpack.c.h.b16 %v1887
    %v1983 = vunpack.c.l.b16 %v1888
    %v1984 = vunpack.c.h.b16 %v1888
    %v1985 = vunpack.c.l.b16 %v1889
    %v1986 = vunpack.c.h.b16 %v1889
    %v1987 = vunpack.c.l.b16 %v1890
    %v1988 = vunpack.c.h.b16 %v1890
    %v1989 = vunpack.c.l.b16 %v1891
    %v1990 = vunpack.c.h.b16 %v1891
    %v1991 = vunpack.c.l.b16 %v1892
    %v1992 = vunpack.c.h.b16 %v1892
    %v1993 = vunpack.c.l.b16 %v1893
    %v1994 = vunpack.c.h.b16 %v1893
    %v1995 = vunpack.c.l.b16 %v1894
    %v1996 = vunpack.c.h.b16 %v1894
    %v1997 = vunpack.c.l.b16 %v1895
    %v1998 = vunpack.c.h.b16 %v1895
    %v1999 = vunpack.c.l.b16 %v1896
    %v2000 = vunpack.c.h.b16 %v1896
    %v2001 = vunpack.c.l.b16 %v1897
    %v2002 = vunpack.c.h.b16 %v1897
    %v2003 = vunpack.c.l.b16 %v1898
    %v2004 = vunpack.c.h.b16 %v1898
    %v2005 = vunpack.c.l.b16 %v1899
    %v2006 = vunpack.c.h.b16 %v1899
    %v2007 = vunpack.c.l.b16 %v1900
    %v2008 = vunpack.c.h.b16 %v1900
    %v2009 = vunpack.c.l.b16 %v1901
    %v2010 = vunpack.c.h.b16 %v1901
    %v2011 = vpack.c.b16 %v1949, %v1947
    %v2012 = vpack.c.b16 %v1950, %v1948
    %v2013 = vpack.c.b16 %v1953, %v1951
    %v2014 = vpack.c.b16 %v1954, %v1952
    %v2015 = vpack.c.b16 %v1957, %v1955
    %v2016 = vpack.c.b16 %v1958, %v1956
    %v2017 = vpack.c.b16 %v1961, %v1959
    %v2018 = vpack.c.b16 %v1962, %v1960
    %v2019 = vpack.c.b16 %v1965, %v1963
    %v2020 = vpack.c.b16 %v1966, %v1964
    %v2021 = vpack.c.b16 %v1969, %v1967
    %v2022 = vpack.c.b16 %v1970, %v1968
    %v2023 = vpack.c.b16 %v1973, %v1971
    %v2024 = vpack.c.b16 %v1974, %v1972
    %v2025 = vpack.c.b16 %v1977, %v1975
    %v2026 = vpack.c.b16 %v1978, %v1976
    %v2027 = vpack.c.b16 %v1981, %v1979
    %v2028 = vpack.c.b16 %v1982, %v1980
    %v2029 = vpack.c.b16 %v1985, %v1983
    %v2030 = vpack.c.b16 %v1986, %v1984
    %v2031 = vpack.c.b16 %v1989, %v1987
    %v2032 = vpack.c.b16 %v1990, %v1988
    %v2033 = vpack.c.b16 %v1993, %v1991
    %v2034 = vpack.c.b16 %v1994, %v1992
    %v2035 = vpack.c.b16 %v1997, %v1995
    %v2036 = vpack.c.b16 %v1998, %v1996
    %v2037 = vpack.c.b16 %v2001, %v1999
    %v2038 = vpack.c.b16 %v2002, %v2000
    %v2039 = vpack.c.b16 %v2005, %v2003
    %v2040 = vpack.c.b16 %v2006, %v2004
    %v2041 = vpack.c.b16 %v2009, %v2007
    %v2042 = vpack.c.b16 %v2010, %v2008
    %2075 = vmatprep.subr.bf16.mxu0 %v2012
    %2076 = vmatpush1.bf16.msra.mxu0 %v2011
    %2077 = vmatprep.subr.bf16.mxu0 %v2014
    %2078 = vmatpush1.bf16.msra.mxu0 %v2013
    %2079 = vmatprep.subr.bf16.mxu0 %v2016
    %2080 = vmatpush1.bf16.msra.mxu0 %v2015
    %2081 = vmatprep.subr.bf16.mxu0 %v2018
    %2082 = vmatpush1.bf16.msra.mxu0 %v2017
    %2083 = vmatprep.subr.bf16.mxu0 %v2020
    %2084 = vmatpush1.bf16.msra.mxu0 %v2019
    %2085 = vmatprep.subr.bf16.mxu0 %v2022
    %2086 = vmatpush1.bf16.msra.mxu0 %v2021
    %2087 = vmatprep.subr.bf16.mxu0 %v2024
    %2088 = vmatpush1.bf16.msra.mxu0 %v2023
    %2089 = vmatprep.subr.bf16.mxu0 %v2026
    %2090 = vmatpush1.bf16.msra.mxu0 %v2025
    %2091 = vmatprep.subr.bf16.mxu0 %v2028
    %2092 = vmatpush1.bf16.msra.mxu0 %v2027
    %2093 = vmatprep.subr.bf16.mxu0 %v2030
    %2094 = vmatpush1.bf16.msra.mxu0 %v2029
    %2095 = vmatprep.subr.bf16.mxu0 %v2032
    %2096 = vmatpush1.bf16.msra.mxu0 %v2031
    %2097 = vmatprep.subr.bf16.mxu0 %v2034
    %2098 = vmatpush1.bf16.msra.mxu0 %v2033
    %2099 = vmatprep.subr.bf16.mxu0 %v2036
    %2100 = vmatpush1.bf16.msra.mxu0 %v2035
    %2101 = vmatprep.subr.bf16.mxu0 %v2038
    %2102 = vmatpush1.bf16.msra.mxu0 %v2037
    %2103 = vmatprep.subr.bf16.mxu0 %v2040
    %2104 = vmatpush1.bf16.msra.mxu0 %v2039
    %2105 = vmatprep.subr.bf16.mxu0 %v2042
    %2106 = vmatpush1.bf16.msra.mxu0 %v2041
    %2107 = vmatprep.mubr.bf16.mxu0 %v1866
    %2108 = vmatmul.mubr.bf16.gmra.mrb[0].mxu0 %v1865
    %v2109 = vpop.f32.mrb[0].mxu0
    %v2110 = vadd.f32 %v1908, %v2109
    %v2111 = vpop.f32.mrb[0].mxu0
    %v2112 = vadd.f32 %v1912, %v2111
    %v2113 = vpop.f32.mrb[0].mxu0
    %v2114 = vadd.f32 %v1908, %v2113
    %v2115 = vpop.f32.mrb[0].mxu0
    %v2116 = vadd.f32 %v1912, %v2115
    %2117 = vmatprep.mubr.bf16.mxu0 %v1868
    %2118 = vmatmul.mubr.bf16.gmra.mrb[0].mxu0 %v1867
    %v2119 = vpop.f32.mrb[0].mxu0
    %v2120 = vadd.f32 %v1908, %v2119
    %v2121 = vpop.f32.mrb[0].mxu0
    %v2122 = vadd.f32 %v1912, %v2121
    %v2123 = vpop.f32.mrb[0].mxu0
    %v2124 = vadd.f32 %v1908, %v2123
    %v2125 = vpop.f32.mrb[0].mxu0
    %v2126 = vadd.f32 %v1912, %v2125
    %2127 = vdwg.mxu0
    %v2128 = vmax.f32 %v2110, 0.0
    %v2129 = vmax.f32 %v2112, 0.0
    %v2130 = vmax.f32 %v2114, 0.0
    %v2131 = vmax.f32 %v2116, 0.0
    %v2132 = vmax.f32 %v2120, 0.0
    %v2133 = vmax.f32 %v2122, 0.0
    %v2134 = vmax.f32 %v2124, 0.0
    %v2135 = vmax.f32 %v2126, 0.0
    %v2136 = vmul.f32 %v1315, 2.0
    %v2137 = vmul.f32 %v1316, 2.0
    %v2138 = vmul.f32 %v1317, 2.0
    %v2139 = vmul.f32 %v1318, 2.0
    %v2140 = vmul.f32 %v1319, 2.0
    %v2141 = vmul.f32 %v1320, 2.0
    %v2142 = vmul.f32 %v1321, 2.0
    %v2143 = vmul.f32 %v1322, 2.0
    %v2144 = vadd.f32 %v2128, %v2136
    %v2145 = vadd.f32 %v2129, %v2137
    %v2146 = vadd.f32 %v2130, %v2138
    %v2147 = vadd.f32 %v2131, %v2139
    %v2148 = vadd.f32 %v2132, %v2140
    %v2149 = vadd.f32 %v2133, %v2141
    %v2150 = vadd.f32 %v2134, %v2142
    %v2151 = vadd.f32 %v2135, %v2143
    %v2152 = vpack.c.bf16 %v2146, %v2144
    %v2153 = vpack.c.bf16 %v2147, %v2145
    %v2154 = vpack.c.bf16 %v2150, %v2148
    %v2155 = vpack.c.bf16 %v2151, %v2149
    %s2156 = scalar_lea.vmem [#allocation8], 1792
    %v2157 = vld [vmem:[%s2156] sm:$0xff]
    %v2158 = vld [vmem:[%s2156 + $0x8] sm:$0xff]
    %v2159 = vld [vmem:[%s2156 + $0x10] sm:$0xff]
    %v2160 = vld [vmem:[%s2156 + $0x18] sm:$0xff]
    %v2161 = vld [vmem:[%s2156 + $0x20] sm:$0xff]
    %v2162 = vld [vmem:[%s2156 + $0x28] sm:$0xff]
    %v2163 = vld [vmem:[%s2156 + $0x30] sm:$0xff]
    %v2164 = vld [vmem:[%s2156 + $0x38] sm:$0xff]
    %v2165 = vld [vmem:[%s2156 + $0x40] sm:$0xff]
    %v2166 = vld [vmem:[%s2156 + $0x48] sm:$0xff]
    %v2167 = vld [vmem:[%s2156 + $0x50] sm:$0xff]
    %v2168 = vld [vmem:[%s2156 + $0x58] sm:$0xff]
    %v2169 = vld [vmem:[%s2156 + $0x60] sm:$0xff]
    %v2170 = vld [vmem:[%s2156 + $0x68] sm:$0xff]
    %v2171 = vld [vmem:[%s2156 + $0x70] sm:$0xff]
    %v2172 = vld [vmem:[%s2156 + $0x78] sm:$0xff]
    %v2173 = vld [vmem:[%s2156 + $0x80] sm:$0xff]
    %v2174 = vld [vmem:[%s2156 + $0x88] sm:$0xff]
    %v2175 = vld [vmem:[%s2156 + $0x90] sm:$0xff]
    %v2176 = vld [vmem:[%s2156 + $0x98] sm:$0xff]
    %v2177 = vld [vmem:[%s2156 + $0xa0] sm:$0xff]
    %v2178 = vld [vmem:[%s2156 + $0xa8] sm:$0xff]
    %v2179 = vld [vmem:[%s2156 + $0xb0] sm:$0xff]
    %v2180 = vld [vmem:[%s2156 + $0xb8] sm:$0xff]
    %v2181 = vld [vmem:[%s2156 + $0xc0] sm:$0xff]
    %v2182 = vld [vmem:[%s2156 + $0xc8] sm:$0xff]
    %v2183 = vld [vmem:[%s2156 + $0xd0] sm:$0xff]
    %v2184 = vld [vmem:[%s2156 + $0xd8] sm:$0xff]
    %v2185 = vld [vmem:[%s2156 + $0xe0] sm:$0xff]
    %v2186 = vld [vmem:[%s2156 + $0xe8] sm:$0xff]
    %v2187 = vld [vmem:[%s2156 + $0xf0] sm:$0xff]
    %v2188 = vld [vmem:[%s2156 + $0xf8] sm:$0xff]
    %s2189 = scalar_lea.vmem [#allocation9], 7
    %v2190 = vld [vmem:[%s2189] ss:$8 sm:$0x3]
    %v2192 = vlaneseq
    %v2193 = vshrl.u32 %v2192, 7
    %v2194 = vsub.s32 0, %v2193
    %v2195 = vrot.slane %v2190, %v2194
    %v2196 = vlaneseq
    %v2197 = vshrl.u32 %v2196, 7
    %v2198 = vsub.s32 1, %v2197
    %v2199 = vrot.slane %v2190, %v2198
    %v2234 = vunpack.c.l.b16 %v2157
    %v2235 = vunpack.c.h.b16 %v2157
    %v2236 = vunpack.c.l.b16 %v2158
    %v2237 = vunpack.c.h.b16 %v2158
    %v2238 = vunpack.c.l.b16 %v2159
    %v2239 = vunpack.c.h.b16 %v2159
    %v2240 = vunpack.c.l.b16 %v2160
    %v2241 = vunpack.c.h.b16 %v2160
    %v2242 = vunpack.c.l.b16 %v2161
    %v2243 = vunpack.c.h.b16 %v2161
    %v2244 = vunpack.c.l.b16 %v2162
    %v2245 = vunpack.c.h.b16 %v2162
    %v2246 = vunpack.c.l.b16 %v2163
    %v2247 = vunpack.c.h.b16 %v2163
    %v2248 = vunpack.c.l.b16 %v2164
    %v2249 = vunpack.c.h.b16 %v2164
    %v2250 = vunpack.c.l.b16 %v2165
    %v2251 = vunpack.c.h.b16 %v2165
    %v2252 = vunpack.c.l.b16 %v2166
    %v2253 = vunpack.c.h.b16 %v2166
    %v2254 = vunpack.c.l.b16 %v2167
    %v2255 = vunpack.c.h.b16 %v2167
    %v2256 = vunpack.c.l.b16 %v2168
    %v2257 = vunpack.c.h.b16 %v2168
    %v2258 = vunpack.c.l.b16 %v2169
    %v2259 = vunpack.c.h.b16 %v2169
    %v2260 = vunpack.c.l.b16 %v2170
    %v2261 = vunpack.c.h.b16 %v2170
    %v2262 = vunpack.c.l.b16 %v2171
    %v2263 = vunpack.c.h.b16 %v2171
    %v2264 = vunpack.c.l.b16 %v2172
    %v2265 = vunpack.c.h.b16 %v2172
    %v2266 = vunpack.c.l.b16 %v2173
    %v2267 = vunpack.c.h.b16 %v2173
    %v2268 = vunpack.c.l.b16 %v2174
    %v2269 = vunpack.c.h.b16 %v2174
    %v2270 = vunpack.c.l.b16 %v2175
    %v2271 = vunpack.c.h.b16 %v2175
    %v2272 = vunpack.c.l.b16 %v2176
    %v2273 = vunpack.c.h.b16 %v2176
    %v2274 = vunpack.c.l.b16 %v2177
    %v2275 = vunpack.c.h.b16 %v2177
    %v2276 = vunpack.c.l.b16 %v2178
    %v2277 = vunpack.c.h.b16 %v2178
    %v2278 = vunpack.c.l.b16 %v2179
    %v2279 = vunpack.c.h.b16 %v2179
    %v2280 = vunpack.c.l.b16 %v2180
    %v2281 = vunpack.c.h.b16 %v2180
    %v2282 = vunpack.c.l.b16 %v2181
    %v2283 = vunpack.c.h.b16 %v2181
    %v2284 = vunpack.c.l.b16 %v2182
    %v2285 = vunpack.c.h.b16 %v2182
    %v2286 = vunpack.c.l.b16 %v2183
    %v2287 = vunpack.c.h.b16 %v2183
    %v2288 = vunpack.c.l.b16 %v2184
    %v2289 = vunpack.c.h.b16 %v2184
    %v2290 = vunpack.c.l.b16 %v2185
    %v2291 = vunpack.c.h.b16 %v2185
    %v2292 = vunpack.c.l.b16 %v2186
    %v2293 = vunpack.c.h.b16 %v2186
    %v2294 = vunpack.c.l.b16 %v2187
    %v2295 = vunpack.c.h.b16 %v2187
    %v2296 = vunpack.c.l.b16 %v2188
    %v2297 = vunpack.c.h.b16 %v2188
    %v2298 = vpack.c.b16 %v2236, %v2234
    %v2299 = vpack.c.b16 %v2237, %v2235
    %v2300 = vpack.c.b16 %v2240, %v2238
    %v2301 = vpack.c.b16 %v2241, %v2239
    %v2302 = vpack.c.b16 %v2244, %v2242
    %v2303 = vpack.c.b16 %v2245, %v2243
    %v2304 = vpack.c.b16 %v2248, %v2246
    %v2305 = vpack.c.b16 %v2249, %v2247
    %v2306 = vpack.c.b16 %v2252, %v2250
    %v2307 = vpack.c.b16 %v2253, %v2251
    %v2308 = vpack.c.b16 %v2256, %v2254
    %v2309 = vpack.c.b16 %v2257, %v2255
    %v2310 = vpack.c.b16 %v2260, %v2258
    %v2311 = vpack.c.b16 %v2261, %v2259
    %v2312 = vpack.c.b16 %v2264, %v2262
    %v2313 = vpack.c.b16 %v2265, %v2263
    %v2314 = vpack.c.b16 %v2268, %v2266
    %v2315 = vpack.c.b16 %v2269, %v2267
    %v2316 = vpack.c.b16 %v2272, %v2270
    %v2317 = vpack.c.b16 %v2273, %v2271
    %v2318 = vpack.c.b16 %v2276, %v2274
    %v2319 = vpack.c.b16 %v2277, %v2275
    %v2320 = vpack.c.b16 %v2280, %v2278
    %v2321 = vpack.c.b16 %v2281, %v2279
    %v2322 = vpack.c.b16 %v2284, %v2282
    %v2323 = vpack.c.b16 %v2285, %v2283
    %v2324 = vpack.c.b16 %v2288, %v2286
    %v2325 = vpack.c.b16 %v2289, %v2287
    %v2326 = vpack.c.b16 %v2292, %v2290
    %v2327 = vpack.c.b16 %v2293, %v2291
    %v2328 = vpack.c.b16 %v2296, %v2294
    %v2329 = vpack.c.b16 %v2297, %v2295
    %2362 = vmatprep.subr.bf16.mxu0 %v2299
    %2363 = vmatpush1.bf16.msra.mxu0 %v2298
    %2364 = vmatprep.subr.bf16.mxu0 %v2301
    %2365 = vmatpush1.bf16.msra.mxu0 %v2300
    %2366 = vmatprep.subr.bf16.mxu0 %v2303
    %2367 = vmatpush1.bf16.msra.mxu0 %v2302
    %2368 = vmatprep.subr.bf16.mxu0 %v2305
    %2369 = vmatpush1.bf16.msra.mxu0 %v2304
    %2370 = vmatprep.subr.bf16.mxu0 %v2307
    %2371 = vmatpush1.bf16.msra.mxu0 %v2306
    %2372 = vmatprep.subr.bf16.mxu0 %v2309
    %2373 = vmatpush1.bf16.msra.mxu0 %v2308
    %2374 = vmatprep.subr.bf16.mxu0 %v2311
    %2375 = vmatpush1.bf16.msra.mxu0 %v2310
    %2376 = vmatprep.subr.bf16.mxu0 %v2313
    %2377 = vmatpush1.bf16.msra.mxu0 %v2312
    %2378 = vmatprep.subr.bf16.mxu0 %v2315
    %2379 = vmatpush1.bf16.msra.mxu0 %v2314
    %2380 = vmatprep.subr.bf16.mxu0 %v2317
    %2381 = vmatpush1.bf16.msra.mxu0 %v2316
    %2382 = vmatprep.subr.bf16.mxu0 %v2319
    %2383 = vmatpush1.bf16.msra.mxu0 %v2318
    %2384 = vmatprep.subr.bf16.mxu0 %v2321
    %2385 = vmatpush1.bf16.msra.mxu0 %v2320
    %2386 = vmatprep.subr.bf16.mxu0 %v2323
    %2387 = vmatpush1.bf16.msra.mxu0 %v2322
    %2388 = vmatprep.subr.bf16.mxu0 %v2325
    %2389 = vmatpush1.bf16.msra.mxu0 %v2324
    %2390 = vmatprep.subr.bf16.mxu0 %v2327
    %2391 = vmatpush1.bf16.msra.mxu0 %v2326
    %2392 = vmatprep.subr.bf16.mxu0 %v2329
    %2393 = vmatpush1.bf16.msra.mxu0 %v2328
    %2394 = vmatprep.mubr.bf16.mxu0 %v2153
    %2395 = vmatmul.mubr.bf16.gmra.mrb[0].mxu0 %v2152
    %v2396 = vpop.f32.mrb[0].mxu0
    %v2397 = vadd.f32 %v2195, %v2396
    %v2398 = vpop.f32.mrb[0].mxu0
    %v2399 = vadd.f32 %v2199, %v2398
    %v2400 = vpop.f32.mrb[0].mxu0
    %v2401 = vadd.f32 %v2195, %v2400
    %v2402 = vpop.f32.mrb[0].mxu0
    %v2403 = vadd.f32 %v2199, %v2402
    %2404 = vmatprep.mubr.bf16.mxu0 %v2155
    %2405 = vmatmul.mubr.bf16.gmra.mrb[0].mxu0 %v2154
    %v2406 = vpop.f32.mrb[0].mxu0
    %v2407 = vadd.f32 %v2195, %v2406
    %v2408 = vpop.f32.mrb[0].mxu0
    %v2409 = vadd.f32 %v2199, %v2408
    %v2410 = vpop.f32.mrb[0].mxu0
    %v2411 = vadd.f32 %v2195, %v2410
    %v2412 = vpop.f32.mrb[0].mxu0
    %v2413 = vadd.f32 %v2199, %v2412
    %2414 = vdwg.mxu0
    %v2415 = vmax.f32 %v2397, 0.0
    %v2416 = vmax.f32 %v2399, 0.0
    %v2417 = vmax.f32 %v2401, 0.0
    %v2418 = vmax.f32 %v2403, 0.0
    %v2419 = vmax.f32 %v2407, 0.0
    %v2420 = vmax.f32 %v2409, 0.0
    %v2421 = vmax.f32 %v2411, 0.0
    %v2422 = vmax.f32 %v2413, 0.0
    %v2423 = vpack.c.bf16 %v2417, %v2415
    %v2424 = vpack.c.bf16 %v2418, %v2416
    %v2425 = vpack.c.bf16 %v2421, %v2419
    %v2426 = vpack.c.bf16 %v2422, %v2420
    %s2427 = scalar_lea.vmem [#allocation8], 2048
    %v2428 = vld [vmem:[%s2427] sm:$0xff]
    %v2429 = vld [vmem:[%s2427 + $0x8] sm:$0xff]
    %v2430 = vld [vmem:[%s2427 + $0x10] sm:$0xff]
    %v2431 = vld [vmem:[%s2427 + $0x18] sm:$0xff]
    %v2432 = vld [vmem:[%s2427 + $0x20] sm:$0xff]
    %v2433 = vld [vmem:[%s2427 + $0x28] sm:$0xff]
    %v2434 = vld [vmem:[%s2427 + $0x30] sm:$0xff]
    %v2435 = vld [vmem:[%s2427 + $0x38] sm:$0xff]
    %v2436 = vld [vmem:[%s2427 + $0x40] sm:$0xff]
    %v2437 = vld [vmem:[%s2427 + $0x48] sm:$0xff]
    %v2438 = vld [vmem:[%s2427 + $0x50] sm:$0xff]
    %v2439 = vld [vmem:[%s2427 + $0x58] sm:$0xff]
    %v2440 = vld [vmem:[%s2427 + $0x60] sm:$0xff]
    %v2441 = vld [vmem:[%s2427 + $0x68] sm:$0xff]
    %v2442 = vld [vmem:[%s2427 + $0x70] sm:$0xff]
    %v2443 = vld [vmem:[%s2427 + $0x78] sm:$0xff]
    %v2444 = vld [vmem:[%s2427 + $0x80] sm:$0xff]
    %v2445 = vld [vmem:[%s2427 + $0x88] sm:$0xff]
    %v2446 = vld [vmem:[%s2427 + $0x90] sm:$0xff]
    %v2447 = vld [vmem:[%s2427 + $0x98] sm:$0xff]
    %v2448 = vld [vmem:[%s2427 + $0xa0] sm:$0xff]
    %v2449 = vld [vmem:[%s2427 + $0xa8] sm:$0xff]
    %v2450 = vld [vmem:[%s2427 + $0xb0] sm:$0xff]
    %v2451 = vld [vmem:[%s2427 + $0xb8] sm:$0xff]
    %v2452 = vld [vmem:[%s2427 + $0xc0] sm:$0xff]
    %v2453 = vld [vmem:[%s2427 + $0xc8] sm:$0xff]
    %v2454 = vld [vmem:[%s2427 + $0xd0] sm:$0xff]
    %v2455 = vld [vmem:[%s2427 + $0xd8] sm:$0xff]
    %v2456 = vld [vmem:[%s2427 + $0xe0] sm:$0xff]
    %v2457 = vld [vmem:[%s2427 + $0xe8] sm:$0xff]
    %v2458 = vld [vmem:[%s2427 + $0xf0] sm:$0xff]
    %v2459 = vld [vmem:[%s2427 + $0xf8] sm:$0xff]
    %s2460 = scalar_lea.vmem [#allocation9], 16
    %v2461 = vld [vmem:[%s2460] ss:$8 sm:$0x3]
    %v2463 = vlaneseq
    %v2464 = vshrl.u32 %v2463, 7
    %v2465 = vsub.s32 0, %v2464
    %v2466 = vrot.slane %v2461, %v2465
    %v2467 = vlaneseq
    %v2468 = vshrl.u32 %v2467, 7
    %v2469 = vsub.s32 1, %v2468
    %v2470 = vrot.slane %v2461, %v2469
    %v2505 = vunpack.c.l.b16 %v2428
    %v2506 = vunpack.c.h.b16 %v2428
    %v2507 = vunpack.c.l.b16 %v2429
    %v2508 = vunpack.c.h.b16 %v2429
    %v2509 = vunpack.c.l.b16 %v2430
    %v2510 = vunpack.c.h.b16 %v2430
    %v2511 = vunpack.c.l.b16 %v2431
    %v2512 = vunpack.c.h.b16 %v2431
    %v2513 = vunpack.c.l.b16 %v2432
    %v2514 = vunpack.c.h.b16 %v2432
    %v2515 = vunpack.c.l.b16 %v2433
    %v2516 = vunpack.c.h.b16 %v2433
    %v2517 = vunpack.c.l.b16 %v2434
    %v2518 = vunpack.c.h.b16 %v2434
    %v2519 = vunpack.c.l.b16 %v2435
    %v2520 = vunpack.c.h.b16 %v2435
    %v2521 = vunpack.c.l.b16 %v2436
    %v2522 = vunpack.c.h.b16 %v2436
    %v2523 = vunpack.c.l.b16 %v2437
    %v2524 = vunpack.c.h.b16 %v2437
    %v2525 = vunpack.c.l.b16 %v2438
    %v2526 = vunpack.c.h.b16 %v2438
    %v2527 = vunpack.c.l.b16 %v2439
    %v2528 = vunpack.c.h.b16 %v2439
    %v2529 = vunpack.c.l.b16 %v2440
    %v2530 = vunpack.c.h.b16 %v2440
    %v2531 = vunpack.c.l.b16 %v2441
    %v2532 = vunpack.c.h.b16 %v2441
    %v2533 = vunpack.c.l.b16 %v2442
    %v2534 = vunpack.c.h.b16 %v2442
    %v2535 = vunpack.c.l.b16 %v2443
    %v2536 = vunpack.c.h.b16 %v2443
    %v2537 = vunpack.c.l.b16 %v2444
    %v2538 = vunpack.c.h.b16 %v2444
    %v2539 = vunpack.c.l.b16 %v2445
    %v2540 = vunpack.c.h.b16 %v2445
    %v2541 = vunpack.c.l.b16 %v2446
    %v2542 = vunpack.c.h.b16 %v2446
    %v2543 = vunpack.c.l.b16 %v2447
    %v2544 = vunpack.c.h.b16 %v2447
    %v2545 = vunpack.c.l.b16 %v2448
    %v2546 = vunpack.c.h.b16 %v2448
    %v2547 = vunpack.c.l.b16 %v2449
    %v2548 = vunpack.c.h.b16 %v2449
    %v2549 = vunpack.c.l.b16 %v2450
    %v2550 = vunpack.c.h.b16 %v2450
    %v2551 = vunpack.c.l.b16 %v2451
    %v2552 = vunpack.c.h.b16 %v2451
    %v2553 = vunpack.c.l.b16 %v2452
    %v2554 = vunpack.c.h.b16 %v2452
    %v2555 = vunpack.c.l.b16 %v2453
    %v2556 = vunpack.c.h.b16 %v2453
    %v2557 = vunpack.c.l.b16 %v2454
    %v2558 = vunpack.c.h.b16 %v2454
    %v2559 = vunpack.c.l.b16 %v2455
    %v2560 = vunpack.c.h.b16 %v2455
    %v2561 = vunpack.c.l.b16 %v2456
    %v2562 = vunpack.c.h.b16 %v2456
    %v2563 = vunpack.c.l.b16 %v2457
    %v2564 = vunpack.c.h.b16 %v2457
    %v2565 = vunpack.c.l.b16 %v2458
    %v2566 = vunpack.c.h.b16 %v2458
    %v2567 = vunpack.c.l.b16 %v2459
    %v2568 = vunpack.c.h.b16 %v2459
    %v2569 = vpack.c.b16 %v2507, %v2505
    %v2570 = vpack.c.b16 %v2508, %v2506
    %v2571 = vpack.c.b16 %v2511, %v2509
    %v2572 = vpack.c.b16 %v2512, %v2510
    %v2573 = vpack.c.b16 %v2515, %v2513
    %v2574 = vpack.c.b16 %v2516, %v2514
    %v2575 = vpack.c.b16 %v2519, %v2517
    %v2576 = vpack.c.b16 %v2520, %v2518
    %v2577 = vpack.c.b16 %v2523, %v2521
    %v2578 = vpack.c.b16 %v2524, %v2522
    %v2579 = vpack.c.b16 %v2527, %v2525
    %v2580 = vpack.c.b16 %v2528, %v2526
    %v2581 = vpack.c.b16 %v2531, %v2529
    %v2582 = vpack.c.b16 %v2532, %v2530
    %v2583 = vpack.c.b16 %v2535, %v2533
    %v2584 = vpack.c.b16 %v2536, %v2534
    %v2585 = vpack.c.b16 %v2539, %v2537
    %v2586 = vpack.c.b16 %v2540, %v2538
    %v2587 = vpack.c.b16 %v2543, %v2541
    %v2588 = vpack.c.b16 %v2544, %v2542
    %v2589 = vpack.c.b16 %v2547, %v2545
    %v2590 = vpack.c.b16 %v2548, %v2546
    %v2591 = vpack.c.b16 %v2551, %v2549
    %v2592 = vpack.c.b16 %v2552, %v2550
    %v2593 = vpack.c.b16 %v2555, %v2553
    %v2594 = vpack.c.b16 %v2556, %v2554
    %v2595 = vpack.c.b16 %v2559, %v2557
    %v2596 = vpack.c.b16 %v2560, %v2558
    %v2597 = vpack.c.b16 %v2563, %v2561
    %v2598 = vpack.c.b16 %v2564, %v2562
    %v2599 = vpack.c.b16 %v2567, %v2565
    %v2600 = vpack.c.b16 %v2568, %v2566
    %2633 = vmatprep.subr.bf16.mxu0 %v2570
    %2634 = vmatpush1.bf16.msra.mxu0 %v2569
    %2635 = vmatprep.subr.bf16.mxu0 %v2572
    %2636 = vmatpush1.bf16.msra.mxu0 %v2571
    %2637 = vmatprep.subr.bf16.mxu0 %v2574
    %2638 = vmatpush1.bf16.msra.mxu0 %v2573
    %2639 = vmatprep.subr.bf16.mxu0 %v2576
    %2640 = vmatpush1.bf16.msra.mxu0 %v2575
    %2641 = vmatprep.subr.bf16.mxu0 %v2578
    %2642 = vmatpush1.bf16.msra.mxu0 %v2577
    %2643 = vmatprep.subr.bf16.mxu0 %v2580
    %2644 = vmatpush1.bf16.msra.mxu0 %v2579
    %2645 = vmatprep.subr.bf16.mxu0 %v2582
    %2646 = vmatpush1.bf16.msra.mxu0 %v2581
    %2647 = vmatprep.subr.bf16.mxu0 %v2584
    %2648 = vmatpush1.bf16.msra.mxu0 %v2583
    %2649 = vmatprep.subr.bf16.mxu0 %v2586
    %2650 = vmatpush1.bf16.msra.mxu0 %v2585
    %2651 = vmatprep.subr.bf16.mxu0 %v2588
    %2652 = vmatpush1.bf16.msra.mxu0 %v2587
    %2653 = vmatprep.subr.bf16.mxu0 %v2590
    %2654 = vmatpush1.bf16.msra.mxu0 %v2589
    %2655 = vmatprep.subr.bf16.mxu0 %v2592
    %2656 = vmatpush1.bf16.msra.mxu0 %v2591
    %2657 = vmatprep.subr.bf16.mxu0 %v2594
    %2658 = vmatpush1.bf16.msra.mxu0 %v2593
    %2659 = vmatprep.subr.bf16.mxu0 %v2596
    %2660 = vmatpush1.bf16.msra.mxu0 %v2595
    %2661 = vmatprep.subr.bf16.mxu0 %v2598
    %2662 = vmatpush1.bf16.msra.mxu0 %v2597
    %2663 = vmatprep.subr.bf16.mxu0 %v2600
    %2664 = vmatpush1.bf16.msra.mxu0 %v2599
    %2665 = vmatprep.mubr.bf16.mxu0 %v2424
    %2666 = vmatmul.mubr.bf16.gmra.mrb[0].mxu0 %v2423
    %v2667 = vpop.f32.mrb[0].mxu0
    %v2668 = vadd.f32 %v2466, %v2667
    %v2669 = vpop.f32.mrb[0].mxu0
    %v2670 = vadd.f32 %v2470, %v2669
    %v2671 = vpop.f32.mrb[0].mxu0
    %v2672 = vadd.f32 %v2466, %v2671
    %v2673 = vpop.f32.mrb[0].mxu0
    %v2674 = vadd.f32 %v2470, %v2673
    %2675 = vmatprep.mubr.bf16.mxu0 %v2426
    %2676 = vmatmul.mubr.bf16.gmra.mrb[0].mxu0 %v2425
    %v2677 = vpop.f32.mrb[0].mxu0
    %v2678 = vadd.f32 %v2466, %v2677
    %v2679 = vpop.f32.mrb[0].mxu0
    %v2680 = vadd.f32 %v2470, %v2679
    %v2681 = vpop.f32.mrb[0].mxu0
    %v2682 = vadd.f32 %v2466, %v2681
    %v2683 = vpop.f32.mrb[0].mxu0
    %v2684 = vadd.f32 %v2470, %v2683
    %2685 = vdwg.mxu0
    %v2686 = vmax.f32 %v2668, 0.0
    %v2687 = vmax.f32 %v2670, 0.0
    %v2688 = vmax.f32 %v2672, 0.0
    %v2689 = vmax.f32 %v2674, 0.0
    %v2690 = vmax.f32 %v2678, 0.0
    %v2691 = vmax.f32 %v2680, 0.0
    %v2692 = vmax.f32 %v2682, 0.0
    %v2693 = vmax.f32 %v2684, 0.0
    %v2694 = vpack.c.bf16 %v2688, %v2686
    %v2695 = vpack.c.bf16 %v2689, %v2687
    %v2696 = vpack.c.bf16 %v2692, %v2690
    %v2697 = vpack.c.bf16 %v2693, %v2691
    %s2698 = scalar_lea.vmem [#allocation8], 2304
    %v2699 = vld [vmem:[%s2698] sm:$0xff]
    %v2700 = vld [vmem:[%s2698 + $0x8] sm:$0xff]
    %v2701 = vld [vmem:[%s2698 + $0x10] sm:$0xff]
    %v2702 = vld [vmem:[%s2698 + $0x18] sm:$0xff]
    %v2703 = vld [vmem:[%s2698 + $0x20] sm:$0xff]
    %v2704 = vld [vmem:[%s2698 + $0x28] sm:$0xff]
    %v2705 = vld [vmem:[%s2698 + $0x30] sm:$0xff]
    %v2706 = vld [vmem:[%s2698 + $0x38] sm:$0xff]
    %v2707 = vld [vmem:[%s2698 + $0x40] sm:$0xff]
    %v2708 = vld [vmem:[%s2698 + $0x48] sm:$0xff]
    %v2709 = vld [vmem:[%s2698 + $0x50] sm:$0xff]
    %v2710 = vld [vmem:[%s2698 + $0x58] sm:$0xff]
    %v2711 = vld [vmem:[%s2698 + $0x60] sm:$0xff]
    %v2712 = vld [vmem:[%s2698 + $0x68] sm:$0xff]
    %v2713 = vld [vmem:[%s2698 + $0x70] sm:$0xff]
    %v2714 = vld [vmem:[%s2698 + $0x78] sm:$0xff]
    %v2715 = vld [vmem:[%s2698 + $0x80] sm:$0xff]
    %v2716 = vld [vmem:[%s2698 + $0x88] sm:$0xff]
    %v2717 = vld [vmem:[%s2698 + $0x90] sm:$0xff]
    %v2718 = vld [vmem:[%s2698 + $0x98] sm:$0xff]
    %v2719 = vld [vmem:[%s2698 + $0xa0] sm:$0xff]
    %v2720 = vld [vmem:[%s2698 + $0xa8] sm:$0xff]
    %v2721 = vld [vmem:[%s2698 + $0xb0] sm:$0xff]
    %v2722 = vld [vmem:[%s2698 + $0xb8] sm:$0xff]
    %v2723 = vld [vmem:[%s2698 + $0xc0] sm:$0xff]
    %v2724 = vld [vmem:[%s2698 + $0xc8] sm:$0xff]
    %v2725 = vld [vmem:[%s2698 + $0xd0] sm:$0xff]
    %v2726 = vld [vmem:[%s2698 + $0xd8] sm:$0xff]
    %v2727 = vld [vmem:[%s2698 + $0xe0] sm:$0xff]
    %v2728 = vld [vmem:[%s2698 + $0xe8] sm:$0xff]
    %v2729 = vld [vmem:[%s2698 + $0xf0] sm:$0xff]
    %v2730 = vld [vmem:[%s2698 + $0xf8] sm:$0xff]
    %s2731 = scalar_lea.vmem [#allocation9], 17
    %v2732 = vld [vmem:[%s2731] ss:$8 sm:$0x3]
    %v2734 = vlaneseq
    %v2735 = vshrl.u32 %v2734, 7
    %v2736 = vsub.s32 0, %v2735
    %v2737 = vrot.slane %v2732, %v2736
    %v2738 = vlaneseq
    %v2739 = vshrl.u32 %v2738, 7
    %v2740 = vsub.s32 1, %v2739
    %v2741 = vrot.slane %v2732, %v2740
    %v2776 = vunpack.c.l.b16 %v2699
    %v2777 = vunpack.c.h.b16 %v2699
    %v2778 = vunpack.c.l.b16 %v2700
    %v2779 = vunpack.c.h.b16 %v2700
    %v2780 = vunpack.c.l.b16 %v2701
    %v2781 = vunpack.c.h.b16 %v2701
    %v2782 = vunpack.c.l.b16 %v2702
    %v2783 = vunpack.c.h.b16 %v2702
    %v2784 = vunpack.c.l.b16 %v2703
    %v2785 = vunpack.c.h.b16 %v2703
    %v2786 = vunpack.c.l.b16 %v2704
    %v2787 = vunpack.c.h.b16 %v2704
    %v2788 = vunpack.c.l.b16 %v2705
    %v2789 = vunpack.c.h.b16 %v2705
    %v2790 = vunpack.c.l.b16 %v2706
    %v2791 = vunpack.c.h.b16 %v2706
    %v2792 = vunpack.c.l.b16 %v2707
    %v2793 = vunpack.c.h.b16 %v2707
    %v2794 = vunpack.c.l.b16 %v2708
    %v2795 = vunpack.c.h.b16 %v2708
    %v2796 = vunpack.c.l.b16 %v2709
    %v2797 = vunpack.c.h.b16 %v2709
    %v2798 = vunpack.c.l.b16 %v2710
    %v2799 = vunpack.c.h.b16 %v2710
    %v2800 = vunpack.c.l.b16 %v2711
    %v2801 = vunpack.c.h.b16 %v2711
    %v2802 = vunpack.c.l.b16 %v2712
    %v2803 = vunpack.c.h.b16 %v2712
    %v2804 = vunpack.c.l.b16 %v2713
    %v2805 = vunpack.c.h.b16 %v2713
    %v2806 = vunpack.c.l.b16 %v2714
    %v2807 = vunpack.c.h.b16 %v2714
    %v2808 = vunpack.c.l.b16 %v2715
    %v2809 = vunpack.c.h.b16 %v2715
    %v2810 = vunpack.c.l.b16 %v2716
    %v2811 = vunpack.c.h.b16 %v2716
    %v2812 = vunpack.c.l.b16 %v2717
    %v2813 = vunpack.c.h.b16 %v2717
    %v2814 = vunpack.c.l.b16 %v2718
    %v2815 = vunpack.c.h.b16 %v2718
    %v2816 = vunpack.c.l.b16 %v2719
    %v2817 = vunpack.c.h.b16 %v2719
    %v2818 = vunpack.c.l.b16 %v2720
    %v2819 = vunpack.c.h.b16 %v2720
    %v2820 = vunpack.c.l.b16 %v2721
    %v2821 = vunpack.c.h.b16 %v2721
    %v2822 = vunpack.c.l.b16 %v2722
    %v2823 = vunpack.c.h.b16 %v2722
    %v2824 = vunpack.c.l.b16 %v2723
    %v2825 = vunpack.c.h.b16 %v2723
    %v2826 = vunpack.c.l.b16 %v2724
    %v2827 = vunpack.c.h.b16 %v2724
    %v2828 = vunpack.c.l.b16 %v2725
    %v2829 = vunpack.c.h.b16 %v2725
    %v2830 = vunpack.c.l.b16 %v2726
    %v2831 = vunpack.c.h.b16 %v2726
    %v2832 = vunpack.c.l.b16 %v2727
    %v2833 = vunpack.c.h.b16 %v2727
    %v2834 = vunpack.c.l.b16 %v2728
    %v2835 = vunpack.c.h.b16 %v2728
    %v2836 = vunpack.c.l.b16 %v2729
    %v2837 = vunpack.c.h.b16 %v2729
    %v2838 = vunpack.c.l.b16 %v2730
    %v2839 = vunpack.c.h.b16 %v2730
    %v2840 = vpack.c.b16 %v2778, %v2776
    %v2841 = vpack.c.b16 %v2779, %v2777
    %v2842 = vpack.c.b16 %v2782, %v2780
    %v2843 = vpack.c.b16 %v2783, %v2781
    %v2844 = vpack.c.b16 %v2786, %v2784
    %v2845 = vpack.c.b16 %v2787, %v2785
    %v2846 = vpack.c.b16 %v2790, %v2788
    %v2847 = vpack.c.b16 %v2791, %v2789
    %v2848 = vpack.c.b16 %v2794, %v2792
    %v2849 = vpack.c.b16 %v2795, %v2793
    %v2850 = vpack.c.b16 %v2798, %v2796
    %v2851 = vpack.c.b16 %v2799, %v2797
    %v2852 = vpack.c.b16 %v2802, %v2800
    %v2853 = vpack.c.b16 %v2803, %v2801
    %v2854 = vpack.c.b16 %v2806, %v2804
    %v2855 = vpack.c.b16 %v2807, %v2805
    %v2856 = vpack.c.b16 %v2810, %v2808
    %v2857 = vpack.c.b16 %v2811, %v2809
    %v2858 = vpack.c.b16 %v2814, %v2812
    %v2859 = vpack.c.b16 %v2815, %v2813
    %v2860 = vpack.c.b16 %v2818, %v2816
    %v2861 = vpack.c.b16 %v2819, %v2817
    %v2862 = vpack.c.b16 %v2822, %v2820
    %v2863 = vpack.c.b16 %v2823, %v2821
    %v2864 = vpack.c.b16 %v2826, %v2824
    %v2865 = vpack.c.b16 %v2827, %v2825
    %v2866 = vpack.c.b16 %v2830, %v2828
    %v2867 = vpack.c.b16 %v2831, %v2829
    %v2868 = vpack.c.b16 %v2834, %v2832
    %v2869 = vpack.c.b16 %v2835, %v2833
    %v2870 = vpack.c.b16 %v2838, %v2836
    %v2871 = vpack.c.b16 %v2839, %v2837
    %2904 = vmatprep.subr.bf16.mxu0 %v2841
    %2905 = vmatpush1.bf16.msra.mxu0 %v2840
    %2906 = vmatprep.subr.bf16.mxu0 %v2843
    %2907 = vmatpush1.bf16.msra.mxu0 %v2842
    %2908 = vmatprep.subr.bf16.mxu0 %v2845
    %2909 = vmatpush1.bf16.msra.mxu0 %v2844
    %2910 = vmatprep.subr.bf16.mxu0 %v2847
    %2911 = vmatpush1.bf16.msra.mxu0 %v2846
    %2912 = vmatprep.subr.bf16.mxu0 %v2849
    %2913 = vmatpush1.bf16.msra.mxu0 %v2848
    %2914 = vmatprep.subr.bf16.mxu0 %v2851
    %2915 = vmatpush1.bf16.msra.mxu0 %v2850
    %2916 = vmatprep.subr.bf16.mxu0 %v2853
    %2917 = vmatpush1.bf16.msra.mxu0 %v2852
    %2918 = vmatprep.subr.bf16.mxu0 %v2855
    %2919 = vmatpush1.bf16.msra.mxu0 %v2854
    %2920 = vmatprep.subr.bf16.mxu0 %v2857
    %2921 = vmatpush1.bf16.msra.mxu0 %v2856
    %2922 = vmatprep.subr.bf16.mxu0 %v2859
    %2923 = vmatpush1.bf16.msra.mxu0 %v2858
    %2924 = vmatprep.subr.bf16.mxu0 %v2861
    %2925 = vmatpush1.bf16.msra.mxu0 %v2860
    %2926 = vmatprep.subr.bf16.mxu0 %v2863
    %2927 = vmatpush1.bf16.msra.mxu0 %v2862
    %2928 = vmatprep.subr.bf16.mxu0 %v2865
    %2929 = vmatpush1.bf16.msra.mxu0 %v2864
    %2930 = vmatprep.subr.bf16.mxu0 %v2867
    %2931 = vmatpush1.bf16.msra.mxu0 %v2866
    %2932 = vmatprep.subr.bf16.mxu0 %v2869
    %2933 = vmatpush1.bf16.msra.mxu0 %v2868
    %2934 = vmatprep.subr.bf16.mxu0 %v2871
    %2935 = vmatpush1.bf16.msra.mxu0 %v2870
    %2936 = vmatprep.mubr.bf16.mxu0 %v2695
    %2937 = vmatmul.mubr.bf16.gmra.mrb[0].mxu0 %v2694
    %v2938 = vpop.f32.mrb[0].mxu0
    %v2939 = vadd.f32 %v2737, %v2938
    %v2940 = vpop.f32.mrb[0].mxu0
    %v2941 = vadd.f32 %v2741, %v2940
    %v2942 = vpop.f32.mrb[0].mxu0
    %v2943 = vadd.f32 %v2737, %v2942
    %v2944 = vpop.f32.mrb[0].mxu0
    %v2945 = vadd.f32 %v2741, %v2944
    %2946 = vmatprep.mubr.bf16.mxu0 %v2697
    %2947 = vmatmul.mubr.bf16.gmra.mrb[0].mxu0 %v2696
    %v2948 = vpop.f32.mrb[0].mxu0
    %v2949 = vadd.f32 %v2737, %v2948
    %v2950 = vpop.f32.mrb[0].mxu0
    %v2951 = vadd.f32 %v2741, %v2950
    %v2952 = vpop.f32.mrb[0].mxu0
    %v2953 = vadd.f32 %v2737, %v2952
    %v2954 = vpop.f32.mrb[0].mxu0
    %v2955 = vadd.f32 %v2741, %v2954
    %2956 = vdwg.mxu0
    %v2957 = vmax.f32 %v2939, 0.0
    %v2958 = vmax.f32 %v2941, 0.0
    %v2959 = vmax.f32 %v2943, 0.0
    %v2960 = vmax.f32 %v2945, 0.0
    %v2961 = vmax.f32 %v2949, 0.0
    %v2962 = vmax.f32 %v2951, 0.0
    %v2963 = vmax.f32 %v2953, 0.0
    %v2964 = vmax.f32 %v2955, 0.0
    %v2965 = vpack.c.bf16 %v2959, %v2957
    %v2966 = vpack.c.bf16 %v2960, %v2958
    %v2967 = vpack.c.bf16 %v2963, %v2961
    %v2968 = vpack.c.bf16 %v2964, %v2962
    %s2969 = scalar_lea.vmem [#allocation8], 2560
    %v2970 = vld [vmem:[%s2969] sm:$0xff]
    %v2971 = vld [vmem:[%s2969 + $0x8] sm:$0xff]
    %v2972 = vld [vmem:[%s2969 + $0x10] sm:$0xff]
    %v2973 = vld [vmem:[%s2969 + $0x18] sm:$0xff]
    %v2974 = vld [vmem:[%s2969 + $0x20] sm:$0xff]
    %v2975 = vld [vmem:[%s2969 + $0x28] sm:$0xff]
    %v2976 = vld [vmem:[%s2969 + $0x30] sm:$0xff]
    %v2977 = vld [vmem:[%s2969 + $0x38] sm:$0xff]
    %v2978 = vld [vmem:[%s2969 + $0x40] sm:$0xff]
    %v2979 = vld [vmem:[%s2969 + $0x48] sm:$0xff]
    %v2980 = vld [vmem:[%s2969 + $0x50] sm:$0xff]
    %v2981 = vld [vmem:[%s2969 + $0x58] sm:$0xff]
    %v2982 = vld [vmem:[%s2969 + $0x60] sm:$0xff]
    %v2983 = vld [vmem:[%s2969 + $0x68] sm:$0xff]
    %v2984 = vld [vmem:[%s2969 + $0x70] sm:$0xff]
    %v2985 = vld [vmem:[%s2969 + $0x78] sm:$0xff]
    %v2986 = vld [vmem:[%s2969 + $0x80] sm:$0xff]
    %v2987 = vld [vmem:[%s2969 + $0x88] sm:$0xff]
    %v2988 = vld [vmem:[%s2969 + $0x90] sm:$0xff]
    %v2989 = vld [vmem:[%s2969 + $0x98] sm:$0xff]
    %v2990 = vld [vmem:[%s2969 + $0xa0] sm:$0xff]
    %v2991 = vld [vmem:[%s2969 + $0xa8] sm:$0xff]
    %v2992 = vld [vmem:[%s2969 + $0xb0] sm:$0xff]
    %v2993 = vld [vmem:[%s2969 + $0xb8] sm:$0xff]
    %v2994 = vld [vmem:[%s2969 + $0xc0] sm:$0xff]
    %v2995 = vld [vmem:[%s2969 + $0xc8] sm:$0xff]
    %v2996 = vld [vmem:[%s2969 + $0xd0] sm:$0xff]
    %v2997 = vld [vmem:[%s2969 + $0xd8] sm:$0xff]
    %v2998 = vld [vmem:[%s2969 + $0xe0] sm:$0xff]
    %v2999 = vld [vmem:[%s2969 + $0xe8] sm:$0xff]
    %v3000 = vld [vmem:[%s2969 + $0xf0] sm:$0xff]
    %v3001 = vld [vmem:[%s2969 + $0xf8] sm:$0xff]
    %s3002 = scalar_lea.vmem [#allocation9], 18
    %v3003 = vld [vmem:[%s3002] ss:$8 sm:$0x3]
    %v3005 = vlaneseq
    %v3006 = vshrl.u32 %v3005, 7
    %v3007 = vsub.s32 0, %v3006
    %v3008 = vrot.slane %v3003, %v3007
    %v3009 = vlaneseq
    %v3010 = vshrl.u32 %v3009, 7
    %v3011 = vsub.s32 1, %v3010
    %v3012 = vrot.slane %v3003, %v3011
    %v3047 = vunpack.c.l.b16 %v2970
    %v3048 = vunpack.c.h.b16 %v2970
    %v3049 = vunpack.c.l.b16 %v2971
    %v3050 = vunpack.c.h.b16 %v2971
    %v3051 = vunpack.c.l.b16 %v2972
    %v3052 = vunpack.c.h.b16 %v2972
    %v3053 = vunpack.c.l.b16 %v2973
    %v3054 = vunpack.c.h.b16 %v2973
    %v3055 = vunpack.c.l.b16 %v2974
    %v3056 = vunpack.c.h.b16 %v2974
    %v3057 = vunpack.c.l.b16 %v2975
    %v3058 = vunpack.c.h.b16 %v2975
    %v3059 = vunpack.c.l.b16 %v2976
    %v3060 = vunpack.c.h.b16 %v2976
    %v3061 = vunpack.c.l.b16 %v2977
    %v3062 = vunpack.c.h.b16 %v2977
    %v3063 = vunpack.c.l.b16 %v2978
    %v3064 = vunpack.c.h.b16 %v2978
    %v3065 = vunpack.c.l.b16 %v2979
    %v3066 = vunpack.c.h.b16 %v2979
    %v3067 = vunpack.c.l.b16 %v2980
    %v3068 = vunpack.c.h.b16 %v2980
    %v3069 = vunpack.c.l.b16 %v2981
    %v3070 = vunpack.c.h.b16 %v2981
    %v3071 = vunpack.c.l.b16 %v2982
    %v3072 = vunpack.c.h.b16 %v2982
    %v3073 = vunpack.c.l.b16 %v2983
    %v3074 = vunpack.c.h.b16 %v2983
    %v3075 = vunpack.c.l.b16 %v2984
    %v3076 = vunpack.c.h.b16 %v2984
    %v3077 = vunpack.c.l.b16 %v2985
    %v3078 = vunpack.c.h.b16 %v2985
    %v3079 = vunpack.c.l.b16 %v2986
    %v3080 = vunpack.c.h.b16 %v2986
    %v3081 = vunpack.c.l.b16 %v2987
    %v3082 = vunpack.c.h.b16 %v2987
    %v3083 = vunpack.c.l.b16 %v2988
    %v3084 = vunpack.c.h.b16 %v2988
    %v3085 = vunpack.c.l.b16 %v2989
    %v3086 = vunpack.c.h.b16 %v2989
    %v3087 = vunpack.c.l.b16 %v2990
    %v3088 = vunpack.c.h.b16 %v2990
    %v3089 = vunpack.c.l.b16 %v2991
    %v3090 = vunpack.c.h.b16 %v2991
    %v3091 = vunpack.c.l.b16 %v2992
    %v3092 = vunpack.c.h.b16 %v2992
    %v3093 = vunpack.c.l.b16 %v2993
    %v3094 = vunpack.c.h.b16 %v2993
    %v3095 = vunpack.c.l.b16 %v2994
    %v3096 = vunpack.c.h.b16 %v2994
    %v3097 = vunpack.c.l.b16 %v2995
    %v3098 = vunpack.c.h.b16 %v2995
    %v3099 = vunpack.c.l.b16 %v2996
    %v3100 = vunpack.c.h.b16 %v2996
    %v3101 = vunpack.c.l.b16 %v2997
    %v3102 = vunpack.c.h.b16 %v2997
    %v3103 = vunpack.c.l.b16 %v2998
    %v3104 = vunpack.c.h.b16 %v2998
    %v3105 = vunpack.c.l.b16 %v2999
    %v3106 = vunpack.c.h.b16 %v2999
    %v3107 = vunpack.c.l.b16 %v3000
    %v3108 = vunpack.c.h.b16 %v3000
    %v3109 = vunpack.c.l.b16 %v3001
    %v3110 = vunpack.c.h.b16 %v3001
    %v3111 = vpack.c.b16 %v3049, %v3047
    %v3112 = vpack.c.b16 %v3050, %v3048
    %v3113 = vpack.c.b16 %v3053, %v3051
    %v3114 = vpack.c.b16 %v3054, %v3052
    %v3115 = vpack.c.b16 %v3057, %v3055
    %v3116 = vpack.c.b16 %v3058, %v3056
    %v3117 = vpack.c.b16 %v3061, %v3059
    %v3118 = vpack.c.b16 %v3062, %v3060
    %v3119 = vpack.c.b16 %v3065, %v3063
    %v3120 = vpack.c.b16 %v3066, %v3064
    %v3121 = vpack.c.b16 %v3069, %v3067
    %v3122 = vpack.c.b16 %v3070, %v3068
    %v3123 = vpack.c.b16 %v3073, %v3071
    %v3124 = vpack.c.b16 %v3074, %v3072
    %v3125 = vpack.c.b16 %v3077, %v3075
    %v3126 = vpack.c.b16 %v3078, %v3076
    %v3127 = vpack.c.b16 %v3081, %v3079
    %v3128 = vpack.c.b16 %v3082, %v3080
    %v3129 = vpack.c.b16 %v3085, %v3083
    %v3130 = vpack.c.b16 %v3086, %v3084
    %v3131 = vpack.c.b16 %v3089, %v3087
    %v3132 = vpack.c.b16 %v3090, %v3088
    %v3133 = vpack.c.b16 %v3093, %v3091
    %v3134 = vpack.c.b16 %v3094, %v3092
    %v3135 = vpack.c.b16 %v3097, %v3095
    %v3136 = vpack.c.b16 %v3098, %v3096
    %v3137 = vpack.c.b16 %v3101, %v3099
    %v3138 = vpack.c.b16 %v3102, %v3100
    %v3139 = vpack.c.b16 %v3105, %v3103
    %v3140 = vpack.c.b16 %v3106, %v3104
    %v3141 = vpack.c.b16 %v3109, %v3107
    %v3142 = vpack.c.b16 %v3110, %v3108
    %3175 = vmatprep.subr.bf16.mxu0 %v3112
    %3176 = vmatpush1.bf16.msra.mxu0 %v3111
    %3177 = vmatprep.subr.bf16.mxu0 %v3114
    %3178 = vmatpush1.bf16.msra.mxu0 %v3113
    %3179 = vmatprep.subr.bf16.mxu0 %v3116
    %3180 = vmatpush1.bf16.msra.mxu0 %v3115
    %3181 = vmatprep.subr.bf16.mxu0 %v3118
    %3182 = vmatpush1.bf16.msra.mxu0 %v3117
    %3183 = vmatprep.subr.bf16.mxu0 %v3120
    %3184 = vmatpush1.bf16.msra.mxu0 %v3119
    %3185 = vmatprep.subr.bf16.mxu0 %v3122
    %3186 = vmatpush1.bf16.msra.mxu0 %v3121
    %3187 = vmatprep.subr.bf16.mxu0 %v3124
    %3188 = vmatpush1.bf16.msra.mxu0 %v3123
    %3189 = vmatprep.subr.bf16.mxu0 %v3126
    %3190 = vmatpush1.bf16.msra.mxu0 %v3125
    %3191 = vmatprep.subr.bf16.mxu0 %v3128
    %3192 = vmatpush1.bf16.msra.mxu0 %v3127
    %3193 = vmatprep.subr.bf16.mxu0 %v3130
    %3194 = vmatpush1.bf16.msra.mxu0 %v3129
    %3195 = vmatprep.subr.bf16.mxu0 %v3132
    %3196 = vmatpush1.bf16.msra.mxu0 %v3131
    %3197 = vmatprep.subr.bf16.mxu0 %v3134
    %3198 = vmatpush1.bf16.msra.mxu0 %v3133
    %3199 = vmatprep.subr.bf16.mxu0 %v3136
    %3200 = vmatpush1.bf16.msra.mxu0 %v3135
    %3201 = vmatprep.subr.bf16.mxu0 %v3138
    %3202 = vmatpush1.bf16.msra.mxu0 %v3137
    %3203 = vmatprep.subr.bf16.mxu0 %v3140
    %3204 = vmatpush1.bf16.msra.mxu0 %v3139
    %3205 = vmatprep.subr.bf16.mxu0 %v3142
    %3206 = vmatpush1.bf16.msra.mxu0 %v3141
    %3207 = vmatprep.mubr.bf16.mxu0 %v2966
    %3208 = vmatmul.mubr.bf16.gmra.mrb[0].mxu0 %v2965
    %v3209 = vpop.f32.mrb[0].mxu0
    %v3210 = vadd.f32 %v3008, %v3209
    %v3211 = vpop.f32.mrb[0].mxu0
    %v3212 = vadd.f32 %v3012, %v3211
    %v3213 = vpop.f32.mrb[0].mxu0
    %v3214 = vadd.f32 %v3008, %v3213
    %v3215 = vpop.f32.mrb[0].mxu0
    %v3216 = vadd.f32 %v3012, %v3215
    %3217 = vmatprep.mubr.bf16.mxu0 %v2968
    %3218 = vmatmul.mubr.bf16.gmra.mrb[0].mxu0 %v2967
    %v3219 = vpop.f32.mrb[0].mxu0
    %v3220 = vadd.f32 %v3008, %v3219
    %v3221 = vpop.f32.mrb[0].mxu0
    %v3222 = vadd.f32 %v3012, %v3221
    %v3223 = vpop.f32.mrb[0].mxu0
    %v3224 = vadd.f32 %v3008, %v3223
    %v3225 = vpop.f32.mrb[0].mxu0
    %v3226 = vadd.f32 %v3012, %v3225
    %3227 = vdwg.mxu0
    %v3228 = vmax.f32 %v3210, 0.0
    %v3229 = vmax.f32 %v3212, 0.0
    %v3230 = vmax.f32 %v3214, 0.0
    %v3231 = vmax.f32 %v3216, 0.0
    %v3232 = vmax.f32 %v3220, 0.0
    %v3233 = vmax.f32 %v3222, 0.0
    %v3234 = vmax.f32 %v3224, 0.0
    %v3235 = vmax.f32 %v3226, 0.0
    %v3236 = vmul.f32 %v2415, 2.0
    %v3237 = vmul.f32 %v2416, 2.0
    %v3238 = vmul.f32 %v2417, 2.0
    %v3239 = vmul.f32 %v2418, 2.0
    %v3240 = vmul.f32 %v2419, 2.0
    %v3241 = vmul.f32 %v2420, 2.0
    %v3242 = vmul.f32 %v2421, 2.0
    %v3243 = vmul.f32 %v2422, 2.0
    %v3244 = vadd.f32 %v3228, %v3236
    %v3245 = vadd.f32 %v3229, %v3237
    %v3246 = vadd.f32 %v3230, %v3238
    %v3247 = vadd.f32 %v3231, %v3239
    %v3248 = vadd.f32 %v3232, %v3240
    %v3249 = vadd.f32 %v3233, %v3241
    %v3250 = vadd.f32 %v3234, %v3242
    %v3251 = vadd.f32 %v3235, %v3243
    %v3252 = vpack.c.bf16 %v3246, %v3244
    %v3253 = vpack.c.bf16 %v3247, %v3245
    %v3254 = vpack.c.bf16 %v3250, %v3248
    %v3255 = vpack.c.bf16 %v3251, %v3249
    %s3256 = scalar_lea.vmem [#allocation8], 2816
    %v3257 = vld [vmem:[%s3256] sm:$0xff]
    %v3258 = vld [vmem:[%s3256 + $0x8] sm:$0xff]
    %v3259 = vld [vmem:[%s3256 + $0x10] sm:$0xff]
    %v3260 = vld [vmem:[%s3256 + $0x18] sm:$0xff]
    %v3261 = vld [vmem:[%s3256 + $0x20] sm:$0xff]
    %v3262 = vld [vmem:[%s3256 + $0x28] sm:$0xff]
    %v3263 = vld [vmem:[%s3256 + $0x30] sm:$0xff]
    %v3264 = vld [vmem:[%s3256 + $0x38] sm:$0xff]
    %v3265 = vld [vmem:[%s3256 + $0x40] sm:$0xff]
    %v3266 = vld [vmem:[%s3256 + $0x48] sm:$0xff]
    %v3267 = vld [vmem:[%s3256 + $0x50] sm:$0xff]
    %v3268 = vld [vmem:[%s3256 + $0x58] sm:$0xff]
    %v3269 = vld [vmem:[%s3256 + $0x60] sm:$0xff]
    %v3270 = vld [vmem:[%s3256 + $0x68] sm:$0xff]
    %v3271 = vld [vmem:[%s3256 + $0x70] sm:$0xff]
    %v3272 = vld [vmem:[%s3256 + $0x78] sm:$0xff]
    %v3273 = vld [vmem:[%s3256 + $0x80] sm:$0xff]
    %v3274 = vld [vmem:[%s3256 + $0x88] sm:$0xff]
    %v3275 = vld [vmem:[%s3256 + $0x90] sm:$0xff]
    %v3276 = vld [vmem:[%s3256 + $0x98] sm:$0xff]
    %v3277 = vld [vmem:[%s3256 + $0xa0] sm:$0xff]
    %v3278 = vld [vmem:[%s3256 + $0xa8] sm:$0xff]
    %v3279 = vld [vmem:[%s3256 + $0xb0] sm:$0xff]
    %v3280 = vld [vmem:[%s3256 + $0xb8] sm:$0xff]
    %v3281 = vld [vmem:[%s3256 + $0xc0] sm:$0xff]
    %v3282 = vld [vmem:[%s3256 + $0xc8] sm:$0xff]
    %v3283 = vld [vmem:[%s3256 + $0xd0] sm:$0xff]
    %v3284 = vld [vmem:[%s3256 + $0xd8] sm:$0xff]
    %v3285 = vld [vmem:[%s3256 + $0xe0] sm:$0xff]
    %v3286 = vld [vmem:[%s3256 + $0xe8] sm:$0xff]
    %v3287 = vld [vmem:[%s3256 + $0xf0] sm:$0xff]
    %v3288 = vld [vmem:[%s3256 + $0xf8] sm:$0xff]
    %s3289 = scalar_lea.vmem [#allocation9], 19
    %v3290 = vld [vmem:[%s3289] ss:$8 sm:$0x3]
    %v3292 = vlaneseq
    %v3293 = vshrl.u32 %v3292, 7
    %v3294 = vsub.s32 0, %v3293
    %v3295 = vrot.slane %v3290, %v3294
    %v3296 = vlaneseq
    %v3297 = vshrl.u32 %v3296, 7
    %v3298 = vsub.s32 1, %v3297
    %v3299 = vrot.slane %v3290, %v3298
    %v3334 = vunpack.c.l.b16 %v3257
    %v3335 = vunpack.c.h.b16 %v3257
    %v3336 = vunpack.c.l.b16 %v3258
    %v3337 = vunpack.c.h.b16 %v3258
    %v3338 = vunpack.c.l.b16 %v3259
    %v3339 = vunpack.c.h.b16 %v3259
    %v3340 = vunpack.c.l.b16 %v3260
    %v3341 = vunpack.c.h.b16 %v3260
    %v3342 = vunpack.c.l.b16 %v3261
    %v3343 = vunpack.c.h.b16 %v3261
    %v3344 = vunpack.c.l.b16 %v3262
    %v3345 = vunpack.c.h.b16 %v3262
    %v3346 = vunpack.c.l.b16 %v3263
    %v3347 = vunpack.c.h.b16 %v3263
    %v3348 = vunpack.c.l.b16 %v3264
    %v3349 = vunpack.c.h.b16 %v3264
    %v3350 = vunpack.c.l.b16 %v3265
    %v3351 = vunpack.c.h.b16 %v3265
    %v3352 = vunpack.c.l.b16 %v3266
    %v3353 = vunpack.c.h.b16 %v3266
    %v3354 = vunpack.c.l.b16 %v3267
    %v3355 = vunpack.c.h.b16 %v3267
    %v3356 = vunpack.c.l.b16 %v3268
    %v3357 = vunpack.c.h.b16 %v3268
    %v3358 = vunpack.c.l.b16 %v3269
    %v3359 = vunpack.c.h.b16 %v3269
    %v3360 = vunpack.c.l.b16 %v3270
    %v3361 = vunpack.c.h.b16 %v3270
    %v3362 = vunpack.c.l.b16 %v3271
    %v3363 = vunpack.c.h.b16 %v3271
    %v3364 = vunpack.c.l.b16 %v3272
    %v3365 = vunpack.c.h.b16 %v3272
    %v3366 = vunpack.c.l.b16 %v3273
    %v3367 = vunpack.c.h.b16 %v3273
    %v3368 = vunpack.c.l.b16 %v3274
    %v3369 = vunpack.c.h.b16 %v3274
    %v3370 = vunpack.c.l.b16 %v3275
    %v3371 = vunpack.c.h.b16 %v3275
    %v3372 = vunpack.c.l.b16 %v3276
    %v3373 = vunpack.c.h.b16 %v3276
    %v3374 = vunpack.c.l.b16 %v3277
    %v3375 = vunpack.c.h.b16 %v3277
    %v3376 = vunpack.c.l.b16 %v3278
    %v3377 = vunpack.c.h.b16 %v3278
    %v3378 = vunpack.c.l.b16 %v3279
    %v3379 = vunpack.c.h.b16 %v3279
    %v3380 = vunpack.c.l.b16 %v3280
    %v3381 = vunpack.c.h.b16 %v3280
    %v3382 = vunpack.c.l.b16 %v3281
    %v3383 = vunpack.c.h.b16 %v3281
    %v3384 = vunpack.c.l.b16 %v3282
    %v3385 = vunpack.c.h.b16 %v3282
    %v3386 = vunpack.c.l.b16 %v3283
    %v3387 = vunpack.c.h.b16 %v3283
    %v3388 = vunpack.c.l.b16 %v3284
    %v3389 = vunpack.c.h.b16 %v3284
    %v3390 = vunpack.c.l.b16 %v3285
    %v3391 = vunpack.c.h.b16 %v3285
    %v3392 = vunpack.c.l.b16 %v3286
    %v3393 = vunpack.c.h.b16 %v3286
    %v3394 = vunpack.c.l.b16 %v3287
    %v3395 = vunpack.c.h.b16 %v3287
    %v3396 = vunpack.c.l.b16 %v3288
    %v3397 = vunpack.c.h.b16 %v3288
    %v3398 = vpack.c.b16 %v3336, %v3334
    %v3399 = vpack.c.b16 %v3337, %v3335
    %v3400 = vpack.c.b16 %v3340, %v3338
    %v3401 = vpack.c.b16 %v3341, %v3339
    %v3402 = vpack.c.b16 %v3344, %v3342
    %v3403 = vpack.c.b16 %v3345, %v3343
    %v3404 = vpack.c.b16 %v3348, %v3346
    %v3405 = vpack.c.b16 %v3349, %v3347
    %v3406 = vpack.c.b16 %v3352, %v3350
    %v3407 = vpack.c.b16 %v3353, %v3351
    %v3408 = vpack.c.b16 %v3356, %v3354
    %v3409 = vpack.c.b16 %v3357, %v3355
    %v3410 = vpack.c.b16 %v3360, %v3358
    %v3411 = vpack.c.b16 %v3361, %v3359
    %v3412 = vpack.c.b16 %v3364, %v3362
    %v3413 = vpack.c.b16 %v3365, %v3363
    %v3414 = vpack.c.b16 %v3368, %v3366
    %v3415 = vpack.c.b16 %v3369, %v3367
    %v3416 = vpack.c.b16 %v3372, %v3370
    %v3417 = vpack.c.b16 %v3373, %v3371
    %v3418 = vpack.c.b16 %v3376, %v3374
    %v3419 = vpack.c.b16 %v3377, %v3375
    %v3420 = vpack.c.b16 %v3380, %v3378
    %v3421 = vpack.c.b16 %v3381, %v3379
    %v3422 = vpack.c.b16 %v3384, %v3382
    %v3423 = vpack.c.b16 %v3385, %v3383
    %v3424 = vpack.c.b16 %v3388, %v3386
    %v3425 = vpack.c.b16 %v3389, %v3387
    %v3426 = vpack.c.b16 %v3392, %v3390
    %v3427 = vpack.c.b16 %v3393, %v3391
    %v3428 = vpack.c.b16 %v3396, %v3394
    %v3429 = vpack.c.b16 %v3397, %v3395
    %3462 = vmatprep.subr.bf16.mxu0 %v3399
    %3463 = vmatpush1.bf16.msra.mxu0 %v3398
    %3464 = vmatprep.subr.bf16.mxu0 %v3401
    %3465 = vmatpush1.bf16.msra.mxu0 %v3400
    %3466 = vmatprep.subr.bf16.mxu0 %v3403
    %3467 = vmatpush1.bf16.msra.mxu0 %v3402
    %3468 = vmatprep.subr.bf16.mxu0 %v3405
    %3469 = vmatpush1.bf16.msra.mxu0 %v3404
    %3470 = vmatprep.subr.bf16.mxu0 %v3407
    %3471 = vmatpush1.bf16.msra.mxu0 %v3406
    %3472 = vmatprep.subr.bf16.mxu0 %v3409
    %3473 = vmatpush1.bf16.msra.mxu0 %v3408
    %3474 = vmatprep.subr.bf16.mxu0 %v3411
    %3475 = vmatpush1.bf16.msra.mxu0 %v3410
    %3476 = vmatprep.subr.bf16.mxu0 %v3413
    %3477 = vmatpush1.bf16.msra.mxu0 %v3412
    %3478 = vmatprep.subr.bf16.mxu0 %v3415
    %3479 = vmatpush1.bf16.msra.mxu0 %v3414
    %3480 = vmatprep.subr.bf16.mxu0 %v3417
    %3481 = vmatpush1.bf16.msra.mxu0 %v3416
    %3482 = vmatprep.subr.bf16.mxu0 %v3419
    %3483 = vmatpush1.bf16.msra.mxu0 %v3418
    %3484 = vmatprep.subr.bf16.mxu0 %v3421
    %3485 = vmatpush1.bf16.msra.mxu0 %v3420
    %3486 = vmatprep.subr.bf16.mxu0 %v3423
    %3487 = vmatpush1.bf16.msra.mxu0 %v3422
    %3488 = vmatprep.subr.bf16.mxu0 %v3425
    %3489 = vmatpush1.bf16.msra.mxu0 %v3424
    %3490 = vmatprep.subr.bf16.mxu0 %v3427
    %3491 = vmatpush1.bf16.msra.mxu0 %v3426
    %3492 = vmatprep.subr.bf16.mxu0 %v3429
    %3493 = vmatpush1.bf16.msra.mxu0 %v3428
    %3494 = vmatprep.mubr.bf16.mxu0 %v3253
    %3495 = vmatmul.mubr.bf16.gmra.mrb[0].mxu0 %v3252
    %v3496 = vpop.f32.mrb[0].mxu0
    %v3497 = vadd.f32 %v3295, %v3496
    %v3498 = vpop.f32.mrb[0].mxu0
    %v3499 = vadd.f32 %v3299, %v3498
    %v3500 = vpop.f32.mrb[0].mxu0
    %v3501 = vadd.f32 %v3295, %v3500
    %v3502 = vpop.f32.mrb[0].mxu0
    %v3503 = vadd.f32 %v3299, %v3502
    %3504 = vmatprep.mubr.bf16.mxu0 %v3255
    %3505 = vmatmul.mubr.bf16.gmra.mrb[0].mxu0 %v3254
    %v3506 = vpop.f32.mrb[0].mxu0
    %v3507 = vadd.f32 %v3295, %v3506
    %v3508 = vpop.f32.mrb[0].mxu0
    %v3509 = vadd.f32 %v3299, %v3508
    %v3510 = vpop.f32.mrb[0].mxu0
    %v3511 = vadd.f32 %v3295, %v3510
    %v3512 = vpop.f32.mrb[0].mxu0
    %v3513 = vadd.f32 %v3299, %v3512
    %3514 = vdwg.mxu0
    %v3515 = vmax.f32 %v3497, 0.0
    %v3516 = vmax.f32 %v3499, 0.0
    %v3517 = vmax.f32 %v3501, 0.0
    %v3518 = vmax.f32 %v3503, 0.0
    %v3519 = vmax.f32 %v3507, 0.0
    %v3520 = vmax.f32 %v3509, 0.0
    %v3521 = vmax.f32 %v3511, 0.0
    %v3522 = vmax.f32 %v3513, 0.0
    %v3523 = vadd.f32 %v3515, %v1036
    %v3524 = vadd.f32 %v3516, %v1037
    %v3525 = vadd.f32 %v3517, %v1038
    %v3526 = vadd.f32 %v3518, %v1039
    %v3527 = vadd.f32 %v3519, %v1040
    %v3528 = vadd.f32 %v3520, %v1041
    %v3529 = vadd.f32 %v3521, %v1042
    %v3530 = vadd.f32 %v3522, %v1043
    %v3531 = vpack.c.bf16 %v3525, %v3523
    %v3532 = vpack.c.bf16 %v3526, %v3524
    %v3533 = vpack.c.bf16 %v3529, %v3527
    %v3534 = vpack.c.bf16 %v3530, %v3528
    %s3535 = scalar_lea.vmem [#allocation8], 3072
    %v3536 = vld [vmem:[%s3535] sm:$0xff]
    %v3537 = vld [vmem:[%s3535 + $0x8] sm:$0xff]
    %v3538 = vld [vmem:[%s3535 + $0x10] sm:$0xff]
    %v3539 = vld [vmem:[%s3535 + $0x18] sm:$0xff]
    %v3540 = vld [vmem:[%s3535 + $0x20] sm:$0xff]
    %v3541 = vld [vmem:[%s3535 + $0x28] sm:$0xff]
    %v3542 = vld [vmem:[%s3535 + $0x30] sm:$0xff]
    %v3543 = vld [vmem:[%s3535 + $0x38] sm:$0xff]
    %v3544 = vld [vmem:[%s3535 + $0x40] sm:$0xff]
    %v3545 = vld [vmem:[%s3535 + $0x48] sm:$0xff]
    %v3546 = vld [vmem:[%s3535 + $0x50] sm:$0xff]
    %v3547 = vld [vmem:[%s3535 + $0x58] sm:$0xff]
    %v3548 = vld [vmem:[%s3535 + $0x60] sm:$0xff]
    %v3549 = vld [vmem:[%s3535 + $0x68] sm:$0xff]
    %v3550 = vld [vmem:[%s3535 + $0x70] sm:$0xff]
    %v3551 = vld [vmem:[%s3535 + $0x78] sm:$0xff]
    %v3552 = vld [vmem:[%s3535 + $0x80] sm:$0xff]
    %v3553 = vld [vmem:[%s3535 + $0x88] sm:$0xff]
    %v3554 = vld [vmem:[%s3535 + $0x90] sm:$0xff]
    %v3555 = vld [vmem:[%s3535 + $0x98] sm:$0xff]
    %v3556 = vld [vmem:[%s3535 + $0xa0] sm:$0xff]
    %v3557 = vld [vmem:[%s3535 + $0xa8] sm:$0xff]
    %v3558 = vld [vmem:[%s3535 + $0xb0] sm:$0xff]
    %v3559 = vld [vmem:[%s3535 + $0xb8] sm:$0xff]
    %v3560 = vld [vmem:[%s3535 + $0xc0] sm:$0xff]
    %v3561 = vld [vmem:[%s3535 + $0xc8] sm:$0xff]
    %v3562 = vld [vmem:[%s3535 + $0xd0] sm:$0xff]
    %v3563 = vld [vmem:[%s3535 + $0xd8] sm:$0xff]
    %v3564 = vld [vmem:[%s3535 + $0xe0] sm:$0xff]
    %v3565 = vld [vmem:[%s3535 + $0xe8] sm:$0xff]
    %v3566 = vld [vmem:[%s3535 + $0xf0] sm:$0xff]
    %v3567 = vld [vmem:[%s3535 + $0xf8] sm:$0xff]
    %s3568 = scalar_lea.vmem [#allocation9], 20
    %v3569 = vld [vmem:[%s3568] ss:$8 sm:$0x3]
    %v3571 = vlaneseq
    %v3572 = vshrl.u32 %v3571, 7
    %v3573 = vsub.s32 0, %v3572
    %v3574 = vrot.slane %v3569, %v3573
    %v3575 = vlaneseq
    %v3576 = vshrl.u32 %v3575, 7
    %v3577 = vsub.s32 1, %v3576
    %v3578 = vrot.slane %v3569, %v3577
    %v3613 = vunpack.c.l.b16 %v3536
    %v3614 = vunpack.c.h.b16 %v3536
    %v3615 = vunpack.c.l.b16 %v3537
    %v3616 = vunpack.c.h.b16 %v3537
    %v3617 = vunpack.c.l.b16 %v3538
    %v3618 = vunpack.c.h.b16 %v3538
    %v3619 = vunpack.c.l.b16 %v3539
    %v3620 = vunpack.c.h.b16 %v3539
    %v3621 = vunpack.c.l.b16 %v3540
    %v3622 = vunpack.c.h.b16 %v3540
    %v3623 = vunpack.c.l.b16 %v3541
    %v3624 = vunpack.c.h.b16 %v3541
    %v3625 = vunpack.c.l.b16 %v3542
    %v3626 = vunpack.c.h.b16 %v3542
    %v3627 = vunpack.c.l.b16 %v3543
    %v3628 = vunpack.c.h.b16 %v3543
    %v3629 = vunpack.c.l.b16 %v3544
    %v3630 = vunpack.c.h.b16 %v3544
    %v3631 = vunpack.c.l.b16 %v3545
    %v3632 = vunpack.c.h.b16 %v3545
    %v3633 = vunpack.c.l.b16 %v3546
    %v3634 = vunpack.c.h.b16 %v3546
    %v3635 = vunpack.c.l.b16 %v3547
    %v3636 = vunpack.c.h.b16 %v3547
    %v3637 = vunpack.c.l.b16 %v3548
    %v3638 = vunpack.c.h.b16 %v3548
    %v3639 = vunpack.c.l.b16 %v3549
    %v3640 = vunpack.c.h.b16 %v3549
    %v3641 = vunpack.c.l.b16 %v3550
    %v3642 = vunpack.c.h.b16 %v3550
    %v3643 = vunpack.c.l.b16 %v3551
    %v3644 = vunpack.c.h.b16 %v3551
    %v3645 = vunpack.c.l.b16 %v3552
    %v3646 = vunpack.c.h.b16 %v3552
    %v3647 = vunpack.c.l.b16 %v3553
    %v3648 = vunpack.c.h.b16 %v3553
    %v3649 = vunpack.c.l.b16 %v3554
    %v3650 = vunpack.c.h.b16 %v3554
    %v3651 = vunpack.c.l.b16 %v3555
    %v3652 = vunpack.c.h.b16 %v3555
    %v3653 = vunpack.c.l.b16 %v3556
    %v3654 = vunpack.c.h.b16 %v3556
    %v3655 = vunpack.c.l.b16 %v3557
    %v3656 = vunpack.c.h.b16 %v3557
    %v3657 = vunpack.c.l.b16 %v3558
    %v3658 = vunpack.c.h.b16 %v3558
    %v3659 = vunpack.c.l.b16 %v3559
    %v3660 = vunpack.c.h.b16 %v3559
    %v3661 = vunpack.c.l.b16 %v3560
    %v3662 = vunpack.c.h.b16 %v3560
    %v3663 = vunpack.c.l.b16 %v3561
    %v3664 = vunpack.c.h.b16 %v3561
    %v3665 = vunpack.c.l.b16 %v3562
    %v3666 = vunpack.c.h.b16 %v3562
    %v3667 = vunpack.c.l.b16 %v3563
    %v3668 = vunpack.c.h.b16 %v3563
    %v3669 = vunpack.c.l.b16 %v3564
    %v3670 = vunpack.c.h.b16 %v3564
    %v3671 = vunpack.c.l.b16 %v3565
    %v3672 = vunpack.c.h.b16 %v3565
    %v3673 = vunpack.c.l.b16 %v3566
    %v3674 = vunpack.c.h.b16 %v3566
    %v3675 = vunpack.c.l.b16 %v3567
    %v3676 = vunpack.c.h.b16 %v3567
    %v3677 = vpack.c.b16 %v3615, %v3613
    %v3678 = vpack.c.b16 %v3616, %v3614
    %v3679 = vpack.c.b16 %v3619, %v3617
    %v3680 = vpack.c.b16 %v3620, %v3618
    %v3681 = vpack.c.b16 %v3623, %v3621
    %v3682 = vpack.c.b16 %v3624, %v3622
    %v3683 = vpack.c.b16 %v3627, %v3625
    %v3684 = vpack.c.b16 %v3628, %v3626
    %v3685 = vpack.c.b16 %v3631, %v3629
    %v3686 = vpack.c.b16 %v3632, %v3630
    %v3687 = vpack.c.b16 %v3635, %v3633
    %v3688 = vpack.c.b16 %v3636, %v3634
    %v3689 = vpack.c.b16 %v3639, %v3637
    %v3690 = vpack.c.b16 %v3640, %v3638
    %v3691 = vpack.c.b16 %v3643, %v3641
    %v3692 = vpack.c.b16 %v3644, %v3642
    %v3693 = vpack.c.b16 %v3647, %v3645
    %v3694 = vpack.c.b16 %v3648, %v3646
    %v3695 = vpack.c.b16 %v3651, %v3649
    %v3696 = vpack.c.b16 %v3652, %v3650
    %v3697 = vpack.c.b16 %v3655, %v3653
    %v3698 = vpack.c.b16 %v3656, %v3654
    %v3699 = vpack.c.b16 %v3659, %v3657
    %v3700 = vpack.c.b16 %v3660, %v3658
    %v3701 = vpack.c.b16 %v3663, %v3661
    %v3702 = vpack.c.b16 %v3664, %v3662
    %v3703 = vpack.c.b16 %v3667, %v3665
    %v3704 = vpack.c.b16 %v3668, %v3666
    %v3705 = vpack.c.b16 %v3671, %v3669
    %v3706 = vpack.c.b16 %v3672, %v3670
    %v3707 = vpack.c.b16 %v3675, %v3673
    %v3708 = vpack.c.b16 %v3676, %v3674
    %3741 = vmatprep.subr.bf16.mxu0 %v3678
    %3742 = vmatpush1.bf16.msra.mxu0 %v3677
    %3743 = vmatprep.subr.bf16.mxu0 %v3680
    %3744 = vmatpush1.bf16.msra.mxu0 %v3679
    %3745 = vmatprep.subr.bf16.mxu0 %v3682
    %3746 = vmatpush1.bf16.msra.mxu0 %v3681
    %3747 = vmatprep.subr.bf16.mxu0 %v3684
    %3748 = vmatpush1.bf16.msra.mxu0 %v3683
    %3749 = vmatprep.subr.bf16.mxu0 %v3686
    %3750 = vmatpush1.bf16.msra.mxu0 %v3685
    %3751 = vmatprep.subr.bf16.mxu0 %v3688
    %3752 = vmatpush1.bf16.msra.mxu0 %v3687
    %3753 = vmatprep.subr.bf16.mxu0 %v3690
    %3754 = vmatpush1.bf16.msra.mxu0 %v3689
    %3755 = vmatprep.subr.bf16.mxu0 %v3692
    %3756 = vmatpush1.bf16.msra.mxu0 %v3691
    %3757 = vmatprep.subr.bf16.mxu0 %v3694
    %3758 = vmatpush1.bf16.msra.mxu0 %v3693
    %3759 = vmatprep.subr.bf16.mxu0 %v3696
    %3760 = vmatpush1.bf16.msra.mxu0 %v3695
    %3761 = vmatprep.subr.bf16.mxu0 %v3698
    %3762 = vmatpush1.bf16.msra.mxu0 %v3697
    %3763 = vmatprep.subr.bf16.mxu0 %v3700
    %3764 = vmatpush1.bf16.msra.mxu0 %v3699
    %3765 = vmatprep.subr.bf16.mxu0 %v3702
    %3766 = vmatpush1.bf16.msra.mxu0 %v3701
    %3767 = vmatprep.subr.bf16.mxu0 %v3704
    %3768 = vmatpush1.bf16.msra.mxu0 %v3703
    %3769 = vmatprep.subr.bf16.mxu0 %v3706
    %3770 = vmatpush1.bf16.msra.mxu0 %v3705
    %3771 = vmatprep.subr.bf16.mxu0 %v3708
    %3772 = vmatpush1.bf16.msra.mxu0 %v3707
    %3773 = vmatprep.mubr.bf16.mxu0 %v3532
    %3774 = vmatmul.mubr.bf16.gmra.mrb[0].mxu0 %v3531
    %v3775 = vpop.f32.mrb[0].mxu0
    %v3776 = vadd.f32 %v3574, %v3775
    %v3777 = vpop.f32.mrb[0].mxu0
    %v3778 = vadd.f32 %v3578, %v3777
    %v3779 = vpop.f32.mrb[0].mxu0
    %v3780 = vadd.f32 %v3574, %v3779
    %v3781 = vpop.f32.mrb[0].mxu0
    %v3782 = vadd.f32 %v3578, %v3781
    %3783 = vmatprep.mubr.bf16.mxu0 %v3534
    %3784 = vmatmul.mubr.bf16.gmra.mrb[0].mxu0 %v3533
    %v3785 = vpop.f32.mrb[0].mxu0
    %v3786 = vadd.f32 %v3574, %v3785
    %v3787 = vpop.f32.mrb[0].mxu0
    %v3788 = vadd.f32 %v3578, %v3787
    %v3789 = vpop.f32.mrb[0].mxu0
    %v3790 = vadd.f32 %v3574, %v3789
    %v3791 = vpop.f32.mrb[0].mxu0
    %v3792 = vadd.f32 %v3578, %v3791
    %3793 = vdwg.mxu0
    %v3794 = vmax.f32 %v3776, 0.0
    %v3795 = vmax.f32 %v3778, 0.0
    %v3796 = vmax.f32 %v3780, 0.0
    %v3797 = vmax.f32 %v3782, 0.0
    %v3798 = vmax.f32 %v3786, 0.0
    %v3799 = vmax.f32 %v3788, 0.0
    %v3800 = vmax.f32 %v3790, 0.0
    %v3801 = vmax.f32 %v3792, 0.0
    %v3802 = vpack.c.bf16 %v3796, %v3794
    %v3803 = vpack.c.bf16 %v3797, %v3795
    %v3804 = vpack.c.bf16 %v3800, %v3798
    %v3805 = vpack.c.bf16 %v3801, %v3799
    %v3806 = vld [vmem:[#allocation11] sm:$0xf]
    %v3807 = vld [vmem:[#allocation11 + $0x4] sm:$0xf]
    %v3808 = vld [vmem:[#allocation11 + $0x8] sm:$0xf]
    %v3809 = vld [vmem:[#allocation11 + $0xc] sm:$0xf]
    %v3810 = vld [vmem:[#allocation11 + $0x10] sm:$0xf]
    %v3811 = vld [vmem:[#allocation11 + $0x14] sm:$0xf]
    %v3812 = vld [vmem:[#allocation11 + $0x18] sm:$0xf]
    %v3813 = vld [vmem:[#allocation11 + $0x1c] sm:$0xf]
    %v3814 = vld [vmem:[#allocation11 + $0x20] sm:$0xf]
    %v3815 = vld [vmem:[#allocation11 + $0x24] sm:$0xf]
    %v3816 = vld [vmem:[#allocation11 + $0x28] sm:$0xf]
    %v3817 = vld [vmem:[#allocation11 + $0x2c] sm:$0xf]
    %v3818 = vld [vmem:[#allocation11 + $0x30] sm:$0xf]
    %v3819 = vld [vmem:[#allocation11 + $0x34] sm:$0xf]
    %v3820 = vld [vmem:[#allocation11 + $0x38] sm:$0xf]
    %v3821 = vld [vmem:[#allocation11 + $0x3c] sm:$0xf]
    %v3822 = vld [vmem:[#allocation11 + $0x40] sm:$0xf]
    %v3823 = vld [vmem:[#allocation11 + $0x44] sm:$0xf]
    %v3824 = vld [vmem:[#allocation11 + $0x48] sm:$0xf]
    %v3825 = vld [vmem:[#allocation11 + $0x4c] sm:$0xf]
    %v3826 = vld [vmem:[#allocation11 + $0x50] sm:$0xf]
    %v3827 = vld [vmem:[#allocation11 + $0x54] sm:$0xf]
    %v3828 = vld [vmem:[#allocation11 + $0x58] sm:$0xf]
    %v3829 = vld [vmem:[#allocation11 + $0x5c] sm:$0xf]
    %v3830 = vld [vmem:[#allocation11 + $0x60] sm:$0xf]
    %v3831 = vld [vmem:[#allocation11 + $0x64] sm:$0xf]
    %v3832 = vld [vmem:[#allocation11 + $0x68] sm:$0xf]
    %v3833 = vld [vmem:[#allocation11 + $0x6c] sm:$0xf]
    %v3834 = vld [vmem:[#allocation11 + $0x70] sm:$0xf]
    %v3835 = vld [vmem:[#allocation11 + $0x74] sm:$0xf]
    %v3836 = vld [vmem:[#allocation11 + $0x78] sm:$0xf]
    %v3837 = vld [vmem:[#allocation11 + $0x7c] sm:$0xf]
    %v3838 = vld [vmem:[#allocation12] sm:$0x1]
    %v3840 = vlaneseq
    %v3841 = vshrl.u32 %v3840, 7
    %v3842 = vsub.s32 0, %v3841
    %v3843 = vrot.slane %v3838, %v3842
    %v3877 = vunpack.c.l.b16 %v3806
    %v3878 = vunpack.c.l.b16 %v3807
    %v3879 = vunpack.c.l.b16 %v3808
    %v3880 = vunpack.c.l.b16 %v3809
    %v3881 = vunpack.c.l.b16 %v3810
    %v3882 = vunpack.c.l.b16 %v3811
    %v3883 = vunpack.c.l.b16 %v3812
    %v3884 = vunpack.c.l.b16 %v3813
    %v3885 = vunpack.c.l.b16 %v3814
    %v3886 = vunpack.c.l.b16 %v3815
    %v3887 = vunpack.c.l.b16 %v3816
    %v3888 = vunpack.c.l.b16 %v3817
    %v3889 = vunpack.c.l.b16 %v3818
    %v3890 = vunpack.c.l.b16 %v3819
    %v3891 = vunpack.c.l.b16 %v3820
    %v3892 = vunpack.c.l.b16 %v3821
    %v3893 = vunpack.c.l.b16 %v3822
    %v3894 = vunpack.c.l.b16 %v3823
    %v3895 = vunpack.c.l.b16 %v3824
    %v3896 = vunpack.c.l.b16 %v3825
    %v3897 = vunpack.c.l.b16 %v3826
    %v3898 = vunpack.c.l.b16 %v3827
    %v3899 = vunpack.c.l.b16 %v3828
    %v3900 = vunpack.c.l.b16 %v3829
    %v3901 = vunpack.c.l.b16 %v3830
    %v3902 = vunpack.c.l.b16 %v3831
    %v3903 = vunpack.c.l.b16 %v3832
    %v3904 = vunpack.c.l.b16 %v3833
    %v3905 = vunpack.c.l.b16 %v3834
    %v3906 = vunpack.c.l.b16 %v3835
    %v3907 = vunpack.c.l.b16 %v3836
    %v3908 = vunpack.c.l.b16 %v3837
    %v3909 = vpack.c.b16 %v3878, %v3877
    %v3910 = vpack.c.b16 %v3880, %v3879
    %v3911 = vpack.c.b16 %v3882, %v3881
    %v3912 = vpack.c.b16 %v3884, %v3883
    %v3913 = vpack.c.b16 %v3886, %v3885
    %v3914 = vpack.c.b16 %v3888, %v3887
    %v3915 = vpack.c.b16 %v3890, %v3889
    %v3916 = vpack.c.b16 %v3892, %v3891
    %v3917 = vpack.c.b16 %v3894, %v3893
    %v3918 = vpack.c.b16 %v3896, %v3895
    %v3919 = vpack.c.b16 %v3898, %v3897
    %v3920 = vpack.c.b16 %v3900, %v3899
    %v3921 = vpack.c.b16 %v3902, %v3901
    %v3922 = vpack.c.b16 %v3904, %v3903
    %v3923 = vpack.c.b16 %v3906, %v3905
    %v3924 = vpack.c.b16 %v3908, %v3907
    %3941 = vmatprep.subr.bf16.mxu0 0
    %3942 = vmatpush1.bf16.msra.mxu0 %v3909
    %3943 = vmatprep.subr.bf16.mxu0 0
    %3944 = vmatpush1.bf16.msra.mxu0 %v3910
    %3945 = vmatprep.subr.bf16.mxu0 0
    %3946 = vmatpush1.bf16.msra.mxu0 %v3911
    %3947 = vmatprep.subr.bf16.mxu0 0
    %3948 = vmatpush1.bf16.msra.mxu0 %v3912
    %3949 = vmatprep.subr.bf16.mxu0 0
    %3950 = vmatpush1.bf16.msra.mxu0 %v3913
    %3951 = vmatprep.subr.bf16.mxu0 0
    %3952 = vmatpush1.bf16.msra.mxu0 %v3914
    %3953 = vmatprep.subr.bf16.mxu0 0
    %3954 = vmatpush1.bf16.msra.mxu0 %v3915
    %3955 = vmatprep.subr.bf16.mxu0 0
    %3956 = vmatpush1.bf16.msra.mxu0 %v3916
    %3957 = vmatprep.subr.bf16.mxu0 0
    %3958 = vmatpush1.bf16.msra.mxu0 %v3917
    %3959 = vmatprep.subr.bf16.mxu0 0
    %3960 = vmatpush1.bf16.msra.mxu0 %v3918
    %3961 = vmatprep.subr.bf16.mxu0 0
    %3962 = vmatpush1.bf16.msra.mxu0 %v3919
    %3963 = vmatprep.subr.bf16.mxu0 0
    %3964 = vmatpush1.bf16.msra.mxu0 %v3920
    %3965 = vmatprep.subr.bf16.mxu0 0
    %3966 = vmatpush1.bf16.msra.mxu0 %v3921
    %3967 = vmatprep.subr.bf16.mxu0 0
    %3968 = vmatpush1.bf16.msra.mxu0 %v3922
    %3969 = vmatprep.subr.bf16.mxu0 0
    %3970 = vmatpush1.bf16.msra.mxu0 %v3923
    %3971 = vmatprep.subr.bf16.mxu0 0
    %3972 = vmatpush1.bf16.msra.mxu0 %v3924
    %3973 = vmatprep.mubr.bf16.mxu0 %v3803
    %3974 = vmatmul.mubr.bf16.gmra.mrb[0].mxu0 %v3802
    %v3975 = vpop.f32.mrb[0].mxu0
    %v3976 = vadd.f32 %v3843, %v3975
    %v3977 = vpop.f32.mrb[0].mxu0
    %v3978 = vpop.f32.mrb[0].mxu0
    %v3979 = vadd.f32 %v3843, %v3978
    %v3980 = vpop.f32.mrb[0].mxu0
    %3981 = vmatprep.mubr.bf16.mxu0 %v3805
    %3982 = vmatmul.mubr.bf16.gmra.mrb[0].mxu0 %v3804
    %v3983 = vpop.f32.mrb[0].mxu0
    %v3984 = vadd.f32 %v3843, %v3983
    %v3985 = vpop.f32.mrb[0].mxu0
    %v3986 = vpop.f32.mrb[0].mxu0
    %v3987 = vadd.f32 %v3843, %v3986
    %v3988 = vpop.f32.mrb[0].mxu0
    %3989 = vdwg.mxu0
    %v3990 = vxor.u32 %v3976, 2147483648
    %v3991 = vxor.u32 %v3979, 2147483648
    %v3992 = vxor.u32 %v3984, 2147483648
    %v3993 = vxor.u32 %v3987, 2147483648
    %v3994 = vmul.f32 %v3990, 1.442695
    %v3995 = vpow.pop %v3994
    %v3996 = vmul.f32 %v3991, 1.442695
    %v3997 = vpow.pop %v3996
    %v3998 = vmul.f32 %v3992, 1.442695
    %v3999 = vpow.pop %v3998
    %v4000 = vmul.f32 %v3993, 1.442695
    %v4001 = vpow.pop %v4000
    %v4002 = vadd.f32 %v3995, 1.0
    %v4003 = vadd.f32 %v3997, 1.0
    %v4004 = vadd.f32 %v3999, 1.0
    %v4005 = vadd.f32 %v4001, 1.0
    %v4006 = vrcp.pop %v4002
    %v4007 = vmul.f32 1.0, %v4006
    %v4008 = vrcp.pop %v4003
    %v4009 = vmul.f32 1.0, %v4008
    %v4010 = vrcp.pop %v4004
    %v4011 = vmul.f32 1.0, %v4010
    %v4012 = vrcp.pop %v4005
    %v4013 = vmul.f32 1.0, %v4012
    %4014 = vst [vmem:[#allocation14] sm:$0xff] %v4007
    %4015 = vst [vmem:[#allocation14 + $0x8] sm:$0xff] %v4009
    %4016 = vst [vmem:[#allocation14 + $0x10] sm:$0xff] %v4011
    %4017 = vst [vmem:[#allocation14 + $0x18] sm:$0xff] %v4013
    // Predicated region
    $region54: #{tpu_custom_call.1} parent=1 // pred_check
      _
    $region55: #{tpu_custom_call.1} parent=1 // pred_check_branch
      %4019 = sbr.rel (0) target = $region57
    $region56: #{tpu_custom_call.1} parent=1 // pred_region
      %s4021 = ssub.s32 512, 512
      %4022 = vsyncadd [#allocation5], %s4021
      %s4023 = sshll.u32 [#allocation14], 4
      %s4024 = int_to_ptr.vmem [resolvable:$true] %s4023
      %4029 = dma.vmem_to_hbm [thread:$0]  %s4024, 512, %s7, [#allocation5], 128, 128, 8
    $region57: #{tpu_custom_call.1} parent=1 // pred_fallthru
      _
    // Predicated region
    $region58: #{tpu_custom_call.1} parent=1 // pred_check
      _
    $region59: #{tpu_custom_call.1} parent=1 // pred_check_branch
      %4031 = sbr.rel (0) target = $region61
    $region60: #{tpu_custom_call.1} parent=1 // pred_region
      %4032 = dma.done [#allocation5], 512
    $region61: #{tpu_custom_call.1} parent=1 // pred_fallthru
      _
    %4033 = vsyncpa [#allocation4], 1
    %4034 = vsyncpa [#allocation7], 1
    %4035 = vsyncpa [#allocation10], 1
    %4036 = vsyncpa [#allocation13], 1
    %4037 = vsyncpa [#allocation5], 1

</llo_original>
